<compile_context>
chip_gen: v7x
topology: tpu7x:2x2x1
jax: 0.10.0
libtpu: 0.0.40
codegen_flags: <defaults>
</compile_context>

<pallas_src>
import functools

import jax
import jax.numpy as jnp
import numpy as np
from jax.experimental import pallas as pl
from jax.experimental.pallas import tpu as pltpu


def _round_up(a, b):
    return (a + b - 1) // b * b


def _vmem_limit_bytes():
    """Generation-aware scoped-VMEM budget (v5e/v6e: 128 MiB phys, v7x: 64 MiB)."""
    cap = 64 * 1024 * 1024                      # conservative (v7x-sized) fallback
    try:
        info = pltpu.get_tpu_info()
        c = getattr(info, "vmem_capacity_bytes", None)
        if c:
            cap = int(c)
    except Exception:
        pass
    return min(int(cap * 3 // 4), 100 * 1024 * 1024)


# ------------------------------------------------------------------ kernels ----

def fused_forward_kernel(x_ref, adj_ref, pool_ref, wemb_ref, bemb_ref,
                         w1_ref, b1_ref, w23_ref, b23_ref, hout_ref, gout_ref):
    """Whole forward pass with the f32 adjacency resident in VMEM (small/medium graphs)."""
    hp = hout_ref.shape[1]
    n_layers = w1_ref.shape[0]
    adj = adj_ref[...]                                      # (Np, Np) f32, resident
    deg = jnp.sum(adj, axis=1, keepdims=True)               # weighted in-degree (consistent)
    h = jnp.dot(x_ref[...], wemb_ref[...],
                preferred_element_type=jnp.float32) + bemb_ref[...]
    for l in range(n_layers):                               # static unroll (L is small)
        a = jnp.dot(h, w1_ref[l], preferred_element_type=jnp.float32) + b1_ref[l]
        bc = jnp.dot(h, w23_ref[l], preferred_element_type=jnp.float32) + b23_ref[l]
        agg = jnp.dot(adj, a, preferred_element_type=jnp.float32)
        h = jnp.maximum(agg - deg * bc[:, :hp] + bc[:, hp:], 0.0)
    hout_ref[...] = h
    gout_ref[...] = jnp.dot(pool_ref[...], h, preferred_element_type=jnp.float32)


def embed_kernel(x_ref, wemb_ref, bemb_ref, w1_ref, b1_ref, h_ref, a_ref):
    """h0 = x @ Wemb + bemb ;  a0 = h0 @ W1[0] + b1[0] (pre-projection for layer 0)."""
    h = jnp.dot(x_ref[...], wemb_ref[...],
                preferred_element_type=jnp.float32) + bemb_ref[...]
    h_ref[...] = h
    a_ref[...] = jnp.dot(h, w1_ref[...],
                         preferred_element_type=jnp.float32) + b1_ref[...]


def _leconv_body(a_ref, h_ref, adj_ref, w23_ref, b23_ref, acc_ref, deg_ref,
                 hout_ref, anext_ref, w1n_ref, b1n_ref):
    """One LEConv layer + ReLU, streamed over adjacency tiles.

    grid = (row tiles i [parallel], reduction tiles k [arbitrary])
      acc[i] += A[i,k] @ a[k]     deg[i] += row-sum(A[i,k])   (f32 accumulation)
      last k: h' = relu(acc - deg * (h@W2) + h@W3 + b3)       (lin2|lin3 fused)
              a' = h' @ W1_next + b1_next                     (skipped in last layer)
    """
    k = pl.program_id(1)
    nk = pl.num_programs(1)
    tk = adj_ref.shape[1]
    hp = hout_ref.shape[1]

    @pl.when(k == 0)
    def _():
        acc_ref[...] = jnp.zeros_like(acc_ref)
        deg_ref[...] = jnp.zeros_like(deg_ref)

    adj_t = adj_ref[...].astype(jnp.float32)            # bf16 tile -> f32 (tile sized)
    start = pl.multiple_of(k * tk, tk)
    a_k = a_ref[pl.ds(start, tk), :]                    # VMEM-resident `a`, sliced per k
    acc_ref[...] += jnp.dot(adj_t, a_k, preferred_element_type=jnp.float32)
    deg_ref[...] += jnp.sum(adj_t, axis=1, keepdims=True)   # degree from the *quantized* adj

    @pl.when(k == nk - 1)
    def _():
        bc = jnp.dot(h_ref[...], w23_ref[...],
                     preferred_element_type=jnp.float32) + b23_ref[...]
        b = bc[:, :hp]
        c = bc[:, hp:]
        hn = jnp.maximum(acc_ref[...] - deg_ref[...] * b + c, 0.0)
        hout_ref[...] = hn
        if anext_ref is not None:
            anext_ref[...] = (jnp.dot(hn, w1n_ref[...],
                                      preferred_element_type=jnp.float32)
                              + b1n_ref[...])


def leconv_kernel(a_ref, h_ref, adj_ref, w23_ref, b23_ref, w1n_ref, b1n_ref,
                  hout_ref, anext_ref, acc_ref, deg_ref):
    _leconv_body(a_ref, h_ref, adj_ref, w23_ref, b23_ref, acc_ref, deg_ref,
                 hout_ref, anext_ref, w1n_ref, b1n_ref)


def leconv_last_kernel(a_ref, h_ref, adj_ref, w23_ref, b23_ref,
                       hout_ref, acc_ref, deg_ref):
    # last layer: skip the unused next-layer pre-projection matmul + writeback
    _leconv_body(a_ref, h_ref, adj_ref, w23_ref, b23_ref, acc_ref, deg_ref,
                 hout_ref, None, None, None)


def pool_kernel(pool_ref, h_ref, out_ref):
    """graph_x = P @ node_x, accumulated over node tiles into the resident output."""
    @pl.when(pl.program_id(0) == 0)
    def _():
        out_ref[...] = jnp.zeros_like(out_ref)
    out_ref[...] += jnp.dot(pool_ref[...], h_ref[...],
                            preferred_element_type=jnp.float32)


# ------------------------------------------------------------------ wrappers ----

def _choose_tiles(N, vmem_limit, tile_override):
    if tile_override is not None:
        tm, tk = tile_override
        assert tk % tm == 0 or tm % tk == 0
        return tm, tk
    big = vmem_limit >= 80 * 1024 * 1024        # v5e/v6e get bigger adj tiles than v7x
    np0 = _round_up(N, 256)
    if np0 <= 4096:
        # small graphs: single reduction step, but keep >= 2 row tiles (v7x megacore)
        return (128 if np0 <= 256 else 256), np0
    return (512, 1024) if big else (256, 512)


def _run_streamed(xp, adj, pool, wemb, bemb, w1, b1, w23, b23,
                  Np, Fp, Hp, Gp, TM, TK, vmem_limit):
    NR, NK = Np // TM, Np // TK
    L = len(w1)

    def cparams(sem):
        return pltpu.CompilerParams(dimension_semantics=sem,
                                    vmem_limit_bytes=vmem_limit)

    # node embedding + pre-projection of `a` for layer 0
    h, a = pl.pallas_call(
        embed_kernel,
        grid=(NR,),
        in_specs=[pl.BlockSpec((TM, Fp), lambda i: (i, 0)),
                  pl.BlockSpec((Fp, Hp), lambda i: (0, 0)),
                  pl.BlockSpec((1, Hp), lambda i: (0, 0)),
                  pl.BlockSpec((Hp, Hp), lambda i: (0, 0)),
                  pl.BlockSpec((1, Hp), lambda i: (0, 0))],
        out_specs=(pl.BlockSpec((TM, Hp), lambda i: (i, 0)),
                   pl.BlockSpec((TM, Hp), lambda i: (i, 0))),
        out_shape=(jax.ShapeDtypeStruct((Np, Hp), jnp.float32),
                   jax.ShapeDtypeStruct((Np, Hp), jnp.float32)),
        compiler_params=cparams(("parallel",)),
    )(xp, wemb, bemb, w1[0], b1[0])

    base_specs = [
        pl.BlockSpec((Np, Hp), lambda i, k: (0, 0)),        # a (VMEM resident)
        pl.BlockSpec((TM, Hp), lambda i, k: (i, 0)),        # h row tile
        pl.BlockSpec((TM, TK), lambda i, k: (i, k)),        # adj tile (streamed, bf16)
        pl.BlockSpec((Hp, 2 * Hp), lambda i, k: (0, 0)),    # W2|W3 fused
        pl.BlockSpec((1, 2 * Hp), lambda i, k: (0, 0)),     # 0|b3
    ]
    next_specs = [pl.BlockSpec((Hp, Hp), lambda i, k: (0, 0)),
                  pl.BlockSpec((1, Hp), lambda i, k: (0, 0))]
    row_out = pl.BlockSpec((TM, Hp), lambda i, k: (i, 0))
    scratch = [pltpu.VMEM((TM, Hp), jnp.float32),           # aggregation accumulator
               pltpu.VMEM((TM, 1), jnp.float32)]            # in-degree accumulator

    for l in range(L - 1):
        h, a = pl.pallas_call(
            leconv_kernel,
            grid=(NR, NK),
            in_specs=base_specs + next_specs,
            out_specs=(row_out, row_out),
            out_shape=(jax.ShapeDtypeStruct((Np, Hp), jnp.float32),
                       jax.ShapeDtypeStruct((Np, Hp), jnp.float32)),
            scratch_shapes=scratch,
            compiler_params=cparams(("parallel", "arbitrary")),
        )(a, h, adj, w23[l], b23[l], w1[l + 1], b1[l + 1])

    h = pl.pallas_call(
        leconv_last_kernel,
        grid=(NR, NK),
        in_specs=base_specs,
        out_specs=row_out,
        out_shape=jax.ShapeDtypeStruct((Np, Hp), jnp.float32),
        scratch_shapes=scratch,
        compiler_params=cparams(("parallel", "arbitrary")),
    )(a, h, adj, w23[L - 1], b23[L - 1])

    graph = pl.pallas_call(
        pool_kernel,
        grid=(NK,),
        in_specs=[pl.BlockSpec((Gp, TK), lambda k: (0, k)),
                  pl.BlockSpec((TK, Hp), lambda k: (k, 0))],
        out_specs=pl.BlockSpec((Gp, Hp), lambda k: (0, 0)),
        out_shape=jax.ShapeDtypeStruct((Gp, Hp), jnp.float32),
        compiler_params=cparams(("arbitrary",)),
    )(pool, h)
    return h, graph


def spmotif_encoder(x, edge_index, edge_attr, batch, num_graphs, params,
                    *, force_streamed=False, tile_override=None):
    """JAX glue: densify/pad graph structure, then run the Pallas kernels."""
    N, F = x.shape
    H = params["wemb"].shape[1]
    L = params["w1"].shape[0]
    Hp = _round_up(H, 128)
    Fp = _round_up(F, 128)
    Gp = _round_up(num_graphs, 8)
    vmem_limit = _vmem_limit_bytes()

    src, dst = edge_index[0], edge_index[1]
    w = edge_attr.astype(jnp.float32)

    def pad2(m, r, c):
        m = m.astype(jnp.float32)
        return jnp.pad(m, ((0, r - m.shape[0]), (0, c - m.shape[1])))

    wemb = pad2(params["wemb"], Fp, Hp)
    bemb = pad2(params["bemb"], 1, Hp)
    w1 = [pad2(params["w1"][l], Hp, Hp) for l in range(L)]
    b1 = [pad2(params["b1"][l], 1, Hp) for l in range(L)]
    w23 = [jnp.concatenate([pad2(params["w2"][l], Hp, Hp),
                            pad2(params["w3"][l], Hp, Hp)], axis=1) for l in range(L)]
    b23 = [jnp.concatenate([jnp.zeros((1, Hp), jnp.float32),
                            pad2(params["b3"][l], 1, Hp)], axis=1) for l in range(L)]

    counts = jnp.zeros((num_graphs,), jnp.float32).at[batch].add(1.0)
    pool_gn = (jax.nn.one_hot(batch, num_graphs, dtype=jnp.float32).T
               / jnp.maximum(counts, 1.0)[:, None])                  # (G, N) mean pool

    # ---------------- fused path: whole graph resident in VMEM ----------------
    Np_f = _round_up(N, 128)
    fused_bytes = (4 * Np_f * Np_f + 4 * Gp * Np_f + 4 * Np_f * Fp
                   + 6 * 4 * Np_f * Hp + 4 * L * (3 * Hp * Hp + 3 * Hp))
    use_fused = (not force_streamed) and (2 * fused_bytes <= vmem_limit)

    if use_fused:
        Np = Np_f
        adj = jnp.zeros((Np, Np), jnp.float32).at[dst, src].add(w)   # A[i,j]=sum w(j->i)
        pool = jnp.pad(pool_gn, ((0, Gp - num_graphs), (0, Np - N)))
        xp = jnp.pad(x.astype(jnp.float32), ((0, Np - N), (0, Fp - F)))
        w1s, b1s = jnp.stack(w1), jnp.stack(b1)
        w23s, b23s = jnp.stack(w23), jnp.stack(b23)

        def full(shape):
            return pl.BlockSpec(shape, lambda i, _s=shape: tuple(0 for _ in _s))

        h, graph = pl.pallas_call(
            fused_forward_kernel,
            grid=(1,),
            in_specs=[full((Np, Fp)), full((Np, Np)), full((Gp, Np)),
                      full((Fp, Hp)), full((1, Hp)),
                      full((L, Hp, Hp)), full((L, 1, Hp)),
                      full((L, Hp, 2 * Hp)), full((L, 1, 2 * Hp))],
            out_specs=(full((Np, Hp)), full((Gp, Hp))),
            out_shape=(jax.ShapeDtypeStruct((Np, Hp), jnp.float32),
                       jax.ShapeDtypeStruct((Gp, Hp), jnp.float32)),
            compiler_params=pltpu.CompilerParams(
                dimension_semantics=("arbitrary",),
                vmem_limit_bytes=vmem_limit),
        )(xp, adj, pool, wemb, bemb, w1s, b1s, w23s, b23s)
    else:
        TM, TK = _choose_tiles(N, vmem_limit, tile_override)
        Np = _round_up(N, max(TM, TK))
        # adjacency built directly in bf16 (no f32 N^2 materialization); it is the only
        # O(N^2) operand and is streamed tile-by-tile from HBM.
        # TODO(synk): int8/fp8 adj with per-row-tile scales would halve this stream again.
        adj = jnp.zeros((Np, Np), jnp.bfloat16).at[dst, src].add(w.astype(jnp.bfloat16))
        pool = jnp.pad(pool_gn, ((0, Gp - num_graphs), (0, Np - N)))
        xp = jnp.pad(x.astype(jnp.float32), ((0, Np - N), (0, Fp - F)))
        h, graph = _run_streamed(xp, adj, pool, wemb, bemb, w1, b1, w23, b23,
                                 Np, Fp, Hp, Gp, TM, TK, vmem_limit)

    node_x = h[:N, :H]
    graph_x = graph[:num_graphs, :H]
    return graph_x, node_x


# ---------------------------------------------------------------- test glue ----

def init_params(key, x_dim, hidden, n_layers):
    """Deterministic synthetic init; PyTorch Linear(out,in) stored pre-transposed as (in,out)."""
    ks = jax.random.split(key, 8)

    def lin_w(k, fan_in, fan_out, batch_shape=()):
        lim = 1.0 / np.sqrt(fan_in)
        return jax.random.uniform(k, batch_shape + (fan_in, fan_out),
                                  jnp.float32, -lim, lim)

    def lin_b(k, fan_in, fan_out, batch_shape=()):
        lim = 1.0 / np.sqrt(fan_in)
        return jax.random.uniform(k, batch_shape + (1, fan_out),
                                  jnp.float32, -lim, lim)

    return {
        "wemb": lin_w(ks[0], x_dim, hidden),              # (x_dim, H)
        "bemb": lin_b(ks[1], x_dim, hidden),              # (1, H)
        "w1": lin_w(ks[2], hidden, hidden, (n_layers,)),  # (L, H, H)
        "b1": lin_b(ks[3], hidden, hidden, (n_layers,)),  # (L, 1, H)
        "w2": lin_w(ks[4], hidden, hidden, (n_layers,)),  # lin2 has no bias
        "w3": lin_w(ks[5], hidden, hidden, (n_layers,)),
        "b3": lin_b(ks[6], hidden, hidden, (n_layers,)),
    }


def reference_forward(x, edge_index, edge_attr, batch, num_graphs, params):
    """Pure-JAX f32 gather/scatter reference matching the PyTorch semantics."""
    dot = functools.partial(jnp.dot, precision=jax.lax.Precision.HIGHEST)
    src, dst = edge_index[0], edge_index[1]
    w = edge_attr.astype(jnp.float32)
    h = dot(x, params["wemb"]) + params["bemb"]
    n_layers = params["w1"].shape[0]
    for l in range(n_layers):
        a = dot(h, params["w1"][l]) + params["b1"][l]
        b = dot(h, params["w2"][l])
        c = dot(h, params["w3"][l]) + params["b3"][l]
        msg = (a[src] - b[dst]) * w[:, None]
        agg = jnp.zeros_like(h).at[dst].add(msg)
        h = jax.nn.relu(agg + c)
    sums = jnp.zeros((num_graphs, h.shape[1]), jnp.float32).at[batch].add(h)
    counts = jnp.zeros((num_graphs,), jnp.float32).at[batch].add(1.0)
    return sums / counts[:, None], h


if __name__ == "__main__":
    # small, deterministic problem (sized so padding + both kernel paths run)
    N_NODES, X_DIM, HIDDEN, N_LAYERS = 200, 8, 32, 3
    N_EDGES, N_GRAPHS = 800, 8

    key = jax.random.PRNGKey(0)
    k_x, k_src, k_dst, k_w, k_p = jax.random.split(key, 5)

    x = jax.random.normal(k_x, (N_NODES, X_DIM), jnp.float32)
    src = jax.random.randint(k_src, (N_EDGES,), 0, N_NODES)
    dst = jax.random.randint(k_dst, (N_EDGES,), 0, N_NODES)
    edge_index = jnp.stack([src, dst])                       # (2, E)
    edge_attr = jax.random.uniform(k_w, (N_EDGES,), jnp.float32, 0.1, 1.0)
    batch = jnp.repeat(jnp.arange(N_GRAPHS, dtype=jnp.int32),
                       N_NODES // N_GRAPHS)                  # 25 nodes / graph

    params = init_params(k_p, X_DIM, HIDDEN, N_LAYERS)
    graph_ref, node_ref = reference_forward(x, edge_index, edge_attr, batch,
                                            N_GRAPHS, params)

    # default path: fully fused (f32 adjacency resident in VMEM) -> near-exact
    graph_x, node_x = spmotif_encoder(x, edge_index, edge_attr, batch,
                                      N_GRAPHS, params)
    graph_x = jax.block_until_ready(graph_x)
    node_x = jax.block_until_ready(node_x)
    np.testing.assert_allclose(np.asarray(node_x), np.asarray(node_ref),
                               rtol=2e-2, atol=2e-2)
    np.testing.assert_allclose(np.asarray(graph_x), np.asarray(graph_ref),
                               rtol=2e-2, atol=2e-2)

    # streamed (large-graph) path: bf16 adjacency tiles, multi-step reduction axis
    graph_s, node_s = spmotif_encoder(x, edge_index, edge_attr, batch,
                                      N_GRAPHS, params,
                                      force_streamed=True, tile_override=(128, 128))
    graph_s = jax.block_until_ready(graph_s)
    node_s = jax.block_until_ready(node_s)
    np.testing.assert_allclose(np.asarray(node_s), np.asarray(node_ref),
                               rtol=5e-2, atol=5e-2)
    np.testing.assert_allclose(np.asarray(graph_s), np.asarray(graph_ref),
                               rtol=5e-2, atol=5e-2)

    assert graph_x.shape == (N_GRAPHS, HIDDEN)
    assert node_x.shape == (N_NODES, HIDDEN)
    print("KERNEL_OK")
</pallas_src>

<mosaic_0001>
module attributes {stable_mosaic.version = 11 : i64} {
  func.func @fused_forward_kernel(%arg0: i32, %arg1: memref<256x128xf32, #tpu.memory_space<vmem>>, %arg2: memref<256x256xf32, #tpu.memory_space<vmem>>, %arg3: memref<8x256xf32, #tpu.memory_space<vmem>>, %arg4: memref<128x128xf32, #tpu.memory_space<vmem>>, %arg5: memref<1x128xf32, #tpu.memory_space<vmem>>, %arg6: memref<3x128x128xf32, #tpu.memory_space<vmem>>, %arg7: memref<3x1x128xf32, #tpu.memory_space<vmem>>, %arg8: memref<3x128x256xf32, #tpu.memory_space<vmem>>, %arg9: memref<3x1x256xf32, #tpu.memory_space<vmem>>, %arg10: memref<256x128xf32, #tpu.memory_space<vmem>>, %arg11: memref<8x128xf32, #tpu.memory_space<vmem>>) attributes {dimension_semantics = [#tpu.dimension_semantics<arbitrary>], iteration_bounds = array<i64: 1>, scalar_prefetch = 0 : i64, scratch_operands = 0 : i64, tpu.core_type = #tpu.core_type<tc>, window_params = [{pipeline_mode = #tpu.pipeline_mode<synchronous>, transform_indices = @transform_0, window_bounds = array<i64: 256, 128>}, {pipeline_mode = #tpu.pipeline_mode<synchronous>, transform_indices = @transform_1, window_bounds = array<i64: 256, 256>}, {pipeline_mode = #tpu.pipeline_mode<synchronous>, transform_indices = @transform_2, window_bounds = array<i64: 8, 256>}, {pipeline_mode = #tpu.pipeline_mode<synchronous>, transform_indices = @transform_3, window_bounds = array<i64: 128, 128>}, {pipeline_mode = #tpu.pipeline_mode<synchronous>, transform_indices = @transform_4, window_bounds = array<i64: 1, 128>}, {pipeline_mode = #tpu.pipeline_mode<synchronous>, transform_indices = @transform_5, window_bounds = array<i64: 3, 128, 128>}, {pipeline_mode = #tpu.pipeline_mode<synchronous>, transform_indices = @transform_6, window_bounds = array<i64: 3, 1, 128>}, {pipeline_mode = #tpu.pipeline_mode<synchronous>, transform_indices = @transform_7, window_bounds = array<i64: 3, 128, 256>}, {pipeline_mode = #tpu.pipeline_mode<synchronous>, transform_indices = @transform_8, window_bounds = array<i64: 3, 1, 256>}, {pipeline_mode = #tpu.pipeline_mode<synchronous>, transform_indices = @transform_9, window_bounds = array<i64: 256, 128>}, {pipeline_mode = #tpu.pipeline_mode<synchronous>, transform_indices = @transform_10, window_bounds = array<i64: 8, 128>}]} {
    %c0 = arith.constant 0 : index
    %c0_0 = arith.constant 0 : index
    %0 = vector.load %arg2[%c0, %c0_0] : memref<256x256xf32, #tpu.memory_space<vmem>>, vector<256x256xf32>
    %cst = arith.constant dense<0.000000e+00> : vector<256xf32>
    %1 = vector.multi_reduction <add>, %0, %cst [1] : vector<256x256xf32> to vector<256xf32>
    %2 = vector.shape_cast %1 : vector<256xf32> to vector<256x1xf32>
    %c0_1 = arith.constant 0 : index
    %c0_2 = arith.constant 0 : index
    %3 = vector.load %arg1[%c0_1, %c0_2] : memref<256x128xf32, #tpu.memory_space<vmem>>, vector<256x128xf32>
    %c0_3 = arith.constant 0 : index
    %c0_4 = arith.constant 0 : index
    %4 = vector.load %arg4[%c0_3, %c0_4] : memref<128x128xf32, #tpu.memory_space<vmem>>, vector<128x128xf32>
    %cst_5 = arith.constant dense<0.000000e+00> : vector<256x128xf32>
    %5 = tpu.matmul %3, %4, %cst_5 {dimension_numbers = #tpu.dot_dimension_numbers<[1], [0], [0], [1], [0, 0, 1, 1], [], []>} : vector<256x128xf32>, vector<128x128xf32>, vector<256x128xf32> -> vector<256x128xf32>
    %c0_6 = arith.constant 0 : index
    %c0_7 = arith.constant 0 : index
    %6 = vector.load %arg5[%c0_6, %c0_7] : memref<1x128xf32, #tpu.memory_space<vmem>>, vector<1x128xf32>
    %7 = vector.broadcast %6 : vector<1x128xf32> to vector<256x128xf32>
    %8 = arith.addf %5, %7 : vector<256x128xf32>
    %c0_8 = arith.constant 0 : index
    %c0_9 = arith.constant 0 : index
    %c0_10 = arith.constant 0 : index
    %9 = vector.load %arg6[%c0_8, %c0_9, %c0_10] : memref<3x128x128xf32, #tpu.memory_space<vmem>>, vector<1x128x128xf32>
    %10 = vector.shape_cast %9 : vector<1x128x128xf32> to vector<128x128xf32>
    %cst_11 = arith.constant dense<0.000000e+00> : vector<256x128xf32>
    %11 = tpu.matmul %8, %10, %cst_11 {dimension_numbers = #tpu.dot_dimension_numbers<[1], [0], [0], [1], [0, 0, 1, 1], [], []>} : vector<256x128xf32>, vector<128x128xf32>, vector<256x128xf32> -> vector<256x128xf32>
    %c0_12 = arith.constant 0 : index
    %c0_13 = arith.constant 0 : index
    %c0_14 = arith.constant 0 : index
    %12 = vector.load %arg7[%c0_12, %c0_13, %c0_14] : memref<3x1x128xf32, #tpu.memory_space<vmem>>, vector<1x1x128xf32>
    %13 = vector.shape_cast %12 : vector<1x1x128xf32> to vector<1x128xf32>
    %14 = vector.broadcast %13 : vector<1x128xf32> to vector<256x128xf32>
    %15 = arith.addf %11, %14 : vector<256x128xf32>
    %c0_15 = arith.constant 0 : index
    %c0_16 = arith.constant 0 : index
    %c0_17 = arith.constant 0 : index
    %16 = vector.load %arg8[%c0_15, %c0_16, %c0_17] : memref<3x128x256xf32, #tpu.memory_space<vmem>>, vector<1x128x256xf32>
    %17 = vector.shape_cast %16 : vector<1x128x256xf32> to vector<128x256xf32>
    %cst_18 = arith.constant dense<0.000000e+00> : vector<256x256xf32>
    %18 = tpu.matmul %8, %17, %cst_18 {dimension_numbers = #tpu.dot_dimension_numbers<[1], [0], [0], [1], [0, 0, 1, 1], [], []>} : vector<256x128xf32>, vector<128x256xf32>, vector<256x256xf32> -> vector<256x256xf32>
    %c0_19 = arith.constant 0 : index
    %c0_20 = arith.constant 0 : index
    %c0_21 = arith.constant 0 : index
    %19 = vector.load %arg9[%c0_19, %c0_20, %c0_21] : memref<3x1x256xf32, #tpu.memory_space<vmem>>, vector<1x1x256xf32>
    %20 = vector.shape_cast %19 : vector<1x1x256xf32> to vector<1x256xf32>
    %21 = vector.broadcast %20 : vector<1x256xf32> to vector<256x256xf32>
    %22 = arith.addf %18, %21 : vector<256x256xf32>
    %cst_22 = arith.constant dense<0.000000e+00> : vector<256x128xf32>
    %23 = tpu.matmul %0, %15, %cst_22 {dimension_numbers = #tpu.dot_dimension_numbers<[1], [0], [0], [1], [0, 0, 1, 1], [], []>} : vector<256x256xf32>, vector<256x128xf32>, vector<256x128xf32> -> vector<256x128xf32>
    %24 = vector.extract_strided_slice %22 {offsets = [0, 0], sizes = [256, 128], strides = [1, 1]} : vector<256x256xf32> to vector<256x128xf32>
    %25 = vector.broadcast %2 : vector<256x1xf32> to vector<256x128xf32>
    %26 = arith.mulf %25, %24 : vector<256x128xf32>
    %27 = arith.subf %23, %26 : vector<256x128xf32>
    %28 = vector.extract_strided_slice %22 {offsets = [0, 128], sizes = [256, 128], strides = [1, 1]} : vector<256x256xf32> to vector<256x128xf32>
    %29 = arith.addf %27, %28 : vector<256x128xf32>
    %cst_23 = arith.constant 0.000000e+00 : f32
    %30 = vector.broadcast %cst_23 : f32 to vector<256x128xf32>
    %31 = arith.maximumf %29, %30 : vector<256x128xf32>
    %c1 = arith.constant 1 : index
    %c0_24 = arith.constant 0 : index
    %c0_25 = arith.constant 0 : index
    %32 = vector.load %arg6[%c1, %c0_24, %c0_25] : memref<3x128x128xf32, #tpu.memory_space<vmem>>, vector<1x128x128xf32>
    %33 = vector.shape_cast %32 : vector<1x128x128xf32> to vector<128x128xf32>
    %cst_26 = arith.constant dense<0.000000e+00> : vector<256x128xf32>
    %34 = tpu.matmul %31, %33, %cst_26 {dimension_numbers = #tpu.dot_dimension_numbers<[1], [0], [0], [1], [0, 0, 1, 1], [], []>} : vector<256x128xf32>, vector<128x128xf32>, vector<256x128xf32> -> vector<256x128xf32>
    %c1_27 = arith.constant 1 : index
    %c0_28 = arith.constant 0 : index
    %c0_29 = arith.constant 0 : index
    %35 = vector.load %arg7[%c1_27, %c0_28, %c0_29] : memref<3x1x128xf32, #tpu.memory_space<vmem>>, vector<1x1x128xf32>
    %36 = vector.shape_cast %35 : vector<1x1x128xf32> to vector<1x128xf32>
    %37 = vector.broadcast %36 : vector<1x128xf32> to vector<256x128xf32>
    %38 = arith.addf %34, %37 : vector<256x128xf32>
    %c1_30 = arith.constant 1 : index
    %c0_31 = arith.constant 0 : index
    %c0_32 = arith.constant 0 : index
    %39 = vector.load %arg8[%c1_30, %c0_31, %c0_32] : memref<3x128x256xf32, #tpu.memory_space<vmem>>, vector<1x128x256xf32>
    %40 = vector.shape_cast %39 : vector<1x128x256xf32> to vector<128x256xf32>
    %cst_33 = arith.constant dense<0.000000e+00> : vector<256x256xf32>
    %41 = tpu.matmul %31, %40, %cst_33 {dimension_numbers = #tpu.dot_dimension_numbers<[1], [0], [0], [1], [0, 0, 1, 1], [], []>} : vector<256x128xf32>, vector<128x256xf32>, vector<256x256xf32> -> vector<256x256xf32>
    %c1_34 = arith.constant 1 : index
    %c0_35 = arith.constant 0 : index
    %c0_36 = arith.constant 0 : index
    %42 = vector.load %arg9[%c1_34, %c0_35, %c0_36] : memref<3x1x256xf32, #tpu.memory_space<vmem>>, vector<1x1x256xf32>
    %43 = vector.shape_cast %42 : vector<1x1x256xf32> to vector<1x256xf32>
    %44 = vector.broadcast %43 : vector<1x256xf32> to vector<256x256xf32>
    %45 = arith.addf %41, %44 : vector<256x256xf32>
    %cst_37 = arith.constant dense<0.000000e+00> : vector<256x128xf32>
    %46 = tpu.matmul %0, %38, %cst_37 {dimension_numbers = #tpu.dot_dimension_numbers<[1], [0], [0], [1], [0, 0, 1, 1], [], []>} : vector<256x256xf32>, vector<256x128xf32>, vector<256x128xf32> -> vector<256x128xf32>
    %47 = vector.extract_strided_slice %45 {offsets = [0, 0], sizes = [256, 128], strides = [1, 1]} : vector<256x256xf32> to vector<256x128xf32>
    %48 = vector.broadcast %2 : vector<256x1xf32> to vector<256x128xf32>
    %49 = arith.mulf %48, %47 : vector<256x128xf32>
    %50 = arith.subf %46, %49 : vector<256x128xf32>
    %51 = vector.extract_strided_slice %45 {offsets = [0, 128], sizes = [256, 128], strides = [1, 1]} : vector<256x256xf32> to vector<256x128xf32>
    %52 = arith.addf %50, %51 : vector<256x128xf32>
    %cst_38 = arith.constant 0.000000e+00 : f32
    %53 = vector.broadcast %cst_38 : f32 to vector<256x128xf32>
    %54 = arith.maximumf %52, %53 : vector<256x128xf32>
    %c2 = arith.constant 2 : index
    %c0_39 = arith.constant 0 : index
    %c0_40 = arith.constant 0 : index
    %55 = vector.load %arg6[%c2, %c0_39, %c0_40] : memref<3x128x128xf32, #tpu.memory_space<vmem>>, vector<1x128x128xf32>
    %56 = vector.shape_cast %55 : vector<1x128x128xf32> to vector<128x128xf32>
    %cst_41 = arith.constant dense<0.000000e+00> : vector<256x128xf32>
    %57 = tpu.matmul %54, %56, %cst_41 {dimension_numbers = #tpu.dot_dimension_numbers<[1], [0], [0], [1], [0, 0, 1, 1], [], []>} : vector<256x128xf32>, vector<128x128xf32>, vector<256x128xf32> -> vector<256x128xf32>
    %c2_42 = arith.constant 2 : index
    %c0_43 = arith.constant 0 : index
    %c0_44 = arith.constant 0 : index
    %58 = vector.load %arg7[%c2_42, %c0_43, %c0_44] : memref<3x1x128xf32, #tpu.memory_space<vmem>>, vector<1x1x128xf32>
    %59 = vector.shape_cast %58 : vector<1x1x128xf32> to vector<1x128xf32>
    %60 = vector.broadcast %59 : vector<1x128xf32> to vector<256x128xf32>
    %61 = arith.addf %57, %60 : vector<256x128xf32>
    %c2_45 = arith.constant 2 : index
    %c0_46 = arith.constant 0 : index
    %c0_47 = arith.constant 0 : index
    %62 = vector.load %arg8[%c2_45, %c0_46, %c0_47] : memref<3x128x256xf32, #tpu.memory_space<vmem>>, vector<1x128x256xf32>
    %63 = vector.shape_cast %62 : vector<1x128x256xf32> to vector<128x256xf32>
    %cst_48 = arith.constant dense<0.000000e+00> : vector<256x256xf32>
    %64 = tpu.matmul %54, %63, %cst_48 {dimension_numbers = #tpu.dot_dimension_numbers<[1], [0], [0], [1], [0, 0, 1, 1], [], []>} : vector<256x128xf32>, vector<128x256xf32>, vector<256x256xf32> -> vector<256x256xf32>
    %c2_49 = arith.constant 2 : index
    %c0_50 = arith.constant 0 : index
    %c0_51 = arith.constant 0 : index
    %65 = vector.load %arg9[%c2_49, %c0_50, %c0_51] : memref<3x1x256xf32, #tpu.memory_space<vmem>>, vector<1x1x256xf32>
    %66 = vector.shape_cast %65 : vector<1x1x256xf32> to vector<1x256xf32>
    %67 = vector.broadcast %66 : vector<1x256xf32> to vector<256x256xf32>
    %68 = arith.addf %64, %67 : vector<256x256xf32>
    %cst_52 = arith.constant dense<0.000000e+00> : vector<256x128xf32>
    %69 = tpu.matmul %0, %61, %cst_52 {dimension_numbers = #tpu.dot_dimension_numbers<[1], [0], [0], [1], [0, 0, 1, 1], [], []>} : vector<256x256xf32>, vector<256x128xf32>, vector<256x128xf32> -> vector<256x128xf32>
    %70 = vector.extract_strided_slice %68 {offsets = [0, 0], sizes = [256, 128], strides = [1, 1]} : vector<256x256xf32> to vector<256x128xf32>
    %71 = vector.broadcast %2 : vector<256x1xf32> to vector<256x128xf32>
    %72 = arith.mulf %71, %70 : vector<256x128xf32>
    %73 = arith.subf %69, %72 : vector<256x128xf32>
    %74 = vector.extract_strided_slice %68 {offsets = [0, 128], sizes = [256, 128], strides = [1, 1]} : vector<256x256xf32> to vector<256x128xf32>
    %75 = arith.addf %73, %74 : vector<256x128xf32>
    %cst_53 = arith.constant 0.000000e+00 : f32
    %76 = vector.broadcast %cst_53 : f32 to vector<256x128xf32>
    %77 = arith.maximumf %75, %76 : vector<256x128xf32>
    %c0_54 = arith.constant 0 : index
    %c0_55 = arith.constant 0 : index
    %78 = vector.load %arg10[%c0_54, %c0_55] : memref<256x128xf32, #tpu.memory_space<vmem>>, vector<256x128xf32>
    tpu.vector_store %arg10[%c0_54, %c0_55], %77 {strides = array<i32>} : memref<256x128xf32, #tpu.memory_space<vmem>>, vector<256x128xf32>,
    %c0_56 = arith.constant 0 : index
    %c0_57 = arith.constant 0 : index
    %79 = vector.load %arg3[%c0_56, %c0_57] : memref<8x256xf32, #tpu.memory_space<vmem>>, vector<8x256xf32>
    %cst_58 = arith.constant dense<0.000000e+00> : vector<8x128xf32>
    %80 = tpu.matmul %79, %77, %cst_58 {dimension_numbers = #tpu.dot_dimension_numbers<[1], [0], [0], [1], [0, 0, 1, 1], [], []>} : vector<8x256xf32>, vector<256x128xf32>, vector<8x128xf32> -> vector<8x128xf32>
    %c0_59 = arith.constant 0 : index
    %c0_60 = arith.constant 0 : index
    %81 = vector.load %arg11[%c0_59, %c0_60] : memref<8x128xf32, #tpu.memory_space<vmem>>, vector<8x128xf32>
    tpu.vector_store %arg11[%c0_59, %c0_60], %80 {strides = array<i32>} : memref<8x128xf32, #tpu.memory_space<vmem>>, vector<8x128xf32>,
    return
  }
  func.func @transform_0(%arg0: i32) -> (i32, i32) {
    %c0_i32 = arith.constant 0 : i32
    %c0_i32_0 = arith.constant 0 : i32
    %c0_i32_1 = arith.constant 0 : i32
    return %c0_i32, %c0_i32_0 : i32, i32
  }
  func.func @transform_1(%arg0: i32) -> (i32, i32) {
    %c0_i32 = arith.constant 0 : i32
    %c0_i32_0 = arith.constant 0 : i32
    %c0_i32_1 = arith.constant 0 : i32
    return %c0_i32, %c0_i32_0 : i32, i32
  }
  func.func @transform_2(%arg0: i32) -> (i32, i32) {
    %c0_i32 = arith.constant 0 : i32
    %c0_i32_0 = arith.constant 0 : i32
    %c0_i32_1 = arith.constant 0 : i32
    return %c0_i32, %c0_i32_0 : i32, i32
  }
  func.func @transform_3(%arg0: i32) -> (i32, i32) {
    %c0_i32 = arith.constant 0 : i32
    %c0_i32_0 = arith.constant 0 : i32
    %c0_i32_1 = arith.constant 0 : i32
    return %c0_i32, %c0_i32_0 : i32, i32
  }
  func.func @transform_4(%arg0: i32) -> (i32, i32) {
    %c0_i32 = arith.constant 0 : i32
    %c0_i32_0 = arith.constant 0 : i32
    %c0_i32_1 = arith.constant 0 : i32
    return %c0_i32, %c0_i32_0 : i32, i32
  }
  func.func @transform_5(%arg0: i32) -> (i32, i32, i32) {
    %c0_i32 = arith.constant 0 : i32
    %c0_i32_0 = arith.constant 0 : i32
    %c0_i32_1 = arith.constant 0 : i32
    %c0_i32_2 = arith.constant 0 : i32
    return %c0_i32, %c0_i32_0, %c0_i32_1 : i32, i32, i32
  }
  func.func @transform_6(%arg0: i32) -> (i32, i32, i32) {
    %c0_i32 = arith.constant 0 : i32
    %c0_i32_0 = arith.constant 0 : i32
    %c0_i32_1 = arith.constant 0 : i32
    %c0_i32_2 = arith.constant 0 : i32
    return %c0_i32, %c0_i32_0, %c0_i32_1 : i32, i32, i32
  }
  func.func @transform_7(%arg0: i32) -> (i32, i32, i32) {
    %c0_i32 = arith.constant 0 : i32
    %c0_i32_0 = arith.constant 0 : i32
    %c0_i32_1 = arith.constant 0 : i32
    %c0_i32_2 = arith.constant 0 : i32
    return %c0_i32, %c0_i32_0, %c0_i32_1 : i32, i32, i32
  }
  func.func @transform_8(%arg0: i32) -> (i32, i32, i32) {
    %c0_i32 = arith.constant 0 : i32
    %c0_i32_0 = arith.constant 0 : i32
    %c0_i32_1 = arith.constant 0 : i32
    %c0_i32_2 = arith.constant 0 : i32
    return %c0_i32, %c0_i32_0, %c0_i32_1 : i32, i32, i32
  }
  func.func @transform_9(%arg0: i32) -> (i32, i32) {
    %c0_i32 = arith.constant 0 : i32
    %c0_i32_0 = arith.constant 0 : i32
    %c0_i32_1 = arith.constant 0 : i32
    return %c0_i32, %c0_i32_0 : i32, i32
  }
  func.func @transform_10(%arg0: i32) -> (i32, i32) {
    %c0_i32 = arith.constant 0 : i32
    %c0_i32_0 = arith.constant 0 : i32
    %c0_i32_1 = arith.constant 0 : i32
    return %c0_i32, %c0_i32_0 : i32, i32
  }
}

</mosaic_0001>

<llo_original>
// kernel: tpu_custom_call.1
$region0: #{tpu_custom_call.1}
  #allocation0 [shape = 'u32[]', space=smem, size = 0x4, offset = 0x4, fixed_abs, tag = 'smem constant byte address 0x4 - core index']
  #allocation1 [shape = 'u32[144,128]{1,0:T(1,128)}', space=vmem, size = 0x12000, scoped, tag = 'internal scratch']
  %s0 = inlined_call_operand.hbm [shape: f32[256,128], index: 0, kind: input, shape index: {}]
  %s1 = inlined_call_operand.hbm [shape: f32[256,256], index: 1, kind: input, shape index: {}]
  %s2 = inlined_call_operand.hbm [shape: f32[8,256], index: 2, kind: input, shape index: {}]
  %s3 = inlined_call_operand.hbm [shape: f32[128,128], index: 3, kind: input, shape index: {}]
  %s4 = inlined_call_operand.vmem [shape: f32[1,128], index: 4, kind: input, shape index: {}]
  %s5 = inlined_call_operand.hbm [shape: f32[3,128,128], index: 5, kind: input, shape index: {}]
  %s6 = inlined_call_operand.vmem [shape: f32[3,1,128], index: 6, kind: input, shape index: {}]
  %s7 = inlined_call_operand.hbm [shape: f32[3,128,256], index: 7, kind: input, shape index: {}]
  %s8 = inlined_call_operand.vmem [shape: f32[3,1,256], index: 8, kind: input, shape index: {}]
  %s9 = inlined_call_operand.hbm [shape: f32[256,128], index: 9, kind: output, shape index: {0}]
  %s10 = inlined_call_operand.hbm [shape: f32[8,128], index: 10, kind: output, shape index: {1}]
  %11 = xla_tuple %s9, %s10
  %s12 = sld [smem:[#allocation0]]
  $region78: #{tpu_custom_call.1} parent=0
    _
  %s14 = ssub.s32 1, %s12
  %s15 = scalar_select 0, %s14, %s12
  $region1: #{tpu_custom_call.1} parent=0
    #allocation2 [shape = 'u8[131072]{0}', space=vmem, size = 0x20000, scoped, tag = 'input window, operand 0, single buffered']
    #allocation3 [shape = 's32[1]{0}', space=sflag, size = 0x4, scoped, tag = 'scoped memory for tpu_custom_call.1']
    #allocation4 [shape = 's32[1]{0}', space=sflag, size = 0x4, scoped, tag = 'scoped memory for tpu_custom_call.1']
    #allocation5 [shape = 'u8[262144]{0}', space=vmem, size = 0x40000, scoped, tag = 'input window, operand 1, single buffered']
    #allocation6 [shape = 's32[1]{0}', space=sflag, size = 0x4, scoped, tag = 'scoped memory for tpu_custom_call.1']
    #allocation7 [shape = 'u8[8192]{0}', space=vmem, size = 0x2000, scoped, tag = 'input window, operand 2, single buffered']
    #allocation8 [shape = 'u8[65536]{0}', space=vmem, size = 0x10000, scoped, tag = 'input window, operand 3, single buffered']
    #allocation9 [shape = 's32[1]{0}', space=sflag, size = 0x4, scoped, tag = 'scoped memory for tpu_custom_call.1']
    #allocation10 [shape = 'u8[196608]{0}', space=vmem, size = 0x30000, scoped, tag = 'input window, operand 5, single buffered']
    #allocation11 [shape = 'u8[393216]{0}', space=vmem, size = 0x60000, scoped, tag = 'input window, operand 7, single buffered']
    #allocation12 [shape = 's32[1]{0}', space=sflag, size = 0x4, scoped, tag = 'scoped memory for tpu_custom_call.1']
    #allocation13 [shape = 'u8[131072]{0}', space=vmem, size = 0x20000, scoped, tag = 'output window, operand 0, single buffered']
    #allocation14 [shape = 'u8[4096]{0}', space=vmem, size = 0x1000, scoped, tag = 'output window, operand 1, single buffered']
    #allocation15 [shape = 's32[1]{0}', space=sflag, size = 0x4, scoped, tag = 'scoped memory for tpu_custom_call.1']
    %16 = vsyncpa [#allocation3], 0
    %17 = vsyncpa [#allocation6], 0
    %18 = vsyncpa [#allocation9], 0
    %19 = vsyncpa [#allocation12], 0
    %20 = vsyncpa [#allocation4], 0
    %21 = vsyncpa [#allocation15], 0
    // Predicated region
    $region2: #{tpu_custom_call.1} parent=1 // pred_check
      _
    $region3: #{tpu_custom_call.1} parent=1 // pred_check_branch
      %23 = sbr.rel (0) target = $region5
    $region4: #{tpu_custom_call.1} parent=1 // pred_region
      %s25 = ssub.s32 4096, 4096
      %26 = vsyncadd [#allocation3], %s25
      %s27 = sshll.u32 [#allocation2], 4
      %s28 = int_to_ptr.vmem [resolvable:$true] %s27
      %33 = dma.hbm_to_vmem [thread:$0]  %s0, 4096, %s28, [#allocation3], 128, 128, 8
    $region5: #{tpu_custom_call.1} parent=1 // pred_fallthru
      _
    // Predicated region
    $region6: #{tpu_custom_call.1} parent=1 // pred_check
      _
    $region7: #{tpu_custom_call.1} parent=1 // pred_check_branch
      %35 = sbr.rel (0) target = $region9
    $region8: #{tpu_custom_call.1} parent=1 // pred_region
      %s37 = ssub.s32 8192, 8192
      %38 = vsyncadd [#allocation6], %s37
      %s39 = sshll.u32 [#allocation5], 4
      %s40 = int_to_ptr.vmem [resolvable:$true] %s39
      %45 = dma.hbm_to_vmem [thread:$0]  %s1, 8192, %s40, [#allocation6], 256, 256, 16
    $region9: #{tpu_custom_call.1} parent=1 // pred_fallthru
      _
    // Predicated region
    $region10: #{tpu_custom_call.1} parent=1 // pred_check
      _
    $region11: #{tpu_custom_call.1} parent=1 // pred_check_branch
      %47 = sbr.rel (0) target = $region13
    $region12: #{tpu_custom_call.1} parent=1 // pred_region
      %s49 = ssub.s32 256, 256
      %50 = vsyncadd [#allocation6], %s49
      %s52 = sshll.u32 [#allocation7], 4
      %s53 = int_to_ptr.vmem [resolvable:$true] %s52
      %55 = dma.hbm_to_vmem [thread:$0]  %s2, 256, %s53, [#allocation6]
    $region13: #{tpu_custom_call.1} parent=1 // pred_fallthru
      _
    // Predicated region
    $region14: #{tpu_custom_call.1} parent=1 // pred_check
      _
    $region15: #{tpu_custom_call.1} parent=1 // pred_check_branch
      %57 = sbr.rel (0) target = $region17
    $region16: #{tpu_custom_call.1} parent=1 // pred_region
      %s59 = ssub.s32 2048, 2048
      %60 = vsyncadd [#allocation9], %s59
      %s61 = sshll.u32 [#allocation8], 4
      %s62 = int_to_ptr.vmem [resolvable:$true] %s61
      %67 = dma.hbm_to_vmem [thread:$0]  %s3, 2048, %s62, [#allocation9], 128, 128, 8
    $region17: #{tpu_custom_call.1} parent=1 // pred_fallthru
      _
    // Predicated region
    $region18: #{tpu_custom_call.1} parent=1 // pred_check
      _
    $region19: #{tpu_custom_call.1} parent=1 // pred_check_branch
      %69 = sbr.rel (0) target = $region21
    $region20: #{tpu_custom_call.1} parent=1 // pred_region
      _
    $region21: #{tpu_custom_call.1} parent=1 // pred_fallthru
      _
    // Predicated region
    $region22: #{tpu_custom_call.1} parent=1 // pred_check
      _
    $region23: #{tpu_custom_call.1} parent=1 // pred_check_branch
      %71 = sbr.rel (0) target = $region25
    $region24: #{tpu_custom_call.1} parent=1 // pred_region
      %s73 = ssub.s32 6144, 6144
      %74 = vsyncadd [#allocation9], %s73
      %s75 = sshll.u32 [#allocation10], 4
      %s76 = int_to_ptr.vmem [resolvable:$true] %s75
      %81 = dma.hbm_to_vmem [thread:$0]  %s5, 6144, %s76, [#allocation9], 128, 128, 8
    $region25: #{tpu_custom_call.1} parent=1 // pred_fallthru
      _
    // Predicated region
    $region26: #{tpu_custom_call.1} parent=1 // pred_check
      _
    $region27: #{tpu_custom_call.1} parent=1 // pred_check_branch
      %83 = sbr.rel (0) target = $region29
    $region28: #{tpu_custom_call.1} parent=1 // pred_region
      _
    $region29: #{tpu_custom_call.1} parent=1 // pred_fallthru
      _
    // Predicated region
    $region30: #{tpu_custom_call.1} parent=1 // pred_check
      _
    $region31: #{tpu_custom_call.1} parent=1 // pred_check_branch
      %85 = sbr.rel (0) target = $region33
    $region32: #{tpu_custom_call.1} parent=1 // pred_region
      %s87 = ssub.s32 12288, 12288
      %88 = vsyncadd [#allocation12], %s87
      %s89 = sshll.u32 [#allocation11], 4
      %s90 = int_to_ptr.vmem [resolvable:$true] %s89
      %95 = dma.hbm_to_vmem [thread:$0]  %s7, 12288, %s90, [#allocation12], 256, 256, 16
    $region33: #{tpu_custom_call.1} parent=1 // pred_fallthru
      _
    // Predicated region
    $region34: #{tpu_custom_call.1} parent=1 // pred_check
      _
    $region35: #{tpu_custom_call.1} parent=1 // pred_check_branch
      %97 = sbr.rel (0) target = $region37
    $region36: #{tpu_custom_call.1} parent=1 // pred_region
      _
    $region37: #{tpu_custom_call.1} parent=1 // pred_fallthru
      _
    // Predicated region
    $region38: #{tpu_custom_call.1} parent=1 // pred_check
      _
    $region39: #{tpu_custom_call.1} parent=1 // pred_check_branch
      %99 = sbr.rel (0) target = $region41
    $region40: #{tpu_custom_call.1} parent=1 // pred_region
      %100 = dma.done [#allocation3], 4096
    $region41: #{tpu_custom_call.1} parent=1 // pred_fallthru
      _
    // Predicated region
    $region42: #{tpu_custom_call.1} parent=1 // pred_check
      _
    $region43: #{tpu_custom_call.1} parent=1 // pred_check_branch
      %102 = sbr.rel (0) target = $region45
    $region44: #{tpu_custom_call.1} parent=1 // pred_region
      %103 = dma.done [#allocation6], 8192
    $region45: #{tpu_custom_call.1} parent=1 // pred_fallthru
      _
    // Predicated region
    $region46: #{tpu_custom_call.1} parent=1 // pred_check
      _
    $region47: #{tpu_custom_call.1} parent=1 // pred_check_branch
      %105 = sbr.rel (0) target = $region49
    $region48: #{tpu_custom_call.1} parent=1 // pred_region
      %106 = dma.done [#allocation6], 256
    $region49: #{tpu_custom_call.1} parent=1 // pred_fallthru
      _
    // Predicated region
    $region50: #{tpu_custom_call.1} parent=1 // pred_check
      _
    $region51: #{tpu_custom_call.1} parent=1 // pred_check_branch
      %108 = sbr.rel (0) target = $region53
    $region52: #{tpu_custom_call.1} parent=1 // pred_region
      %109 = dma.done [#allocation9], 2048
    $region53: #{tpu_custom_call.1} parent=1 // pred_fallthru
      _
    // Predicated region
    $region54: #{tpu_custom_call.1} parent=1 // pred_check
      _
    $region55: #{tpu_custom_call.1} parent=1 // pred_check_branch
      %111 = sbr.rel (0) target = $region57
    $region56: #{tpu_custom_call.1} parent=1 // pred_region
      %112 = dma.done [#allocation9], 6144
    $region57: #{tpu_custom_call.1} parent=1 // pred_fallthru
      _
    // Predicated region
    $region58: #{tpu_custom_call.1} parent=1 // pred_check
      _
    $region59: #{tpu_custom_call.1} parent=1 // pred_check_branch
      %114 = sbr.rel (0) target = $region61
    $region60: #{tpu_custom_call.1} parent=1 // pred_region
      %115 = dma.done [#allocation12], 12288
    $region61: #{tpu_custom_call.1} parent=1 // pred_fallthru
      _
    %v116 = vld [vmem:[#allocation5] sm:$0xff]
    %v117 = vld [vmem:[#allocation5 + $0x8] sm:$0xff]
    %v118 = vld [vmem:[#allocation5 + $0x10] sm:$0xff]
    %v119 = vld [vmem:[#allocation5 + $0x18] sm:$0xff]
    %v120 = vld [vmem:[#allocation5 + $0x20] sm:$0xff]
    %v121 = vld [vmem:[#allocation5 + $0x28] sm:$0xff]
    %v122 = vld [vmem:[#allocation5 + $0x30] sm:$0xff]
    %v123 = vld [vmem:[#allocation5 + $0x38] sm:$0xff]
    %v124 = vld [vmem:[#allocation5 + $0x40] sm:$0xff]
    %v125 = vld [vmem:[#allocation5 + $0x48] sm:$0xff]
    %v126 = vld [vmem:[#allocation5 + $0x50] sm:$0xff]
    %v127 = vld [vmem:[#allocation5 + $0x58] sm:$0xff]
    %v128 = vld [vmem:[#allocation5 + $0x60] sm:$0xff]
    %v129 = vld [vmem:[#allocation5 + $0x68] sm:$0xff]
    %v130 = vld [vmem:[#allocation5 + $0x70] sm:$0xff]
    %v131 = vld [vmem:[#allocation5 + $0x78] sm:$0xff]
    %v132 = vld [vmem:[#allocation5 + $0x80] sm:$0xff]
    %v133 = vld [vmem:[#allocation5 + $0x88] sm:$0xff]
    %v134 = vld [vmem:[#allocation5 + $0x90] sm:$0xff]
    %v135 = vld [vmem:[#allocation5 + $0x98] sm:$0xff]
    %v136 = vld [vmem:[#allocation5 + $0xa0] sm:$0xff]
    %v137 = vld [vmem:[#allocation5 + $0xa8] sm:$0xff]
    %v138 = vld [vmem:[#allocation5 + $0xb0] sm:$0xff]
    %v139 = vld [vmem:[#allocation5 + $0xb8] sm:$0xff]
    %v140 = vld [vmem:[#allocation5 + $0xc0] sm:$0xff]
    %v141 = vld [vmem:[#allocation5 + $0xc8] sm:$0xff]
    %v142 = vld [vmem:[#allocation5 + $0xd0] sm:$0xff]
    %v143 = vld [vmem:[#allocation5 + $0xd8] sm:$0xff]
    %v144 = vld [vmem:[#allocation5 + $0xe0] sm:$0xff]
    %v145 = vld [vmem:[#allocation5 + $0xe8] sm:$0xff]
    %v146 = vld [vmem:[#allocation5 + $0xf0] sm:$0xff]
    %v147 = vld [vmem:[#allocation5 + $0xf8] sm:$0xff]
    %v148 = vld [vmem:[#allocation5 + $0x100] sm:$0xff]
    %v149 = vld [vmem:[#allocation5 + $0x108] sm:$0xff]
    %v150 = vld [vmem:[#allocation5 + $0x110] sm:$0xff]
    %v151 = vld [vmem:[#allocation5 + $0x118] sm:$0xff]
    %v152 = vld [vmem:[#allocation5 + $0x120] sm:$0xff]
    %v153 = vld [vmem:[#allocation5 + $0x128] sm:$0xff]
    %v154 = vld [vmem:[#allocation5 + $0x130] sm:$0xff]
    %v155 = vld [vmem:[#allocation5 + $0x138] sm:$0xff]
    %v156 = vld [vmem:[#allocation5 + $0x140] sm:$0xff]
    %v157 = vld [vmem:[#allocation5 + $0x148] sm:$0xff]
    %v158 = vld [vmem:[#allocation5 + $0x150] sm:$0xff]
    %v159 = vld [vmem:[#allocation5 + $0x158] sm:$0xff]
    %v160 = vld [vmem:[#allocation5 + $0x160] sm:$0xff]
    %v161 = vld [vmem:[#allocation5 + $0x168] sm:$0xff]
    %v162 = vld [vmem:[#allocation5 + $0x170] sm:$0xff]
    %v163 = vld [vmem:[#allocation5 + $0x178] sm:$0xff]
    %v164 = vld [vmem:[#allocation5 + $0x180] sm:$0xff]
    %v165 = vld [vmem:[#allocation5 + $0x188] sm:$0xff]
    %v166 = vld [vmem:[#allocation5 + $0x190] sm:$0xff]
    %v167 = vld [vmem:[#allocation5 + $0x198] sm:$0xff]
    %v168 = vld [vmem:[#allocation5 + $0x1a0] sm:$0xff]
    %v169 = vld [vmem:[#allocation5 + $0x1a8] sm:$0xff]
    %v170 = vld [vmem:[#allocation5 + $0x1b0] sm:$0xff]
    %v171 = vld [vmem:[#allocation5 + $0x1b8] sm:$0xff]
    %v172 = vld [vmem:[#allocation5 + $0x1c0] sm:$0xff]
    %v173 = vld [vmem:[#allocation5 + $0x1c8] sm:$0xff]
    %v174 = vld [vmem:[#allocation5 + $0x1d0] sm:$0xff]
    %v175 = vld [vmem:[#allocation5 + $0x1d8] sm:$0xff]
    %v176 = vld [vmem:[#allocation5 + $0x1e0] sm:$0xff]
    %v177 = vld [vmem:[#allocation5 + $0x1e8] sm:$0xff]
    %v178 = vld [vmem:[#allocation5 + $0x1f0] sm:$0xff]
    %v179 = vld [vmem:[#allocation5 + $0x1f8] sm:$0xff]
    %v180 = vadd.f32 %v116, %v117
    %181 = vadd.xlane.f32.xlu0 %v180
    %v182 = vpop.xlane.xlu0 %181
    %v183 = vadd.f32 %v118, %v119
    %184 = vadd.xlane.f32.xlu0 %v183
    %v185 = vpop.xlane.xlu0 %184
    %v186 = vadd.f32 %v120, %v121
    %187 = vadd.xlane.f32.xlu0 %v186
    %v188 = vpop.xlane.xlu0 %187
    %v189 = vadd.f32 %v122, %v123
    %190 = vadd.xlane.f32.xlu0 %v189
    %v191 = vpop.xlane.xlu0 %190
    %v192 = vadd.f32 %v124, %v125
    %193 = vadd.xlane.f32.xlu0 %v192
    %v194 = vpop.xlane.xlu0 %193
    %v195 = vadd.f32 %v126, %v127
    %196 = vadd.xlane.f32.xlu0 %v195
    %v197 = vpop.xlane.xlu0 %196
    %v198 = vadd.f32 %v128, %v129
    %199 = vadd.xlane.f32.xlu0 %v198
    %v200 = vpop.xlane.xlu0 %199
    %v201 = vadd.f32 %v130, %v131
    %202 = vadd.xlane.f32.xlu0 %v201
    %v203 = vpop.xlane.xlu0 %202
    %v204 = vadd.f32 %v132, %v133
    %205 = vadd.xlane.f32.xlu0 %v204
    %v206 = vpop.xlane.xlu0 %205
    %v207 = vadd.f32 %v134, %v135
    %208 = vadd.xlane.f32.xlu0 %v207
    %v209 = vpop.xlane.xlu0 %208
    %v210 = vadd.f32 %v136, %v137
    %211 = vadd.xlane.f32.xlu0 %v210
    %v212 = vpop.xlane.xlu0 %211
    %v213 = vadd.f32 %v138, %v139
    %214 = vadd.xlane.f32.xlu0 %v213
    %v215 = vpop.xlane.xlu0 %214
    %v216 = vadd.f32 %v140, %v141
    %217 = vadd.xlane.f32.xlu0 %v216
    %v218 = vpop.xlane.xlu0 %217
    %v219 = vadd.f32 %v142, %v143
    %220 = vadd.xlane.f32.xlu0 %v219
    %v221 = vpop.xlane.xlu0 %220
    %v222 = vadd.f32 %v144, %v145
    %223 = vadd.xlane.f32.xlu0 %v222
    %v224 = vpop.xlane.xlu0 %223
    %v225 = vadd.f32 %v146, %v147
    %226 = vadd.xlane.f32.xlu0 %v225
    %v227 = vpop.xlane.xlu0 %226
    %v228 = vadd.f32 %v148, %v149
    %229 = vadd.xlane.f32.xlu0 %v228
    %v230 = vpop.xlane.xlu0 %229
    %v231 = vadd.f32 %v150, %v151
    %232 = vadd.xlane.f32.xlu0 %v231
    %v233 = vpop.xlane.xlu0 %232
    %v234 = vadd.f32 %v152, %v153
    %235 = vadd.xlane.f32.xlu0 %v234
    %v236 = vpop.xlane.xlu0 %235
    %v237 = vadd.f32 %v154, %v155
    %238 = vadd.xlane.f32.xlu0 %v237
    %v239 = vpop.xlane.xlu0 %238
    %v240 = vadd.f32 %v156, %v157
    %241 = vadd.xlane.f32.xlu0 %v240
    %v242 = vpop.xlane.xlu0 %241
    %v243 = vadd.f32 %v158, %v159
    %244 = vadd.xlane.f32.xlu0 %v243
    %v245 = vpop.xlane.xlu0 %244
    %v246 = vadd.f32 %v160, %v161
    %247 = vadd.xlane.f32.xlu0 %v246
    %v248 = vpop.xlane.xlu0 %247
    %v249 = vadd.f32 %v162, %v163
    %250 = vadd.xlane.f32.xlu0 %v249
    %v251 = vpop.xlane.xlu0 %250
    %v252 = vadd.f32 %v164, %v165
    %253 = vadd.xlane.f32.xlu0 %v252
    %v254 = vpop.xlane.xlu0 %253
    %v255 = vadd.f32 %v166, %v167
    %256 = vadd.xlane.f32.xlu0 %v255
    %v257 = vpop.xlane.xlu0 %256
    %v258 = vadd.f32 %v168, %v169
    %259 = vadd.xlane.f32.xlu0 %v258
    %v260 = vpop.xlane.xlu0 %259
    %v261 = vadd.f32 %v170, %v171
    %262 = vadd.xlane.f32.xlu0 %v261
    %v263 = vpop.xlane.xlu0 %262
    %v264 = vadd.f32 %v172, %v173
    %265 = vadd.xlane.f32.xlu0 %v264
    %v266 = vpop.xlane.xlu0 %265
    %v267 = vadd.f32 %v174, %v175
    %268 = vadd.xlane.f32.xlu0 %v267
    %v269 = vpop.xlane.xlu0 %268
    %v270 = vadd.f32 %v176, %v177
    %271 = vadd.xlane.f32.xlu0 %v270
    %v272 = vpop.xlane.xlu0 %271
    %v273 = vadd.f32 %v178, %v179
    %274 = vadd.xlane.f32.xlu0 %v273
    %v275 = vpop.xlane.xlu0 %274
    %v276 = vld [vmem:[#allocation2] sm:$0xff]
    %v277 = vld [vmem:[#allocation2 + $0x8] sm:$0xff]
    %v278 = vld [vmem:[#allocation2 + $0x10] sm:$0xff]
    %v279 = vld [vmem:[#allocation2 + $0x18] sm:$0xff]
    %v280 = vld [vmem:[#allocation2 + $0x20] sm:$0xff]
    %v281 = vld [vmem:[#allocation2 + $0x28] sm:$0xff]
    %v282 = vld [vmem:[#allocation2 + $0x30] sm:$0xff]
    %v283 = vld [vmem:[#allocation2 + $0x38] sm:$0xff]
    %v284 = vld [vmem:[#allocation2 + $0x40] sm:$0xff]
    %v285 = vld [vmem:[#allocation2 + $0x48] sm:$0xff]
    %v286 = vld [vmem:[#allocation2 + $0x50] sm:$0xff]
    %v287 = vld [vmem:[#allocation2 + $0x58] sm:$0xff]
    %v288 = vld [vmem:[#allocation2 + $0x60] sm:$0xff]
    %v289 = vld [vmem:[#allocation2 + $0x68] sm:$0xff]
    %v290 = vld [vmem:[#allocation2 + $0x70] sm:$0xff]
    %v291 = vld [vmem:[#allocation2 + $0x78] sm:$0xff]
    %v292 = vld [vmem:[#allocation2 + $0x80] sm:$0xff]
    %v293 = vld [vmem:[#allocation2 + $0x88] sm:$0xff]
    %v294 = vld [vmem:[#allocation2 + $0x90] sm:$0xff]
    %v295 = vld [vmem:[#allocation2 + $0x98] sm:$0xff]
    %v296 = vld [vmem:[#allocation2 + $0xa0] sm:$0xff]
    %v297 = vld [vmem:[#allocation2 + $0xa8] sm:$0xff]
    %v298 = vld [vmem:[#allocation2 + $0xb0] sm:$0xff]
    %v299 = vld [vmem:[#allocation2 + $0xb8] sm:$0xff]
    %v300 = vld [vmem:[#allocation2 + $0xc0] sm:$0xff]
    %v301 = vld [vmem:[#allocation2 + $0xc8] sm:$0xff]
    %v302 = vld [vmem:[#allocation2 + $0xd0] sm:$0xff]
    %v303 = vld [vmem:[#allocation2 + $0xd8] sm:$0xff]
    %v304 = vld [vmem:[#allocation2 + $0xe0] sm:$0xff]
    %v305 = vld [vmem:[#allocation2 + $0xe8] sm:$0xff]
    %v306 = vld [vmem:[#allocation2 + $0xf0] sm:$0xff]
    %v307 = vld [vmem:[#allocation2 + $0xf8] sm:$0xff]
    %v308 = vld [vmem:[#allocation8] sm:$0xff]
    %v309 = vld [vmem:[#allocation8 + $0x8] sm:$0xff]
    %v310 = vld [vmem:[#allocation8 + $0x10] sm:$0xff]
    %v311 = vld [vmem:[#allocation8 + $0x18] sm:$0xff]
    %v312 = vld [vmem:[#allocation8 + $0x20] sm:$0xff]
    %v313 = vld [vmem:[#allocation8 + $0x28] sm:$0xff]
    %v314 = vld [vmem:[#allocation8 + $0x30] sm:$0xff]
    %v315 = vld [vmem:[#allocation8 + $0x38] sm:$0xff]
    %v316 = vld [vmem:[#allocation8 + $0x40] sm:$0xff]
    %v317 = vld [vmem:[#allocation8 + $0x48] sm:$0xff]
    %v318 = vld [vmem:[#allocation8 + $0x50] sm:$0xff]
    %v319 = vld [vmem:[#allocation8 + $0x58] sm:$0xff]
    %v320 = vld [vmem:[#allocation8 + $0x60] sm:$0xff]
    %v321 = vld [vmem:[#allocation8 + $0x68] sm:$0xff]
    %v322 = vld [vmem:[#allocation8 + $0x70] sm:$0xff]
    %v323 = vld [vmem:[#allocation8 + $0x78] sm:$0xff]
    %v324 = vld [vmem:[%s4] sm:$0x1]
    %v326 = vlaneseq
    %v327 = vshrl.u32 %v326, 7
    %v328 = vsub.s32 0, %v327
    %v329 = vrot.slane %v324, %v328
    %331 = vmatprep.subr.mxu0 0.0
    %332 = vmatpush1.msra.mxu0 %v308
    %333 = vmatprep.subr.mxu0 0.0
    %334 = vmatpush1.msra.mxu0 %v309
    %335 = vmatprep.subr.mxu0 0.0
    %336 = vmatpush1.msra.mxu0 %v310
    %337 = vmatprep.subr.mxu0 0.0
    %338 = vmatpush1.msra.mxu0 %v311
    %339 = vmatprep.subr.mxu0 0.0
    %340 = vmatpush1.msra.mxu0 %v312
    %341 = vmatprep.subr.mxu0 0.0
    %342 = vmatpush1.msra.mxu0 %v313
    %343 = vmatprep.subr.mxu0 0.0
    %344 = vmatpush1.msra.mxu0 %v314
    %345 = vmatprep.subr.mxu0 0.0
    %346 = vmatpush1.msra.mxu0 %v315
    %347 = vmatprep.subr.mxu0 0.0
    %348 = vmatpush1.msra.mxu0 %v316
    %349 = vmatprep.subr.mxu0 0.0
    %350 = vmatpush1.msra.mxu0 %v317
    %351 = vmatprep.subr.mxu0 0.0
    %352 = vmatpush1.msra.mxu0 %v318
    %353 = vmatprep.subr.mxu0 0.0
    %354 = vmatpush1.msra.mxu0 %v319
    %355 = vmatprep.subr.mxu0 0.0
    %356 = vmatpush1.msra.mxu0 %v320
    %357 = vmatprep.subr.mxu0 0.0
    %358 = vmatpush1.msra.mxu0 %v321
    %359 = vmatprep.subr.mxu0 0.0
    %360 = vmatpush1.msra.mxu0 %v322
    %361 = vmatprep.subr.mxu0 0.0
    %362 = vmatpush1.msra.mxu0 %v323
    %363 = vmatprep.subr.mxu0 0.0
    %364 = vmatpush1.msra.mxu0 0.0
    %365 = vmatprep.subr.mxu0 0.0
    %366 = vmatpush1.msra.mxu0 0.0
    %367 = vmatprep.subr.mxu0 0.0
    %368 = vmatpush1.msra.mxu0 0.0
    %369 = vmatprep.subr.mxu0 0.0
    %370 = vmatpush1.msra.mxu0 0.0
    %371 = vmatprep.subr.mxu0 0.0
    %372 = vmatpush1.msra.mxu0 0.0
    %373 = vmatprep.subr.mxu0 0.0
    %374 = vmatpush1.msra.mxu0 0.0
    %375 = vmatprep.subr.mxu0 0.0
    %376 = vmatpush1.msra.mxu0 0.0
    %377 = vmatprep.subr.mxu0 0.0
    %378 = vmatpush1.msra.mxu0 0.0
    %379 = vmatprep.subr.mxu0 0.0
    %380 = vmatpush1.msra.mxu0 0.0
    %381 = vmatprep.subr.mxu0 0.0
    %382 = vmatpush1.msra.mxu0 0.0
    %383 = vmatprep.subr.mxu0 0.0
    %384 = vmatpush1.msra.mxu0 0.0
    %385 = vmatprep.subr.mxu0 0.0
    %386 = vmatpush1.msra.mxu0 0.0
    %387 = vmatprep.subr.mxu0 0.0
    %388 = vmatpush1.msra.mxu0 0.0
    %389 = vmatprep.subr.mxu0 0.0
    %390 = vmatpush1.msra.mxu0 0.0
    %391 = vmatprep.subr.mxu0 0.0
    %392 = vmatpush1.msra.mxu0 0.0
    %393 = vmatprep.subr.mxu0 0.0
    %394 = vmatpush1.msra.mxu0 0.0
    %395 = vmatprep.mubr.f32.mxu0 0.0
    %396 = vmatmul.mubr.f32.gmra.mrb[0].mxu0 %v276
    %v397 = vpop.f32.mrb[0].mxu0
    %v398 = vadd.f32 %v329, %v397
    %v399 = vpop.f32.mrb[0].mxu0
    %400 = vmatprep.mubr.f32.mxu0 0.0
    %401 = vmatmul.mubr.f32.gmra.mrb[0].mxu0 %v277
    %v402 = vpop.f32.mrb[0].mxu0
    %v403 = vadd.f32 %v329, %v402
    %v404 = vpop.f32.mrb[0].mxu0
    %405 = vmatprep.mubr.f32.mxu0 0.0
    %406 = vmatmul.mubr.f32.gmra.mrb[0].mxu0 %v278
    %v407 = vpop.f32.mrb[0].mxu0
    %v408 = vadd.f32 %v329, %v407
    %v409 = vpop.f32.mrb[0].mxu0
    %410 = vmatprep.mubr.f32.mxu0 0.0
    %411 = vmatmul.mubr.f32.gmra.mrb[0].mxu0 %v279
    %v412 = vpop.f32.mrb[0].mxu0
    %v413 = vadd.f32 %v329, %v412
    %v414 = vpop.f32.mrb[0].mxu0
    %415 = vmatprep.mubr.f32.mxu0 0.0
    %416 = vmatmul.mubr.f32.gmra.mrb[0].mxu0 %v280
    %v417 = vpop.f32.mrb[0].mxu0
    %v418 = vadd.f32 %v329, %v417
    %v419 = vpop.f32.mrb[0].mxu0
    %420 = vmatprep.mubr.f32.mxu0 0.0
    %421 = vmatmul.mubr.f32.gmra.mrb[0].mxu0 %v281
    %v422 = vpop.f32.mrb[0].mxu0
    %v423 = vadd.f32 %v329, %v422
    %v424 = vpop.f32.mrb[0].mxu0
    %425 = vmatprep.mubr.f32.mxu0 0.0
    %426 = vmatmul.mubr.f32.gmra.mrb[0].mxu0 %v282
    %v427 = vpop.f32.mrb[0].mxu0
    %v428 = vadd.f32 %v329, %v427
    %v429 = vpop.f32.mrb[0].mxu0
    %430 = vmatprep.mubr.f32.mxu0 0.0
    %431 = vmatmul.mubr.f32.gmra.mrb[0].mxu0 %v283
    %v432 = vpop.f32.mrb[0].mxu0
    %v433 = vadd.f32 %v329, %v432
    %v434 = vpop.f32.mrb[0].mxu0
    %435 = vmatprep.mubr.f32.mxu0 0.0
    %436 = vmatmul.mubr.f32.gmra.mrb[0].mxu0 %v284
    %v437 = vpop.f32.mrb[0].mxu0
    %v438 = vadd.f32 %v329, %v437
    %v439 = vpop.f32.mrb[0].mxu0
    %440 = vmatprep.mubr.f32.mxu0 0.0
    %441 = vmatmul.mubr.f32.gmra.mrb[0].mxu0 %v285
    %v442 = vpop.f32.mrb[0].mxu0
    %v443 = vadd.f32 %v329, %v442
    %v444 = vpop.f32.mrb[0].mxu0
    %445 = vmatprep.mubr.f32.mxu0 0.0
    %446 = vmatmul.mubr.f32.gmra.mrb[0].mxu0 %v286
    %v447 = vpop.f32.mrb[0].mxu0
    %v448 = vadd.f32 %v329, %v447
    %v449 = vpop.f32.mrb[0].mxu0
    %450 = vmatprep.mubr.f32.mxu0 0.0
    %451 = vmatmul.mubr.f32.gmra.mrb[0].mxu0 %v287
    %v452 = vpop.f32.mrb[0].mxu0
    %v453 = vadd.f32 %v329, %v452
    %v454 = vpop.f32.mrb[0].mxu0
    %455 = vmatprep.mubr.f32.mxu0 0.0
    %456 = vmatmul.mubr.f32.gmra.mrb[0].mxu0 %v288
    %v457 = vpop.f32.mrb[0].mxu0
    %v458 = vadd.f32 %v329, %v457
    %v459 = vpop.f32.mrb[0].mxu0
    %460 = vmatprep.mubr.f32.mxu0 0.0
    %461 = vmatmul.mubr.f32.gmra.mrb[0].mxu0 %v289
    %v462 = vpop.f32.mrb[0].mxu0
    %v463 = vadd.f32 %v329, %v462
    %v464 = vpop.f32.mrb[0].mxu0
    %465 = vmatprep.mubr.f32.mxu0 0.0
    %466 = vmatmul.mubr.f32.gmra.mrb[0].mxu0 %v290
    %v467 = vpop.f32.mrb[0].mxu0
    %v468 = vadd.f32 %v329, %v467
    %v469 = vpop.f32.mrb[0].mxu0
    %470 = vmatprep.mubr.f32.mxu0 0.0
    %471 = vmatmul.mubr.f32.gmra.mrb[0].mxu0 %v291
    %v472 = vpop.f32.mrb[0].mxu0
    %v473 = vadd.f32 %v329, %v472
    %v474 = vpop.f32.mrb[0].mxu0
    %475 = vmatprep.mubr.f32.mxu0 0.0
    %476 = vmatmul.mubr.f32.gmra.mrb[0].mxu0 %v292
    %v477 = vpop.f32.mrb[0].mxu0
    %v478 = vadd.f32 %v329, %v477
    %v479 = vpop.f32.mrb[0].mxu0
    %480 = vmatprep.mubr.f32.mxu0 0.0
    %481 = vmatmul.mubr.f32.gmra.mrb[0].mxu0 %v293
    %v482 = vpop.f32.mrb[0].mxu0
    %v483 = vadd.f32 %v329, %v482
    %v484 = vpop.f32.mrb[0].mxu0
    %485 = vmatprep.mubr.f32.mxu0 0.0
    %486 = vmatmul.mubr.f32.gmra.mrb[0].mxu0 %v294
    %v487 = vpop.f32.mrb[0].mxu0
    %v488 = vadd.f32 %v329, %v487
    %v489 = vpop.f32.mrb[0].mxu0
    %490 = vmatprep.mubr.f32.mxu0 0.0
    %491 = vmatmul.mubr.f32.gmra.mrb[0].mxu0 %v295
    %v492 = vpop.f32.mrb[0].mxu0
    %v493 = vadd.f32 %v329, %v492
    %v494 = vpop.f32.mrb[0].mxu0
    %495 = vmatprep.mubr.f32.mxu0 0.0
    %496 = vmatmul.mubr.f32.gmra.mrb[0].mxu0 %v296
    %v497 = vpop.f32.mrb[0].mxu0
    %v498 = vadd.f32 %v329, %v497
    %v499 = vpop.f32.mrb[0].mxu0
    %500 = vmatprep.mubr.f32.mxu0 0.0
    %501 = vmatmul.mubr.f32.gmra.mrb[0].mxu0 %v297
    %v502 = vpop.f32.mrb[0].mxu0
    %v503 = vadd.f32 %v329, %v502
    %v504 = vpop.f32.mrb[0].mxu0
    %505 = vmatprep.mubr.f32.mxu0 0.0
    %506 = vmatmul.mubr.f32.gmra.mrb[0].mxu0 %v298
    %v507 = vpop.f32.mrb[0].mxu0
    %v508 = vadd.f32 %v329, %v507
    %v509 = vpop.f32.mrb[0].mxu0
    %510 = vmatprep.mubr.f32.mxu0 0.0
    %511 = vmatmul.mubr.f32.gmra.mrb[0].mxu0 %v299
    %v512 = vpop.f32.mrb[0].mxu0
    %v513 = vadd.f32 %v329, %v512
    %v514 = vpop.f32.mrb[0].mxu0
    %515 = vmatprep.mubr.f32.mxu0 0.0
    %516 = vmatmul.mubr.f32.gmra.mrb[0].mxu0 %v300
    %v517 = vpop.f32.mrb[0].mxu0
    %v518 = vadd.f32 %v329, %v517
    %v519 = vpop.f32.mrb[0].mxu0
    %520 = vmatprep.mubr.f32.mxu0 0.0
    %521 = vmatmul.mubr.f32.gmra.mrb[0].mxu0 %v301
    %v522 = vpop.f32.mrb[0].mxu0
    %v523 = vadd.f32 %v329, %v522
    %v524 = vpop.f32.mrb[0].mxu0
    %525 = vmatprep.mubr.f32.mxu0 0.0
    %526 = vmatmul.mubr.f32.gmra.mrb[0].mxu0 %v302
    %v527 = vpop.f32.mrb[0].mxu0
    %v528 = vadd.f32 %v329, %v527
    %v529 = vpop.f32.mrb[0].mxu0
    %530 = vmatprep.mubr.f32.mxu0 0.0
    %531 = vmatmul.mubr.f32.gmra.mrb[0].mxu0 %v303
    %v532 = vpop.f32.mrb[0].mxu0
    %v533 = vadd.f32 %v329, %v532
    %v534 = vpop.f32.mrb[0].mxu0
    %535 = vmatprep.mubr.f32.mxu0 0.0
    %536 = vmatmul.mubr.f32.gmra.mrb[0].mxu0 %v304
    %v537 = vpop.f32.mrb[0].mxu0
    %v538 = vadd.f32 %v329, %v537
    %v539 = vpop.f32.mrb[0].mxu0
    %540 = vmatprep.mubr.f32.mxu0 0.0
    %541 = vmatmul.mubr.f32.gmra.mrb[0].mxu0 %v305
    %v542 = vpop.f32.mrb[0].mxu0
    %v543 = vadd.f32 %v329, %v542
    %v544 = vpop.f32.mrb[0].mxu0
    %545 = vmatprep.mubr.f32.mxu0 0.0
    %546 = vmatmul.mubr.f32.gmra.mrb[0].mxu0 %v306
    %v547 = vpop.f32.mrb[0].mxu0
    %v548 = vadd.f32 %v329, %v547
    %v549 = vpop.f32.mrb[0].mxu0
    %550 = vmatprep.mubr.f32.mxu0 0.0
    %551 = vmatmul.mubr.f32.gmra.mrb[0].mxu0 %v307
    %v552 = vpop.f32.mrb[0].mxu0
    %v553 = vadd.f32 %v329, %v552
    %v554 = vpop.f32.mrb[0].mxu0
    %555 = vdwg.mxu0
    %v556 = vld [vmem:[#allocation10] sm:$0xff]
    %v557 = vld [vmem:[#allocation10 + $0x8] sm:$0xff]
    %v558 = vld [vmem:[#allocation10 + $0x10] sm:$0xff]
    %v559 = vld [vmem:[#allocation10 + $0x18] sm:$0xff]
    %v560 = vld [vmem:[#allocation10 + $0x20] sm:$0xff]
    %v561 = vld [vmem:[#allocation10 + $0x28] sm:$0xff]
    %v562 = vld [vmem:[#allocation10 + $0x30] sm:$0xff]
    %v563 = vld [vmem:[#allocation10 + $0x38] sm:$0xff]
    %v564 = vld [vmem:[#allocation10 + $0x40] sm:$0xff]
    %v565 = vld [vmem:[#allocation10 + $0x48] sm:$0xff]
    %v566 = vld [vmem:[#allocation10 + $0x50] sm:$0xff]
    %v567 = vld [vmem:[#allocation10 + $0x58] sm:$0xff]
    %v568 = vld [vmem:[#allocation10 + $0x60] sm:$0xff]
    %v569 = vld [vmem:[#allocation10 + $0x68] sm:$0xff]
    %v570 = vld [vmem:[#allocation10 + $0x70] sm:$0xff]
    %v571 = vld [vmem:[#allocation10 + $0x78] sm:$0xff]
    %v572 = vld [vmem:[%s6] sm:$0x1]
    %v574 = vlaneseq
    %v575 = vshrl.u32 %v574, 7
    %v576 = vsub.s32 0, %v575
    %v577 = vrot.slane %v572, %v576
    %579 = vmatprep.subr.mxu0 0.0
    %580 = vmatpush1.msra.mxu0 %v556
    %581 = vmatprep.subr.mxu0 0.0
    %582 = vmatpush1.msra.mxu0 %v557
    %583 = vmatprep.subr.mxu0 0.0
    %584 = vmatpush1.msra.mxu0 %v558
    %585 = vmatprep.subr.mxu0 0.0
    %586 = vmatpush1.msra.mxu0 %v559
    %587 = vmatprep.subr.mxu0 0.0
    %588 = vmatpush1.msra.mxu0 %v560
    %589 = vmatprep.subr.mxu0 0.0
    %590 = vmatpush1.msra.mxu0 %v561
    %591 = vmatprep.subr.mxu0 0.0
    %592 = vmatpush1.msra.mxu0 %v562
    %593 = vmatprep.subr.mxu0 0.0
    %594 = vmatpush1.msra.mxu0 %v563
    %595 = vmatprep.subr.mxu0 0.0
    %596 = vmatpush1.msra.mxu0 %v564
    %597 = vmatprep.subr.mxu0 0.0
    %598 = vmatpush1.msra.mxu0 %v565
    %599 = vmatprep.subr.mxu0 0.0
    %600 = vmatpush1.msra.mxu0 %v566
    %601 = vmatprep.subr.mxu0 0.0
    %602 = vmatpush1.msra.mxu0 %v567
    %603 = vmatprep.subr.mxu0 0.0
    %604 = vmatpush1.msra.mxu0 %v568
    %605 = vmatprep.subr.mxu0 0.0
    %606 = vmatpush1.msra.mxu0 %v569
    %607 = vmatprep.subr.mxu0 0.0
    %608 = vmatpush1.msra.mxu0 %v570
    %609 = vmatprep.subr.mxu0 0.0
    %610 = vmatpush1.msra.mxu0 %v571
    %611 = vmatprep.subr.mxu0 0.0
    %612 = vmatpush1.msra.mxu0 0.0
    %613 = vmatprep.subr.mxu0 0.0
    %614 = vmatpush1.msra.mxu0 0.0
    %615 = vmatprep.subr.mxu0 0.0
    %616 = vmatpush1.msra.mxu0 0.0
    %617 = vmatprep.subr.mxu0 0.0
    %618 = vmatpush1.msra.mxu0 0.0
    %619 = vmatprep.subr.mxu0 0.0
    %620 = vmatpush1.msra.mxu0 0.0
    %621 = vmatprep.subr.mxu0 0.0
    %622 = vmatpush1.msra.mxu0 0.0
    %623 = vmatprep.subr.mxu0 0.0
    %624 = vmatpush1.msra.mxu0 0.0
    %625 = vmatprep.subr.mxu0 0.0
    %626 = vmatpush1.msra.mxu0 0.0
    %627 = vmatprep.subr.mxu0 0.0
    %628 = vmatpush1.msra.mxu0 0.0
    %629 = vmatprep.subr.mxu0 0.0
    %630 = vmatpush1.msra.mxu0 0.0
    %631 = vmatprep.subr.mxu0 0.0
    %632 = vmatpush1.msra.mxu0 0.0
    %633 = vmatprep.subr.mxu0 0.0
    %634 = vmatpush1.msra.mxu0 0.0
    %635 = vmatprep.subr.mxu0 0.0
    %636 = vmatpush1.msra.mxu0 0.0
    %637 = vmatprep.subr.mxu0 0.0
    %638 = vmatpush1.msra.mxu0 0.0
    %639 = vmatprep.subr.mxu0 0.0
    %640 = vmatpush1.msra.mxu0 0.0
    %641 = vmatprep.subr.mxu0 0.0
    %642 = vmatpush1.msra.mxu0 0.0
    %643 = vmatprep.mubr.f32.mxu0 0.0
    %644 = vmatmul.mubr.f32.gmra.mrb[0].mxu0 %v398
    %v645 = vpop.f32.mrb[0].mxu0
    %v646 = vadd.f32 %v577, %v645
    %v647 = vpop.f32.mrb[0].mxu0
    %648 = vmatprep.mubr.f32.mxu0 0.0
    %649 = vmatmul.mubr.f32.gmra.mrb[0].mxu0 %v403
    %v650 = vpop.f32.mrb[0].mxu0
    %v651 = vadd.f32 %v577, %v650
    %v652 = vpop.f32.mrb[0].mxu0
    %653 = vmatprep.mubr.f32.mxu0 0.0
    %654 = vmatmul.mubr.f32.gmra.mrb[0].mxu0 %v408
    %v655 = vpop.f32.mrb[0].mxu0
    %v656 = vadd.f32 %v577, %v655
    %v657 = vpop.f32.mrb[0].mxu0
    %658 = vmatprep.mubr.f32.mxu0 0.0
    %659 = vmatmul.mubr.f32.gmra.mrb[0].mxu0 %v413
    %v660 = vpop.f32.mrb[0].mxu0
    %v661 = vadd.f32 %v577, %v660
    %v662 = vpop.f32.mrb[0].mxu0
    %663 = vmatprep.mubr.f32.mxu0 0.0
    %664 = vmatmul.mubr.f32.gmra.mrb[0].mxu0 %v418
    %v665 = vpop.f32.mrb[0].mxu0
    %v666 = vadd.f32 %v577, %v665
    %v667 = vpop.f32.mrb[0].mxu0
    %668 = vmatprep.mubr.f32.mxu0 0.0
    %669 = vmatmul.mubr.f32.gmra.mrb[0].mxu0 %v423
    %v670 = vpop.f32.mrb[0].mxu0
    %v671 = vadd.f32 %v577, %v670
    %v672 = vpop.f32.mrb[0].mxu0
    %673 = vmatprep.mubr.f32.mxu0 0.0
    %674 = vmatmul.mubr.f32.gmra.mrb[0].mxu0 %v428
    %v675 = vpop.f32.mrb[0].mxu0
    %v676 = vadd.f32 %v577, %v675
    %v677 = vpop.f32.mrb[0].mxu0
    %678 = vmatprep.mubr.f32.mxu0 0.0
    %679 = vmatmul.mubr.f32.gmra.mrb[0].mxu0 %v433
    %v680 = vpop.f32.mrb[0].mxu0
    %v681 = vadd.f32 %v577, %v680
    %v682 = vpop.f32.mrb[0].mxu0
    %683 = vmatprep.mubr.f32.mxu0 0.0
    %684 = vmatmul.mubr.f32.gmra.mrb[0].mxu0 %v438
    %v685 = vpop.f32.mrb[0].mxu0
    %v686 = vadd.f32 %v577, %v685
    %v687 = vpop.f32.mrb[0].mxu0
    %688 = vmatprep.mubr.f32.mxu0 0.0
    %689 = vmatmul.mubr.f32.gmra.mrb[0].mxu0 %v443
    %v690 = vpop.f32.mrb[0].mxu0
    %v691 = vadd.f32 %v577, %v690
    %v692 = vpop.f32.mrb[0].mxu0
    %693 = vmatprep.mubr.f32.mxu0 0.0
    %694 = vmatmul.mubr.f32.gmra.mrb[0].mxu0 %v448
    %v695 = vpop.f32.mrb[0].mxu0
    %v696 = vadd.f32 %v577, %v695
    %v697 = vpop.f32.mrb[0].mxu0
    %698 = vmatprep.mubr.f32.mxu0 0.0
    %699 = vmatmul.mubr.f32.gmra.mrb[0].mxu0 %v453
    %v700 = vpop.f32.mrb[0].mxu0
    %v701 = vadd.f32 %v577, %v700
    %v702 = vpop.f32.mrb[0].mxu0
    %703 = vmatprep.mubr.f32.mxu0 0.0
    %704 = vmatmul.mubr.f32.gmra.mrb[0].mxu0 %v458
    %v705 = vpop.f32.mrb[0].mxu0
    %v706 = vadd.f32 %v577, %v705
    %v707 = vpop.f32.mrb[0].mxu0
    %708 = vmatprep.mubr.f32.mxu0 0.0
    %709 = vmatmul.mubr.f32.gmra.mrb[0].mxu0 %v463
    %v710 = vpop.f32.mrb[0].mxu0
    %v711 = vadd.f32 %v577, %v710
    %v712 = vpop.f32.mrb[0].mxu0
    %713 = vmatprep.mubr.f32.mxu0 0.0
    %714 = vmatmul.mubr.f32.gmra.mrb[0].mxu0 %v468
    %v715 = vpop.f32.mrb[0].mxu0
    %v716 = vadd.f32 %v577, %v715
    %v717 = vpop.f32.mrb[0].mxu0
    %718 = vmatprep.mubr.f32.mxu0 0.0
    %719 = vmatmul.mubr.f32.gmra.mrb[0].mxu0 %v473
    %v720 = vpop.f32.mrb[0].mxu0
    %v721 = vadd.f32 %v577, %v720
    %v722 = vpop.f32.mrb[0].mxu0
    %723 = vmatprep.mubr.f32.mxu0 0.0
    %724 = vmatmul.mubr.f32.gmra.mrb[0].mxu0 %v478
    %v725 = vpop.f32.mrb[0].mxu0
    %v726 = vadd.f32 %v577, %v725
    %v727 = vpop.f32.mrb[0].mxu0
    %728 = vmatprep.mubr.f32.mxu0 0.0
    %729 = vmatmul.mubr.f32.gmra.mrb[0].mxu0 %v483
    %v730 = vpop.f32.mrb[0].mxu0
    %v731 = vadd.f32 %v577, %v730
    %v732 = vpop.f32.mrb[0].mxu0
    %733 = vmatprep.mubr.f32.mxu0 0.0
    %734 = vmatmul.mubr.f32.gmra.mrb[0].mxu0 %v488
    %v735 = vpop.f32.mrb[0].mxu0
    %v736 = vadd.f32 %v577, %v735
    %v737 = vpop.f32.mrb[0].mxu0
    %738 = vmatprep.mubr.f32.mxu0 0.0
    %739 = vmatmul.mubr.f32.gmra.mrb[0].mxu0 %v493
    %v740 = vpop.f32.mrb[0].mxu0
    %v741 = vadd.f32 %v577, %v740
    %v742 = vpop.f32.mrb[0].mxu0
    %743 = vmatprep.mubr.f32.mxu0 0.0
    %744 = vmatmul.mubr.f32.gmra.mrb[0].mxu0 %v498
    %v745 = vpop.f32.mrb[0].mxu0
    %v746 = vadd.f32 %v577, %v745
    %v747 = vpop.f32.mrb[0].mxu0
    %748 = vmatprep.mubr.f32.mxu0 0.0
    %749 = vmatmul.mubr.f32.gmra.mrb[0].mxu0 %v503
    %v750 = vpop.f32.mrb[0].mxu0
    %v751 = vadd.f32 %v577, %v750
    %v752 = vpop.f32.mrb[0].mxu0
    %753 = vmatprep.mubr.f32.mxu0 0.0
    %754 = vmatmul.mubr.f32.gmra.mrb[0].mxu0 %v508
    %v755 = vpop.f32.mrb[0].mxu0
    %v756 = vadd.f32 %v577, %v755
    %v757 = vpop.f32.mrb[0].mxu0
    %758 = vmatprep.mubr.f32.mxu0 0.0
    %759 = vmatmul.mubr.f32.gmra.mrb[0].mxu0 %v513
    %v760 = vpop.f32.mrb[0].mxu0
    %v761 = vadd.f32 %v577, %v760
    %v762 = vpop.f32.mrb[0].mxu0
    %763 = vmatprep.mubr.f32.mxu0 0.0
    %764 = vmatmul.mubr.f32.gmra.mrb[0].mxu0 %v518
    %v765 = vpop.f32.mrb[0].mxu0
    %v766 = vadd.f32 %v577, %v765
    %v767 = vpop.f32.mrb[0].mxu0
    %768 = vmatprep.mubr.f32.mxu0 0.0
    %769 = vmatmul.mubr.f32.gmra.mrb[0].mxu0 %v523
    %v770 = vpop.f32.mrb[0].mxu0
    %v771 = vadd.f32 %v577, %v770
    %v772 = vpop.f32.mrb[0].mxu0
    %773 = vmatprep.mubr.f32.mxu0 0.0
    %774 = vmatmul.mubr.f32.gmra.mrb[0].mxu0 %v528
    %v775 = vpop.f32.mrb[0].mxu0
    %v776 = vadd.f32 %v577, %v775
    %v777 = vpop.f32.mrb[0].mxu0
    %778 = vmatprep.mubr.f32.mxu0 0.0
    %779 = vmatmul.mubr.f32.gmra.mrb[0].mxu0 %v533
    %v780 = vpop.f32.mrb[0].mxu0
    %v781 = vadd.f32 %v577, %v780
    %v782 = vpop.f32.mrb[0].mxu0
    %783 = vmatprep.mubr.f32.mxu0 0.0
    %784 = vmatmul.mubr.f32.gmra.mrb[0].mxu0 %v538
    %v785 = vpop.f32.mrb[0].mxu0
    %v786 = vadd.f32 %v577, %v785
    %v787 = vpop.f32.mrb[0].mxu0
    %788 = vmatprep.mubr.f32.mxu0 0.0
    %789 = vmatmul.mubr.f32.gmra.mrb[0].mxu0 %v543
    %v790 = vpop.f32.mrb[0].mxu0
    %v791 = vadd.f32 %v577, %v790
    %v792 = vpop.f32.mrb[0].mxu0
    %793 = vmatprep.mubr.f32.mxu0 0.0
    %794 = vmatmul.mubr.f32.gmra.mrb[0].mxu0 %v548
    %v795 = vpop.f32.mrb[0].mxu0
    %v796 = vadd.f32 %v577, %v795
    %v797 = vpop.f32.mrb[0].mxu0
    %798 = vmatprep.mubr.f32.mxu0 0.0
    %799 = vmatmul.mubr.f32.gmra.mrb[0].mxu0 %v553
    %v800 = vpop.f32.mrb[0].mxu0
    %v801 = vadd.f32 %v577, %v800
    %v802 = vpop.f32.mrb[0].mxu0
    %803 = vdwg.mxu0
    %v804 = vld [vmem:[#allocation11] sm:$0xff]
    %v805 = vld [vmem:[#allocation11 + $0x8] sm:$0xff]
    %v806 = vld [vmem:[#allocation11 + $0x10] sm:$0xff]
    %v807 = vld [vmem:[#allocation11 + $0x18] sm:$0xff]
    %v808 = vld [vmem:[#allocation11 + $0x20] sm:$0xff]
    %v809 = vld [vmem:[#allocation11 + $0x28] sm:$0xff]
    %v810 = vld [vmem:[#allocation11 + $0x30] sm:$0xff]
    %v811 = vld [vmem:[#allocation11 + $0x38] sm:$0xff]
    %v812 = vld [vmem:[#allocation11 + $0x40] sm:$0xff]
    %v813 = vld [vmem:[#allocation11 + $0x48] sm:$0xff]
    %v814 = vld [vmem:[#allocation11 + $0x50] sm:$0xff]
    %v815 = vld [vmem:[#allocation11 + $0x58] sm:$0xff]
    %v816 = vld [vmem:[#allocation11 + $0x60] sm:$0xff]
    %v817 = vld [vmem:[#allocation11 + $0x68] sm:$0xff]
    %v818 = vld [vmem:[#allocation11 + $0x70] sm:$0xff]
    %v819 = vld [vmem:[#allocation11 + $0x78] sm:$0xff]
    %v820 = vld [vmem:[#allocation11 + $0x80] sm:$0xff]
    %v821 = vld [vmem:[#allocation11 + $0x88] sm:$0xff]
    %v822 = vld [vmem:[#allocation11 + $0x90] sm:$0xff]
    %v823 = vld [vmem:[#allocation11 + $0x98] sm:$0xff]
    %v824 = vld [vmem:[#allocation11 + $0xa0] sm:$0xff]
    %v825 = vld [vmem:[#allocation11 + $0xa8] sm:$0xff]
    %v826 = vld [vmem:[#allocation11 + $0xb0] sm:$0xff]
    %v827 = vld [vmem:[#allocation11 + $0xb8] sm:$0xff]
    %v828 = vld [vmem:[#allocation11 + $0xc0] sm:$0xff]
    %v829 = vld [vmem:[#allocation11 + $0xc8] sm:$0xff]
    %v830 = vld [vmem:[#allocation11 + $0xd0] sm:$0xff]
    %v831 = vld [vmem:[#allocation11 + $0xd8] sm:$0xff]
    %v832 = vld [vmem:[#allocation11 + $0xe0] sm:$0xff]
    %v833 = vld [vmem:[#allocation11 + $0xe8] sm:$0xff]
    %v834 = vld [vmem:[#allocation11 + $0xf0] sm:$0xff]
    %v835 = vld [vmem:[#allocation11 + $0xf8] sm:$0xff]
    %v836 = vld [vmem:[%s8] sm:$0x3]
    %v838 = vlaneseq
    %v839 = vshrl.u32 %v838, 7
    %v840 = vsub.s32 0, %v839
    %v841 = vrot.slane %v836, %v840
    %v842 = vlaneseq
    %v843 = vshrl.u32 %v842, 7
    %v844 = vsub.s32 1, %v843
    %v845 = vrot.slane %v836, %v844
    %848 = vmatprep.subr.mxu0 %v805
    %849 = vmatpush1.msra.mxu0 %v804
    %850 = vmatprep.subr.mxu0 %v807
    %851 = vmatpush1.msra.mxu0 %v806
    %852 = vmatprep.subr.mxu0 %v809
    %853 = vmatpush1.msra.mxu0 %v808
    %854 = vmatprep.subr.mxu0 %v811
    %855 = vmatpush1.msra.mxu0 %v810
    %856 = vmatprep.subr.mxu0 %v813
    %857 = vmatpush1.msra.mxu0 %v812
    %858 = vmatprep.subr.mxu0 %v815
    %859 = vmatpush1.msra.mxu0 %v814
    %860 = vmatprep.subr.mxu0 %v817
    %861 = vmatpush1.msra.mxu0 %v816
    %862 = vmatprep.subr.mxu0 %v819
    %863 = vmatpush1.msra.mxu0 %v818
    %864 = vmatprep.subr.mxu0 %v821
    %865 = vmatpush1.msra.mxu0 %v820
    %866 = vmatprep.subr.mxu0 %v823
    %867 = vmatpush1.msra.mxu0 %v822
    %868 = vmatprep.subr.mxu0 %v825
    %869 = vmatpush1.msra.mxu0 %v824
    %870 = vmatprep.subr.mxu0 %v827
    %871 = vmatpush1.msra.mxu0 %v826
    %872 = vmatprep.subr.mxu0 %v829
    %873 = vmatpush1.msra.mxu0 %v828
    %874 = vmatprep.subr.mxu0 %v831
    %875 = vmatpush1.msra.mxu0 %v830
    %876 = vmatprep.subr.mxu0 %v833
    %877 = vmatpush1.msra.mxu0 %v832
    %878 = vmatprep.subr.mxu0 %v835
    %879 = vmatpush1.msra.mxu0 %v834
    %880 = vmatprep.subr.mxu0 0.0
    %881 = vmatpush1.msra.mxu0 0.0
    %882 = vmatprep.subr.mxu0 0.0
    %883 = vmatpush1.msra.mxu0 0.0
    %884 = vmatprep.subr.mxu0 0.0
    %885 = vmatpush1.msra.mxu0 0.0
    %886 = vmatprep.subr.mxu0 0.0
    %887 = vmatpush1.msra.mxu0 0.0
    %888 = vmatprep.subr.mxu0 0.0
    %889 = vmatpush1.msra.mxu0 0.0
    %890 = vmatprep.subr.mxu0 0.0
    %891 = vmatpush1.msra.mxu0 0.0
    %892 = vmatprep.subr.mxu0 0.0
    %893 = vmatpush1.msra.mxu0 0.0
    %894 = vmatprep.subr.mxu0 0.0
    %895 = vmatpush1.msra.mxu0 0.0
    %896 = vmatprep.subr.mxu0 0.0
    %897 = vmatpush1.msra.mxu0 0.0
    %898 = vmatprep.subr.mxu0 0.0
    %899 = vmatpush1.msra.mxu0 0.0
    %900 = vmatprep.subr.mxu0 0.0
    %901 = vmatpush1.msra.mxu0 0.0
    %902 = vmatprep.subr.mxu0 0.0
    %903 = vmatpush1.msra.mxu0 0.0
    %904 = vmatprep.subr.mxu0 0.0
    %905 = vmatpush1.msra.mxu0 0.0
    %906 = vmatprep.subr.mxu0 0.0
    %907 = vmatpush1.msra.mxu0 0.0
    %908 = vmatprep.subr.mxu0 0.0
    %909 = vmatpush1.msra.mxu0 0.0
    %910 = vmatprep.subr.mxu0 0.0
    %911 = vmatpush1.msra.mxu0 0.0
    %912 = vmatprep.mubr.f32.mxu0 0.0
    %913 = vmatmul.mubr.f32.gmra.mrb[0].mxu0 %v398
    %v914 = vpop.f32.mrb[0].mxu0
    %v915 = vadd.f32 %v841, %v914
    %v916 = vpop.f32.mrb[0].mxu0
    %v917 = vadd.f32 %v845, %v916
    %918 = vmatprep.mubr.f32.mxu0 0.0
    %919 = vmatmul.mubr.f32.gmra.mrb[0].mxu0 %v403
    %v920 = vpop.f32.mrb[0].mxu0
    %v921 = vadd.f32 %v841, %v920
    %v922 = vpop.f32.mrb[0].mxu0
    %v923 = vadd.f32 %v845, %v922
    %924 = vmatprep.mubr.f32.mxu0 0.0
    %925 = vmatmul.mubr.f32.gmra.mrb[0].mxu0 %v408
    %v926 = vpop.f32.mrb[0].mxu0
    %v927 = vadd.f32 %v841, %v926
    %v928 = vpop.f32.mrb[0].mxu0
    %v929 = vadd.f32 %v845, %v928
    %930 = vmatprep.mubr.f32.mxu0 0.0
    %931 = vmatmul.mubr.f32.gmra.mrb[0].mxu0 %v413
    %v932 = vpop.f32.mrb[0].mxu0
    %v933 = vadd.f32 %v841, %v932
    %v934 = vpop.f32.mrb[0].mxu0
    %v935 = vadd.f32 %v845, %v934
    %936 = vmatprep.mubr.f32.mxu0 0.0
    %937 = vmatmul.mubr.f32.gmra.mrb[0].mxu0 %v418
    %v938 = vpop.f32.mrb[0].mxu0
    %v939 = vadd.f32 %v841, %v938
    %v940 = vpop.f32.mrb[0].mxu0
    %v941 = vadd.f32 %v845, %v940
    %942 = vmatprep.mubr.f32.mxu0 0.0
    %943 = vmatmul.mubr.f32.gmra.mrb[0].mxu0 %v423
    %v944 = vpop.f32.mrb[0].mxu0
    %v945 = vadd.f32 %v841, %v944
    %v946 = vpop.f32.mrb[0].mxu0
    %v947 = vadd.f32 %v845, %v946
    %948 = vmatprep.mubr.f32.mxu0 0.0
    %949 = vmatmul.mubr.f32.gmra.mrb[0].mxu0 %v428
    %v950 = vpop.f32.mrb[0].mxu0
    %v951 = vadd.f32 %v841, %v950
    %v952 = vpop.f32.mrb[0].mxu0
    %v953 = vadd.f32 %v845, %v952
    %954 = vmatprep.mubr.f32.mxu0 0.0
    %955 = vmatmul.mubr.f32.gmra.mrb[0].mxu0 %v433
    %v956 = vpop.f32.mrb[0].mxu0
    %v957 = vadd.f32 %v841, %v956
    %v958 = vpop.f32.mrb[0].mxu0
    %v959 = vadd.f32 %v845, %v958
    %960 = vmatprep.mubr.f32.mxu0 0.0
    %961 = vmatmul.mubr.f32.gmra.mrb[0].mxu0 %v438
    %v962 = vpop.f32.mrb[0].mxu0
    %v963 = vadd.f32 %v841, %v962
    %v964 = vpop.f32.mrb[0].mxu0
    %v965 = vadd.f32 %v845, %v964
    %966 = vmatprep.mubr.f32.mxu0 0.0
    %967 = vmatmul.mubr.f32.gmra.mrb[0].mxu0 %v443
    %v968 = vpop.f32.mrb[0].mxu0
    %v969 = vadd.f32 %v841, %v968
    %v970 = vpop.f32.mrb[0].mxu0
    %v971 = vadd.f32 %v845, %v970
    %972 = vmatprep.mubr.f32.mxu0 0.0
    %973 = vmatmul.mubr.f32.gmra.mrb[0].mxu0 %v448
    %v974 = vpop.f32.mrb[0].mxu0
    %v975 = vadd.f32 %v841, %v974
    %v976 = vpop.f32.mrb[0].mxu0
    %v977 = vadd.f32 %v845, %v976
    %978 = vmatprep.mubr.f32.mxu0 0.0
    %979 = vmatmul.mubr.f32.gmra.mrb[0].mxu0 %v453
    %v980 = vpop.f32.mrb[0].mxu0
    %v981 = vadd.f32 %v841, %v980
    %v982 = vpop.f32.mrb[0].mxu0
    %v983 = vadd.f32 %v845, %v982
    %984 = vmatprep.mubr.f32.mxu0 0.0
    %985 = vmatmul.mubr.f32.gmra.mrb[0].mxu0 %v458
    %v986 = vpop.f32.mrb[0].mxu0
    %v987 = vadd.f32 %v841, %v986
    %v988 = vpop.f32.mrb[0].mxu0
    %v989 = vadd.f32 %v845, %v988
    %990 = vmatprep.mubr.f32.mxu0 0.0
    %991 = vmatmul.mubr.f32.gmra.mrb[0].mxu0 %v463
    %v992 = vpop.f32.mrb[0].mxu0
    %v993 = vadd.f32 %v841, %v992
    %v994 = vpop.f32.mrb[0].mxu0
    %v995 = vadd.f32 %v845, %v994
    %996 = vmatprep.mubr.f32.mxu0 0.0
    %997 = vmatmul.mubr.f32.gmra.mrb[0].mxu0 %v468
    %v998 = vpop.f32.mrb[0].mxu0
    %v999 = vadd.f32 %v841, %v998
    %v1000 = vpop.f32.mrb[0].mxu0
    %v1001 = vadd.f32 %v845, %v1000
    %1002 = vmatprep.mubr.f32.mxu0 0.0
    %1003 = vmatmul.mubr.f32.gmra.mrb[0].mxu0 %v473
    %v1004 = vpop.f32.mrb[0].mxu0
    %v1005 = vadd.f32 %v841, %v1004
    %v1006 = vpop.f32.mrb[0].mxu0
    %v1007 = vadd.f32 %v845, %v1006
    %1008 = vmatprep.mubr.f32.mxu0 0.0
    %1009 = vmatmul.mubr.f32.gmra.mrb[0].mxu0 %v478
    %v1010 = vpop.f32.mrb[0].mxu0
    %v1011 = vadd.f32 %v841, %v1010
    %v1012 = vpop.f32.mrb[0].mxu0
    %v1013 = vadd.f32 %v845, %v1012
    %1014 = vmatprep.mubr.f32.mxu0 0.0
    %1015 = vmatmul.mubr.f32.gmra.mrb[0].mxu0 %v483
    %v1016 = vpop.f32.mrb[0].mxu0
    %v1017 = vadd.f32 %v841, %v1016
    %v1018 = vpop.f32.mrb[0].mxu0
    %v1019 = vadd.f32 %v845, %v1018
    %1020 = vmatprep.mubr.f32.mxu0 0.0
    %1021 = vmatmul.mubr.f32.gmra.mrb[0].mxu0 %v488
    %v1022 = vpop.f32.mrb[0].mxu0
    %v1023 = vadd.f32 %v841, %v1022
    %v1024 = vpop.f32.mrb[0].mxu0
    %v1025 = vadd.f32 %v845, %v1024
    %1026 = vmatprep.mubr.f32.mxu0 0.0
    %1027 = vmatmul.mubr.f32.gmra.mrb[0].mxu0 %v493
    %v1028 = vpop.f32.mrb[0].mxu0
    %v1029 = vadd.f32 %v841, %v1028
    %v1030 = vpop.f32.mrb[0].mxu0
    %v1031 = vadd.f32 %v845, %v1030
    %1032 = vmatprep.mubr.f32.mxu0 0.0
    %1033 = vmatmul.mubr.f32.gmra.mrb[0].mxu0 %v498
    %v1034 = vpop.f32.mrb[0].mxu0
    %v1035 = vadd.f32 %v841, %v1034
    %v1036 = vpop.f32.mrb[0].mxu0
    %v1037 = vadd.f32 %v845, %v1036
    %1038 = vmatprep.mubr.f32.mxu0 0.0
    %1039 = vmatmul.mubr.f32.gmra.mrb[0].mxu0 %v503
    %v1040 = vpop.f32.mrb[0].mxu0
    %v1041 = vadd.f32 %v841, %v1040
    %v1042 = vpop.f32.mrb[0].mxu0
    %v1043 = vadd.f32 %v845, %v1042
    %1044 = vmatprep.mubr.f32.mxu0 0.0
    %1045 = vmatmul.mubr.f32.gmra.mrb[0].mxu0 %v508
    %v1046 = vpop.f32.mrb[0].mxu0
    %v1047 = vadd.f32 %v841, %v1046
    %v1048 = vpop.f32.mrb[0].mxu0
    %v1049 = vadd.f32 %v845, %v1048
    %1050 = vmatprep.mubr.f32.mxu0 0.0
    %1051 = vmatmul.mubr.f32.gmra.mrb[0].mxu0 %v513
    %v1052 = vpop.f32.mrb[0].mxu0
    %v1053 = vadd.f32 %v841, %v1052
    %v1054 = vpop.f32.mrb[0].mxu0
    %v1055 = vadd.f32 %v845, %v1054
    %1056 = vmatprep.mubr.f32.mxu0 0.0
    %1057 = vmatmul.mubr.f32.gmra.mrb[0].mxu0 %v518
    %v1058 = vpop.f32.mrb[0].mxu0
    %v1059 = vadd.f32 %v841, %v1058
    %v1060 = vpop.f32.mrb[0].mxu0
    %v1061 = vadd.f32 %v845, %v1060
    %1062 = vmatprep.mubr.f32.mxu0 0.0
    %1063 = vmatmul.mubr.f32.gmra.mrb[0].mxu0 %v523
    %v1064 = vpop.f32.mrb[0].mxu0
    %v1065 = vadd.f32 %v841, %v1064
    %v1066 = vpop.f32.mrb[0].mxu0
    %v1067 = vadd.f32 %v845, %v1066
    %1068 = vmatprep.mubr.f32.mxu0 0.0
    %1069 = vmatmul.mubr.f32.gmra.mrb[0].mxu0 %v528
    %v1070 = vpop.f32.mrb[0].mxu0
    %v1071 = vadd.f32 %v841, %v1070
    %v1072 = vpop.f32.mrb[0].mxu0
    %v1073 = vadd.f32 %v845, %v1072
    %1074 = vmatprep.mubr.f32.mxu0 0.0
    %1075 = vmatmul.mubr.f32.gmra.mrb[0].mxu0 %v533
    %v1076 = vpop.f32.mrb[0].mxu0
    %v1077 = vadd.f32 %v841, %v1076
    %v1078 = vpop.f32.mrb[0].mxu0
    %v1079 = vadd.f32 %v845, %v1078
    %1080 = vmatprep.mubr.f32.mxu0 0.0
    %1081 = vmatmul.mubr.f32.gmra.mrb[0].mxu0 %v538
    %v1082 = vpop.f32.mrb[0].mxu0
    %v1083 = vadd.f32 %v841, %v1082
    %v1084 = vpop.f32.mrb[0].mxu0
    %v1085 = vadd.f32 %v845, %v1084
    %1086 = vmatprep.mubr.f32.mxu0 0.0
    %1087 = vmatmul.mubr.f32.gmra.mrb[0].mxu0 %v543
    %v1088 = vpop.f32.mrb[0].mxu0
    %v1089 = vadd.f32 %v841, %v1088
    %v1090 = vpop.f32.mrb[0].mxu0
    %v1091 = vadd.f32 %v845, %v1090
    %1092 = vmatprep.mubr.f32.mxu0 0.0
    %1093 = vmatmul.mubr.f32.gmra.mrb[0].mxu0 %v548
    %v1094 = vpop.f32.mrb[0].mxu0
    %v1095 = vadd.f32 %v841, %v1094
    %v1096 = vpop.f32.mrb[0].mxu0
    %v1097 = vadd.f32 %v845, %v1096
    %1098 = vmatprep.mubr.f32.mxu0 0.0
    %1099 = vmatmul.mubr.f32.gmra.mrb[0].mxu0 %v553
    %v1100 = vpop.f32.mrb[0].mxu0
    %v1101 = vadd.f32 %v841, %v1100
    %v1102 = vpop.f32.mrb[0].mxu0
    %v1103 = vadd.f32 %v845, %v1102
    %1104 = vdwg.mxu0
    %1105 = vmatprep.subr.mxu0 0.0
    %1106 = vmatpush1.msra.mxu0 %v646
    %1107 = vmatprep.subr.mxu0 0.0
    %1108 = vmatpush1.msra.mxu0 %v651
    %1109 = vmatprep.subr.mxu0 0.0
    %1110 = vmatpush1.msra.mxu0 %v656
    %1111 = vmatprep.subr.mxu0 0.0
    %1112 = vmatpush1.msra.mxu0 %v661
    %1113 = vmatprep.subr.mxu0 0.0
    %1114 = vmatpush1.msra.mxu0 %v666
    %1115 = vmatprep.subr.mxu0 0.0
    %1116 = vmatpush1.msra.mxu0 %v671
    %1117 = vmatprep.subr.mxu0 0.0
    %1118 = vmatpush1.msra.mxu0 %v676
    %1119 = vmatprep.subr.mxu0 0.0
    %1120 = vmatpush1.msra.mxu0 %v681
    %1121 = vmatprep.subr.mxu0 0.0
    %1122 = vmatpush1.msra.mxu0 %v686
    %1123 = vmatprep.subr.mxu0 0.0
    %1124 = vmatpush1.msra.mxu0 %v691
    %1125 = vmatprep.subr.mxu0 0.0
    %1126 = vmatpush1.msra.mxu0 %v696
    %1127 = vmatprep.subr.mxu0 0.0
    %1128 = vmatpush1.msra.mxu0 %v701
    %1129 = vmatprep.subr.mxu0 0.0
    %1130 = vmatpush1.msra.mxu0 %v706
    %1131 = vmatprep.subr.mxu0 0.0
    %1132 = vmatpush1.msra.mxu0 %v711
    %1133 = vmatprep.subr.mxu0 0.0
    %1134 = vmatpush1.msra.mxu0 %v716
    %1135 = vmatprep.subr.mxu0 0.0
    %1136 = vmatpush1.msra.mxu0 %v721
    %1137 = vmatprep.subr.mxu0 0.0
    %1138 = vmatpush1.msra.mxu0 %v726
    %1139 = vmatprep.subr.mxu0 0.0
    %1140 = vmatpush1.msra.mxu0 %v731
    %1141 = vmatprep.subr.mxu0 0.0
    %1142 = vmatpush1.msra.mxu0 %v736
    %1143 = vmatprep.subr.mxu0 0.0
    %1144 = vmatpush1.msra.mxu0 %v741
    %1145 = vmatprep.subr.mxu0 0.0
    %1146 = vmatpush1.msra.mxu0 %v746
    %1147 = vmatprep.subr.mxu0 0.0
    %1148 = vmatpush1.msra.mxu0 %v751
    %1149 = vmatprep.subr.mxu0 0.0
    %1150 = vmatpush1.msra.mxu0 %v756
    %1151 = vmatprep.subr.mxu0 0.0
    %1152 = vmatpush1.msra.mxu0 %v761
    %1153 = vmatprep.subr.mxu0 0.0
    %1154 = vmatpush1.msra.mxu0 %v766
    %1155 = vmatprep.subr.mxu0 0.0
    %1156 = vmatpush1.msra.mxu0 %v771
    %1157 = vmatprep.subr.mxu0 0.0
    %1158 = vmatpush1.msra.mxu0 %v776
    %1159 = vmatprep.subr.mxu0 0.0
    %1160 = vmatpush1.msra.mxu0 %v781
    %1161 = vmatprep.subr.mxu0 0.0
    %1162 = vmatpush1.msra.mxu0 %v786
    %1163 = vmatprep.subr.mxu0 0.0
    %1164 = vmatpush1.msra.mxu0 %v791
    %1165 = vmatprep.subr.mxu0 0.0
    %1166 = vmatpush1.msra.mxu0 %v796
    %1167 = vmatprep.subr.mxu0 0.0
    %1168 = vmatpush1.msra.mxu0 %v801
    %1169 = vmatprep.mubr.f32.mxu0 %v117
    %1170 = vmatmul.mubr.f32.gmra.mrb[0].mxu0 %v116
    %v1171 = vpop.f32.mrb[0].mxu0
    %v1172 = vadd.f32 0.0, %v1171
    %v1173 = vpop.f32.mrb[0].mxu0
    %1174 = vmatprep.mubr.f32.mxu0 %v119
    %1175 = vmatmul.mubr.f32.gmra.mrb[0].mxu0 %v118
    %v1176 = vpop.f32.mrb[0].mxu0
    %v1177 = vadd.f32 0.0, %v1176
    %v1178 = vpop.f32.mrb[0].mxu0
    %1179 = vmatprep.mubr.f32.mxu0 %v121
    %1180 = vmatmul.mubr.f32.gmra.mrb[0].mxu0 %v120
    %v1181 = vpop.f32.mrb[0].mxu0
    %v1182 = vadd.f32 0.0, %v1181
    %v1183 = vpop.f32.mrb[0].mxu0
    %1184 = vmatprep.mubr.f32.mxu0 %v123
    %1185 = vmatmul.mubr.f32.gmra.mrb[0].mxu0 %v122
    %v1186 = vpop.f32.mrb[0].mxu0
    %v1187 = vadd.f32 0.0, %v1186
    %v1188 = vpop.f32.mrb[0].mxu0
    %1189 = vmatprep.mubr.f32.mxu0 %v125
    %1190 = vmatmul.mubr.f32.gmra.mrb[0].mxu0 %v124
    %v1191 = vpop.f32.mrb[0].mxu0
    %v1192 = vadd.f32 0.0, %v1191
    %v1193 = vpop.f32.mrb[0].mxu0
    %1194 = vmatprep.mubr.f32.mxu0 %v127
    %1195 = vmatmul.mubr.f32.gmra.mrb[0].mxu0 %v126
    %v1196 = vpop.f32.mrb[0].mxu0
    %v1197 = vadd.f32 0.0, %v1196
    %v1198 = vpop.f32.mrb[0].mxu0
    %1199 = vmatprep.mubr.f32.mxu0 %v129
    %1200 = vmatmul.mubr.f32.gmra.mrb[0].mxu0 %v128
    %v1201 = vpop.f32.mrb[0].mxu0
    %v1202 = vadd.f32 0.0, %v1201
    %v1203 = vpop.f32.mrb[0].mxu0
    %1204 = vmatprep.mubr.f32.mxu0 %v131
    %1205 = vmatmul.mubr.f32.gmra.mrb[0].mxu0 %v130
    %v1206 = vpop.f32.mrb[0].mxu0
    %v1207 = vadd.f32 0.0, %v1206
    %v1208 = vpop.f32.mrb[0].mxu0
    %1209 = vmatprep.mubr.f32.mxu0 %v133
    %1210 = vmatmul.mubr.f32.gmra.mrb[0].mxu0 %v132
    %v1211 = vpop.f32.mrb[0].mxu0
    %v1212 = vadd.f32 0.0, %v1211
    %v1213 = vpop.f32.mrb[0].mxu0
    %1214 = vmatprep.mubr.f32.mxu0 %v135
    %1215 = vmatmul.mubr.f32.gmra.mrb[0].mxu0 %v134
    %v1216 = vpop.f32.mrb[0].mxu0
    %v1217 = vadd.f32 0.0, %v1216
    %v1218 = vpop.f32.mrb[0].mxu0
    %1219 = vmatprep.mubr.f32.mxu0 %v137
    %1220 = vmatmul.mubr.f32.gmra.mrb[0].mxu0 %v136
    %v1221 = vpop.f32.mrb[0].mxu0
    %v1222 = vadd.f32 0.0, %v1221
    %v1223 = vpop.f32.mrb[0].mxu0
    %1224 = vmatprep.mubr.f32.mxu0 %v139
    %1225 = vmatmul.mubr.f32.gmra.mrb[0].mxu0 %v138
    %v1226 = vpop.f32.mrb[0].mxu0
    %v1227 = vadd.f32 0.0, %v1226
    %v1228 = vpop.f32.mrb[0].mxu0
    %1229 = vmatprep.mubr.f32.mxu0 %v141
    %1230 = vmatmul.mubr.f32.gmra.mrb[0].mxu0 %v140
    %v1231 = vpop.f32.mrb[0].mxu0
    %v1232 = vadd.f32 0.0, %v1231
    %v1233 = vpop.f32.mrb[0].mxu0
    %1234 = vmatprep.mubr.f32.mxu0 %v143
    %1235 = vmatmul.mubr.f32.gmra.mrb[0].mxu0 %v142
    %v1236 = vpop.f32.mrb[0].mxu0
    %v1237 = vadd.f32 0.0, %v1236
    %v1238 = vpop.f32.mrb[0].mxu0
    %1239 = vmatprep.mubr.f32.mxu0 %v145
    %1240 = vmatmul.mubr.f32.gmra.mrb[0].mxu0 %v144
    %v1241 = vpop.f32.mrb[0].mxu0
    %v1242 = vadd.f32 0.0, %v1241
    %v1243 = vpop.f32.mrb[0].mxu0
    %1244 = vmatprep.mubr.f32.mxu0 %v147
    %1245 = vmatmul.mubr.f32.gmra.mrb[0].mxu0 %v146
    %v1246 = vpop.f32.mrb[0].mxu0
    %v1247 = vadd.f32 0.0, %v1246
    %v1248 = vpop.f32.mrb[0].mxu0
    %1249 = vmatprep.mubr.f32.mxu0 %v149
    %1250 = vmatmul.mubr.f32.gmra.mrb[0].mxu0 %v148
    %v1251 = vpop.f32.mrb[0].mxu0
    %v1252 = vadd.f32 0.0, %v1251
    %v1253 = vpop.f32.mrb[0].mxu0
    %1254 = vmatprep.mubr.f32.mxu0 %v151
    %1255 = vmatmul.mubr.f32.gmra.mrb[0].mxu0 %v150
    %v1256 = vpop.f32.mrb[0].mxu0
    %v1257 = vadd.f32 0.0, %v1256
    %v1258 = vpop.f32.mrb[0].mxu0
    %1259 = vmatprep.mubr.f32.mxu0 %v153
    %1260 = vmatmul.mubr.f32.gmra.mrb[0].mxu0 %v152
    %v1261 = vpop.f32.mrb[0].mxu0
    %v1262 = vadd.f32 0.0, %v1261
    %v1263 = vpop.f32.mrb[0].mxu0
    %1264 = vmatprep.mubr.f32.mxu0 %v155
    %1265 = vmatmul.mubr.f32.gmra.mrb[0].mxu0 %v154
    %v1266 = vpop.f32.mrb[0].mxu0
    %v1267 = vadd.f32 0.0, %v1266
    %v1268 = vpop.f32.mrb[0].mxu0
    %1269 = vmatprep.mubr.f32.mxu0 %v157
    %1270 = vmatmul.mubr.f32.gmra.mrb[0].mxu0 %v156
    %v1271 = vpop.f32.mrb[0].mxu0
    %v1272 = vadd.f32 0.0, %v1271
    %v1273 = vpop.f32.mrb[0].mxu0
    %1274 = vmatprep.mubr.f32.mxu0 %v159
    %1275 = vmatmul.mubr.f32.gmra.mrb[0].mxu0 %v158
    %v1276 = vpop.f32.mrb[0].mxu0
    %v1277 = vadd.f32 0.0, %v1276
    %v1278 = vpop.f32.mrb[0].mxu0
    %1279 = vmatprep.mubr.f32.mxu0 %v161
    %1280 = vmatmul.mubr.f32.gmra.mrb[0].mxu0 %v160
    %v1281 = vpop.f32.mrb[0].mxu0
    %v1282 = vadd.f32 0.0, %v1281
    %v1283 = vpop.f32.mrb[0].mxu0
    %1284 = vmatprep.mubr.f32.mxu0 %v163
    %1285 = vmatmul.mubr.f32.gmra.mrb[0].mxu0 %v162
    %v1286 = vpop.f32.mrb[0].mxu0
    %v1287 = vadd.f32 0.0, %v1286
    %v1288 = vpop.f32.mrb[0].mxu0
    %1289 = vmatprep.mubr.f32.mxu0 %v165
    %1290 = vmatmul.mubr.f32.gmra.mrb[0].mxu0 %v164
    %v1291 = vpop.f32.mrb[0].mxu0
    %v1292 = vadd.f32 0.0, %v1291
    %v1293 = vpop.f32.mrb[0].mxu0
    %1294 = vmatprep.mubr.f32.mxu0 %v167
    %1295 = vmatmul.mubr.f32.gmra.mrb[0].mxu0 %v166
    %v1296 = vpop.f32.mrb[0].mxu0
    %v1297 = vadd.f32 0.0, %v1296
    %v1298 = vpop.f32.mrb[0].mxu0
    %1299 = vmatprep.mubr.f32.mxu0 %v169
    %1300 = vmatmul.mubr.f32.gmra.mrb[0].mxu0 %v168
    %v1301 = vpop.f32.mrb[0].mxu0
    %v1302 = vadd.f32 0.0, %v1301
    %v1303 = vpop.f32.mrb[0].mxu0
    %1304 = vmatprep.mubr.f32.mxu0 %v171
    %1305 = vmatmul.mubr.f32.gmra.mrb[0].mxu0 %v170
    %v1306 = vpop.f32.mrb[0].mxu0
    %v1307 = vadd.f32 0.0, %v1306
    %v1308 = vpop.f32.mrb[0].mxu0
    %1309 = vmatprep.mubr.f32.mxu0 %v173
    %1310 = vmatmul.mubr.f32.gmra.mrb[0].mxu0 %v172
    %v1311 = vpop.f32.mrb[0].mxu0
    %v1312 = vadd.f32 0.0, %v1311
    %v1313 = vpop.f32.mrb[0].mxu0
    %1314 = vmatprep.mubr.f32.mxu0 %v175
    %1315 = vmatmul.mubr.f32.gmra.mrb[0].mxu0 %v174
    %v1316 = vpop.f32.mrb[0].mxu0
    %v1317 = vadd.f32 0.0, %v1316
    %v1318 = vpop.f32.mrb[0].mxu0
    %1319 = vmatprep.mubr.f32.mxu0 %v177
    %1320 = vmatmul.mubr.f32.gmra.mrb[0].mxu0 %v176
    %v1321 = vpop.f32.mrb[0].mxu0
    %v1322 = vadd.f32 0.0, %v1321
    %v1323 = vpop.f32.mrb[0].mxu0
    %1324 = vmatprep.mubr.f32.mxu0 %v179
    %1325 = vmatmul.mubr.f32.gmra.mrb[0].mxu0 %v178
    %v1326 = vpop.f32.mrb[0].mxu0
    %v1327 = vadd.f32 0.0, %v1326
    %v1328 = vpop.f32.mrb[0].mxu0
    %1329 = vdwg.mxu0
    %v1330 = vmul.f32 %v182, %v915
    %v1331 = vmul.f32 %v185, %v921
    %v1332 = vmul.f32 %v188, %v927
    %v1333 = vmul.f32 %v191, %v933
    %v1334 = vmul.f32 %v194, %v939
    %v1335 = vmul.f32 %v197, %v945
    %v1336 = vmul.f32 %v200, %v951
    %v1337 = vmul.f32 %v203, %v957
    %v1338 = vmul.f32 %v206, %v963
    %v1339 = vmul.f32 %v209, %v969
    %v1340 = vmul.f32 %v212, %v975
    %v1341 = vmul.f32 %v215, %v981
    %v1342 = vmul.f32 %v218, %v987
    %v1343 = vmul.f32 %v221, %v993
    %v1344 = vmul.f32 %v224, %v999
    %v1345 = vmul.f32 %v227, %v1005
    %v1346 = vmul.f32 %v230, %v1011
    %v1347 = vmul.f32 %v233, %v1017
    %v1348 = vmul.f32 %v236, %v1023
    %v1349 = vmul.f32 %v239, %v1029
    %v1350 = vmul.f32 %v242, %v1035
    %v1351 = vmul.f32 %v245, %v1041
    %v1352 = vmul.f32 %v248, %v1047
    %v1353 = vmul.f32 %v251, %v1053
    %v1354 = vmul.f32 %v254, %v1059
    %v1355 = vmul.f32 %v257, %v1065
    %v1356 = vmul.f32 %v260, %v1071
    %v1357 = vmul.f32 %v263, %v1077
    %v1358 = vmul.f32 %v266, %v1083
    %v1359 = vmul.f32 %v269, %v1089
    %v1360 = vmul.f32 %v272, %v1095
    %v1361 = vmul.f32 %v275, %v1101
    %v1362 = vsub.f32 %v1172, %v1330
    %v1363 = vsub.f32 %v1177, %v1331
    %v1364 = vsub.f32 %v1182, %v1332
    %v1365 = vsub.f32 %v1187, %v1333
    %v1366 = vsub.f32 %v1192, %v1334
    %v1367 = vsub.f32 %v1197, %v1335
    %v1368 = vsub.f32 %v1202, %v1336
    %v1369 = vsub.f32 %v1207, %v1337
    %v1370 = vsub.f32 %v1212, %v1338
    %v1371 = vsub.f32 %v1217, %v1339
    %v1372 = vsub.f32 %v1222, %v1340
    %v1373 = vsub.f32 %v1227, %v1341
    %v1374 = vsub.f32 %v1232, %v1342
    %v1375 = vsub.f32 %v1237, %v1343
    %v1376 = vsub.f32 %v1242, %v1344
    %v1377 = vsub.f32 %v1247, %v1345
    %v1378 = vsub.f32 %v1252, %v1346
    %v1379 = vsub.f32 %v1257, %v1347
    %v1380 = vsub.f32 %v1262, %v1348
    %v1381 = vsub.f32 %v1267, %v1349
    %v1382 = vsub.f32 %v1272, %v1350
    %v1383 = vsub.f32 %v1277, %v1351
    %v1384 = vsub.f32 %v1282, %v1352
    %v1385 = vsub.f32 %v1287, %v1353
    %v1386 = vsub.f32 %v1292, %v1354
    %v1387 = vsub.f32 %v1297, %v1355
    %v1388 = vsub.f32 %v1302, %v1356
    %v1389 = vsub.f32 %v1307, %v1357
    %v1390 = vsub.f32 %v1312, %v1358
    %v1391 = vsub.f32 %v1317, %v1359
    %v1392 = vsub.f32 %v1322, %v1360
    %v1393 = vsub.f32 %v1327, %v1361
    %v1394 = vadd.f32 %v1362, %v917
    %v1395 = vadd.f32 %v1363, %v923
    %v1396 = vadd.f32 %v1364, %v929
    %v1397 = vadd.f32 %v1365, %v935
    %v1398 = vadd.f32 %v1366, %v941
    %v1399 = vadd.f32 %v1367, %v947
    %v1400 = vadd.f32 %v1368, %v953
    %v1401 = vadd.f32 %v1369, %v959
    %v1402 = vadd.f32 %v1370, %v965
    %v1403 = vadd.f32 %v1371, %v971
    %v1404 = vadd.f32 %v1372, %v977
    %v1405 = vadd.f32 %v1373, %v983
    %v1406 = vadd.f32 %v1374, %v989
    %v1407 = vadd.f32 %v1375, %v995
    %v1408 = vadd.f32 %v1376, %v1001
    %v1409 = vadd.f32 %v1377, %v1007
    %v1410 = vadd.f32 %v1378, %v1013
    %v1411 = vadd.f32 %v1379, %v1019
    %v1412 = vadd.f32 %v1380, %v1025
    %v1413 = vadd.f32 %v1381, %v1031
    %v1414 = vadd.f32 %v1382, %v1037
    %v1415 = vadd.f32 %v1383, %v1043
    %v1416 = vadd.f32 %v1384, %v1049
    %v1417 = vadd.f32 %v1385, %v1055
    %v1418 = vadd.f32 %v1386, %v1061
    %v1419 = vadd.f32 %v1387, %v1067
    %v1420 = vadd.f32 %v1388, %v1073
    %v1421 = vadd.f32 %v1389, %v1079
    %v1422 = vadd.f32 %v1390, %v1085
    %v1423 = vadd.f32 %v1391, %v1091
    %v1424 = vadd.f32 %v1392, %v1097
    %v1425 = vadd.f32 %v1393, %v1103
    %v1426 = vmax.f32 %v1394, 0.0
    %v1427 = vmax.f32 %v1395, 0.0
    %v1428 = vmax.f32 %v1396, 0.0
    %v1429 = vmax.f32 %v1397, 0.0
    %v1430 = vmax.f32 %v1398, 0.0
    %v1431 = vmax.f32 %v1399, 0.0
    %v1432 = vmax.f32 %v1400, 0.0
    %v1433 = vmax.f32 %v1401, 0.0
    %v1434 = vmax.f32 %v1402, 0.0
    %v1435 = vmax.f32 %v1403, 0.0
    %v1436 = vmax.f32 %v1404, 0.0
    %v1437 = vmax.f32 %v1405, 0.0
    %v1438 = vmax.f32 %v1406, 0.0
    %v1439 = vmax.f32 %v1407, 0.0
    %v1440 = vmax.f32 %v1408, 0.0
    %v1441 = vmax.f32 %v1409, 0.0
    %v1442 = vmax.f32 %v1410, 0.0
    %v1443 = vmax.f32 %v1411, 0.0
    %v1444 = vmax.f32 %v1412, 0.0
    %v1445 = vmax.f32 %v1413, 0.0
    %v1446 = vmax.f32 %v1414, 0.0
    %v1447 = vmax.f32 %v1415, 0.0
    %v1448 = vmax.f32 %v1416, 0.0
    %v1449 = vmax.f32 %v1417, 0.0
    %v1450 = vmax.f32 %v1418, 0.0
    %v1451 = vmax.f32 %v1419, 0.0
    %v1452 = vmax.f32 %v1420, 0.0
    %v1453 = vmax.f32 %v1421, 0.0
    %v1454 = vmax.f32 %v1422, 0.0
    %v1455 = vmax.f32 %v1423, 0.0
    %v1456 = vmax.f32 %v1424, 0.0
    %v1457 = vmax.f32 %v1425, 0.0
    %s1458 = scalar_lea.vmem [#allocation10], 128
    %v1459 = vld [vmem:[%s1458] sm:$0xff]
    %v1460 = vld [vmem:[%s1458 + $0x8] sm:$0xff]
    %v1461 = vld [vmem:[%s1458 + $0x10] sm:$0xff]
    %v1462 = vld [vmem:[%s1458 + $0x18] sm:$0xff]
    %v1463 = vld [vmem:[%s1458 + $0x20] sm:$0xff]
    %v1464 = vld [vmem:[%s1458 + $0x28] sm:$0xff]
    %v1465 = vld [vmem:[%s1458 + $0x30] sm:$0xff]
    %v1466 = vld [vmem:[%s1458 + $0x38] sm:$0xff]
    %v1467 = vld [vmem:[%s1458 + $0x40] sm:$0xff]
    %v1468 = vld [vmem:[%s1458 + $0x48] sm:$0xff]
    %v1469 = vld [vmem:[%s1458 + $0x50] sm:$0xff]
    %v1470 = vld [vmem:[%s1458 + $0x58] sm:$0xff]
    %v1471 = vld [vmem:[%s1458 + $0x60] sm:$0xff]
    %v1472 = vld [vmem:[%s1458 + $0x68] sm:$0xff]
    %v1473 = vld [vmem:[%s1458 + $0x70] sm:$0xff]
    %v1474 = vld [vmem:[%s1458 + $0x78] sm:$0xff]
    %s1475 = scalar_lea.vmem %s6, 1
    %v1476 = vld [vmem:[%s1475] sm:$0x1]
    %v1478 = vlaneseq
    %v1479 = vshrl.u32 %v1478, 7
    %v1480 = vsub.s32 0, %v1479
    %v1481 = vrot.slane %v1476, %v1480
    %1483 = vmatprep.subr.mxu0 0.0
    %1484 = vmatpush1.msra.mxu0 %v1459
    %1485 = vmatprep.subr.mxu0 0.0
    %1486 = vmatpush1.msra.mxu0 %v1460
    %1487 = vmatprep.subr.mxu0 0.0
    %1488 = vmatpush1.msra.mxu0 %v1461
    %1489 = vmatprep.subr.mxu0 0.0
    %1490 = vmatpush1.msra.mxu0 %v1462
    %1491 = vmatprep.subr.mxu0 0.0
    %1492 = vmatpush1.msra.mxu0 %v1463
    %1493 = vmatprep.subr.mxu0 0.0
    %1494 = vmatpush1.msra.mxu0 %v1464
    %1495 = vmatprep.subr.mxu0 0.0
    %1496 = vmatpush1.msra.mxu0 %v1465
    %1497 = vmatprep.subr.mxu0 0.0
    %1498 = vmatpush1.msra.mxu0 %v1466
    %1499 = vmatprep.subr.mxu0 0.0
    %1500 = vmatpush1.msra.mxu0 %v1467
    %1501 = vmatprep.subr.mxu0 0.0
    %1502 = vmatpush1.msra.mxu0 %v1468
    %1503 = vmatprep.subr.mxu0 0.0
    %1504 = vmatpush1.msra.mxu0 %v1469
    %1505 = vmatprep.subr.mxu0 0.0
    %1506 = vmatpush1.msra.mxu0 %v1470
    %1507 = vmatprep.subr.mxu0 0.0
    %1508 = vmatpush1.msra.mxu0 %v1471
    %1509 = vmatprep.subr.mxu0 0.0
    %1510 = vmatpush1.msra.mxu0 %v1472
    %1511 = vmatprep.subr.mxu0 0.0
    %1512 = vmatpush1.msra.mxu0 %v1473
    %1513 = vmatprep.subr.mxu0 0.0
    %1514 = vmatpush1.msra.mxu0 %v1474
    %1515 = vmatprep.subr.mxu0 0.0
    %1516 = vmatpush1.msra.mxu0 0.0
    %1517 = vmatprep.subr.mxu0 0.0
    %1518 = vmatpush1.msra.mxu0 0.0
    %1519 = vmatprep.subr.mxu0 0.0
    %1520 = vmatpush1.msra.mxu0 0.0
    %1521 = vmatprep.subr.mxu0 0.0
    %1522 = vmatpush1.msra.mxu0 0.0
    %1523 = vmatprep.subr.mxu0 0.0
    %1524 = vmatpush1.msra.mxu0 0.0
    %1525 = vmatprep.subr.mxu0 0.0
    %1526 = vmatpush1.msra.mxu0 0.0
    %1527 = vmatprep.subr.mxu0 0.0
    %1528 = vmatpush1.msra.mxu0 0.0
    %1529 = vmatprep.subr.mxu0 0.0
    %1530 = vmatpush1.msra.mxu0 0.0
    %1531 = vmatprep.subr.mxu0 0.0
    %1532 = vmatpush1.msra.mxu0 0.0
    %1533 = vmatprep.subr.mxu0 0.0
    %1534 = vmatpush1.msra.mxu0 0.0
    %1535 = vmatprep.subr.mxu0 0.0
    %1536 = vmatpush1.msra.mxu0 0.0
    %1537 = vmatprep.subr.mxu0 0.0
    %1538 = vmatpush1.msra.mxu0 0.0
    %1539 = vmatprep.subr.mxu0 0.0
    %1540 = vmatpush1.msra.mxu0 0.0
    %1541 = vmatprep.subr.mxu0 0.0
    %1542 = vmatpush1.msra.mxu0 0.0
    %1543 = vmatprep.subr.mxu0 0.0
    %1544 = vmatpush1.msra.mxu0 0.0
    %1545 = vmatprep.subr.mxu0 0.0
    %1546 = vmatpush1.msra.mxu0 0.0
    %1547 = vmatprep.mubr.f32.mxu0 0.0
    %1548 = vmatmul.mubr.f32.gmra.mrb[0].mxu0 %v1426
    %v1549 = vpop.f32.mrb[0].mxu0
    %v1550 = vadd.f32 %v1481, %v1549
    %v1551 = vpop.f32.mrb[0].mxu0
    %1552 = vmatprep.mubr.f32.mxu0 0.0
    %1553 = vmatmul.mubr.f32.gmra.mrb[0].mxu0 %v1427
    %v1554 = vpop.f32.mrb[0].mxu0
    %v1555 = vadd.f32 %v1481, %v1554
    %v1556 = vpop.f32.mrb[0].mxu0
    %1557 = vmatprep.mubr.f32.mxu0 0.0
    %1558 = vmatmul.mubr.f32.gmra.mrb[0].mxu0 %v1428
    %v1559 = vpop.f32.mrb[0].mxu0
    %v1560 = vadd.f32 %v1481, %v1559
    %v1561 = vpop.f32.mrb[0].mxu0
    %1562 = vmatprep.mubr.f32.mxu0 0.0
    %1563 = vmatmul.mubr.f32.gmra.mrb[0].mxu0 %v1429
    %v1564 = vpop.f32.mrb[0].mxu0
    %v1565 = vadd.f32 %v1481, %v1564
    %v1566 = vpop.f32.mrb[0].mxu0
    %1567 = vmatprep.mubr.f32.mxu0 0.0
    %1568 = vmatmul.mubr.f32.gmra.mrb[0].mxu0 %v1430
    %v1569 = vpop.f32.mrb[0].mxu0
    %v1570 = vadd.f32 %v1481, %v1569
    %v1571 = vpop.f32.mrb[0].mxu0
    %1572 = vmatprep.mubr.f32.mxu0 0.0
    %1573 = vmatmul.mubr.f32.gmra.mrb[0].mxu0 %v1431
    %v1574 = vpop.f32.mrb[0].mxu0
    %v1575 = vadd.f32 %v1481, %v1574
    %v1576 = vpop.f32.mrb[0].mxu0
    %1577 = vmatprep.mubr.f32.mxu0 0.0
    %1578 = vmatmul.mubr.f32.gmra.mrb[0].mxu0 %v1432
    %v1579 = vpop.f32.mrb[0].mxu0
    %v1580 = vadd.f32 %v1481, %v1579
    %v1581 = vpop.f32.mrb[0].mxu0
    %1582 = vmatprep.mubr.f32.mxu0 0.0
    %1583 = vmatmul.mubr.f32.gmra.mrb[0].mxu0 %v1433
    %v1584 = vpop.f32.mrb[0].mxu0
    %v1585 = vadd.f32 %v1481, %v1584
    %v1586 = vpop.f32.mrb[0].mxu0
    %1587 = vmatprep.mubr.f32.mxu0 0.0
    %1588 = vmatmul.mubr.f32.gmra.mrb[0].mxu0 %v1434
    %v1589 = vpop.f32.mrb[0].mxu0
    %v1590 = vadd.f32 %v1481, %v1589
    %v1591 = vpop.f32.mrb[0].mxu0
    %1592 = vmatprep.mubr.f32.mxu0 0.0
    %1593 = vmatmul.mubr.f32.gmra.mrb[0].mxu0 %v1435
    %v1594 = vpop.f32.mrb[0].mxu0
    %v1595 = vadd.f32 %v1481, %v1594
    %v1596 = vpop.f32.mrb[0].mxu0
    %1597 = vmatprep.mubr.f32.mxu0 0.0
    %1598 = vmatmul.mubr.f32.gmra.mrb[0].mxu0 %v1436
    %v1599 = vpop.f32.mrb[0].mxu0
    %v1600 = vadd.f32 %v1481, %v1599
    %v1601 = vpop.f32.mrb[0].mxu0
    %1602 = vmatprep.mubr.f32.mxu0 0.0
    %1603 = vmatmul.mubr.f32.gmra.mrb[0].mxu0 %v1437
    %v1604 = vpop.f32.mrb[0].mxu0
    %v1605 = vadd.f32 %v1481, %v1604
    %v1606 = vpop.f32.mrb[0].mxu0
    %1607 = vmatprep.mubr.f32.mxu0 0.0
    %1608 = vmatmul.mubr.f32.gmra.mrb[0].mxu0 %v1438
    %v1609 = vpop.f32.mrb[0].mxu0
    %v1610 = vadd.f32 %v1481, %v1609
    %v1611 = vpop.f32.mrb[0].mxu0
    %1612 = vmatprep.mubr.f32.mxu0 0.0
    %1613 = vmatmul.mubr.f32.gmra.mrb[0].mxu0 %v1439
    %v1614 = vpop.f32.mrb[0].mxu0
    %v1615 = vadd.f32 %v1481, %v1614
    %v1616 = vpop.f32.mrb[0].mxu0
    %1617 = vmatprep.mubr.f32.mxu0 0.0
    %1618 = vmatmul.mubr.f32.gmra.mrb[0].mxu0 %v1440
    %v1619 = vpop.f32.mrb[0].mxu0
    %v1620 = vadd.f32 %v1481, %v1619
    %v1621 = vpop.f32.mrb[0].mxu0
    %1622 = vmatprep.mubr.f32.mxu0 0.0
    %1623 = vmatmul.mubr.f32.gmra.mrb[0].mxu0 %v1441
    %v1624 = vpop.f32.mrb[0].mxu0
    %v1625 = vadd.f32 %v1481, %v1624
    %v1626 = vpop.f32.mrb[0].mxu0
    %1627 = vmatprep.mubr.f32.mxu0 0.0
    %1628 = vmatmul.mubr.f32.gmra.mrb[0].mxu0 %v1442
    %v1629 = vpop.f32.mrb[0].mxu0
    %v1630 = vadd.f32 %v1481, %v1629
    %v1631 = vpop.f32.mrb[0].mxu0
    %1632 = vmatprep.mubr.f32.mxu0 0.0
    %1633 = vmatmul.mubr.f32.gmra.mrb[0].mxu0 %v1443
    %v1634 = vpop.f32.mrb[0].mxu0
    %v1635 = vadd.f32 %v1481, %v1634
    %v1636 = vpop.f32.mrb[0].mxu0
    %1637 = vmatprep.mubr.f32.mxu0 0.0
    %1638 = vmatmul.mubr.f32.gmra.mrb[0].mxu0 %v1444
    %v1639 = vpop.f32.mrb[0].mxu0
    %v1640 = vadd.f32 %v1481, %v1639
    %v1641 = vpop.f32.mrb[0].mxu0
    %1642 = vmatprep.mubr.f32.mxu0 0.0
    %1643 = vmatmul.mubr.f32.gmra.mrb[0].mxu0 %v1445
    %v1644 = vpop.f32.mrb[0].mxu0
    %v1645 = vadd.f32 %v1481, %v1644
    %v1646 = vpop.f32.mrb[0].mxu0
    %1647 = vmatprep.mubr.f32.mxu0 0.0
    %1648 = vmatmul.mubr.f32.gmra.mrb[0].mxu0 %v1446
    %v1649 = vpop.f32.mrb[0].mxu0
    %v1650 = vadd.f32 %v1481, %v1649
    %v1651 = vpop.f32.mrb[0].mxu0
    %1652 = vmatprep.mubr.f32.mxu0 0.0
    %1653 = vmatmul.mubr.f32.gmra.mrb[0].mxu0 %v1447
    %v1654 = vpop.f32.mrb[0].mxu0
    %v1655 = vadd.f32 %v1481, %v1654
    %v1656 = vpop.f32.mrb[0].mxu0
    %1657 = vmatprep.mubr.f32.mxu0 0.0
    %1658 = vmatmul.mubr.f32.gmra.mrb[0].mxu0 %v1448
    %v1659 = vpop.f32.mrb[0].mxu0
    %v1660 = vadd.f32 %v1481, %v1659
    %v1661 = vpop.f32.mrb[0].mxu0
    %1662 = vmatprep.mubr.f32.mxu0 0.0
    %1663 = vmatmul.mubr.f32.gmra.mrb[0].mxu0 %v1449
    %v1664 = vpop.f32.mrb[0].mxu0
    %v1665 = vadd.f32 %v1481, %v1664
    %v1666 = vpop.f32.mrb[0].mxu0
    %1667 = vmatprep.mubr.f32.mxu0 0.0
    %1668 = vmatmul.mubr.f32.gmra.mrb[0].mxu0 %v1450
    %v1669 = vpop.f32.mrb[0].mxu0
    %v1670 = vadd.f32 %v1481, %v1669
    %v1671 = vpop.f32.mrb[0].mxu0
    %1672 = vmatprep.mubr.f32.mxu0 0.0
    %1673 = vmatmul.mubr.f32.gmra.mrb[0].mxu0 %v1451
    %v1674 = vpop.f32.mrb[0].mxu0
    %v1675 = vadd.f32 %v1481, %v1674
    %v1676 = vpop.f32.mrb[0].mxu0
    %1677 = vmatprep.mubr.f32.mxu0 0.0
    %1678 = vmatmul.mubr.f32.gmra.mrb[0].mxu0 %v1452
    %v1679 = vpop.f32.mrb[0].mxu0
    %v1680 = vadd.f32 %v1481, %v1679
    %v1681 = vpop.f32.mrb[0].mxu0
    %1682 = vmatprep.mubr.f32.mxu0 0.0
    %1683 = vmatmul.mubr.f32.gmra.mrb[0].mxu0 %v1453
    %v1684 = vpop.f32.mrb[0].mxu0
    %v1685 = vadd.f32 %v1481, %v1684
    %v1686 = vpop.f32.mrb[0].mxu0
    %1687 = vmatprep.mubr.f32.mxu0 0.0
    %1688 = vmatmul.mubr.f32.gmra.mrb[0].mxu0 %v1454
    %v1689 = vpop.f32.mrb[0].mxu0
    %v1690 = vadd.f32 %v1481, %v1689
    %v1691 = vpop.f32.mrb[0].mxu0
    %1692 = vmatprep.mubr.f32.mxu0 0.0
    %1693 = vmatmul.mubr.f32.gmra.mrb[0].mxu0 %v1455
    %v1694 = vpop.f32.mrb[0].mxu0
    %v1695 = vadd.f32 %v1481, %v1694
    %v1696 = vpop.f32.mrb[0].mxu0
    %1697 = vmatprep.mubr.f32.mxu0 0.0
    %1698 = vmatmul.mubr.f32.gmra.mrb[0].mxu0 %v1456
    %v1699 = vpop.f32.mrb[0].mxu0
    %v1700 = vadd.f32 %v1481, %v1699
    %v1701 = vpop.f32.mrb[0].mxu0
    %1702 = vmatprep.mubr.f32.mxu0 0.0
    %1703 = vmatmul.mubr.f32.gmra.mrb[0].mxu0 %v1457
    %v1704 = vpop.f32.mrb[0].mxu0
    %v1705 = vadd.f32 %v1481, %v1704
    %v1706 = vpop.f32.mrb[0].mxu0
    %1707 = vdwg.mxu0
    %s1708 = scalar_lea.vmem [#allocation11], 256
    %v1709 = vld [vmem:[%s1708] sm:$0xff]
    %v1710 = vld [vmem:[%s1708 + $0x8] sm:$0xff]
    %v1711 = vld [vmem:[%s1708 + $0x10] sm:$0xff]
    %v1712 = vld [vmem:[%s1708 + $0x18] sm:$0xff]
    %v1713 = vld [vmem:[%s1708 + $0x20] sm:$0xff]
    %v1714 = vld [vmem:[%s1708 + $0x28] sm:$0xff]
    %v1715 = vld [vmem:[%s1708 + $0x30] sm:$0xff]
    %v1716 = vld [vmem:[%s1708 + $0x38] sm:$0xff]
    %v1717 = vld [vmem:[%s1708 + $0x40] sm:$0xff]
    %v1718 = vld [vmem:[%s1708 + $0x48] sm:$0xff]
    %v1719 = vld [vmem:[%s1708 + $0x50] sm:$0xff]
    %v1720 = vld [vmem:[%s1708 + $0x58] sm:$0xff]
    %v1721 = vld [vmem:[%s1708 + $0x60] sm:$0xff]
    %v1722 = vld [vmem:[%s1708 + $0x68] sm:$0xff]
    %v1723 = vld [vmem:[%s1708 + $0x70] sm:$0xff]
    %v1724 = vld [vmem:[%s1708 + $0x78] sm:$0xff]
    %v1725 = vld [vmem:[%s1708 + $0x80] sm:$0xff]
    %v1726 = vld [vmem:[%s1708 + $0x88] sm:$0xff]
    %v1727 = vld [vmem:[%s1708 + $0x90] sm:$0xff]
    %v1728 = vld [vmem:[%s1708 + $0x98] sm:$0xff]
    %v1729 = vld [vmem:[%s1708 + $0xa0] sm:$0xff]
    %v1730 = vld [vmem:[%s1708 + $0xa8] sm:$0xff]
    %v1731 = vld [vmem:[%s1708 + $0xb0] sm:$0xff]
    %v1732 = vld [vmem:[%s1708 + $0xb8] sm:$0xff]
    %v1733 = vld [vmem:[%s1708 + $0xc0] sm:$0xff]
    %v1734 = vld [vmem:[%s1708 + $0xc8] sm:$0xff]
    %v1735 = vld [vmem:[%s1708 + $0xd0] sm:$0xff]
    %v1736 = vld [vmem:[%s1708 + $0xd8] sm:$0xff]
    %v1737 = vld [vmem:[%s1708 + $0xe0] sm:$0xff]
    %v1738 = vld [vmem:[%s1708 + $0xe8] sm:$0xff]
    %v1739 = vld [vmem:[%s1708 + $0xf0] sm:$0xff]
    %v1740 = vld [vmem:[%s1708 + $0xf8] sm:$0xff]
    %s1741 = scalar_lea.vmem %s8, 2
    %v1742 = vld [vmem:[%s1741] sm:$0x3]
    %v1744 = vlaneseq
    %v1745 = vshrl.u32 %v1744, 7
    %v1746 = vsub.s32 0, %v1745
    %v1747 = vrot.slane %v1742, %v1746
    %v1748 = vlaneseq
    %v1749 = vshrl.u32 %v1748, 7
    %v1750 = vsub.s32 1, %v1749
    %v1751 = vrot.slane %v1742, %v1750
    %1754 = vmatprep.subr.mxu0 %v1710
    %1755 = vmatpush1.msra.mxu0 %v1709
    %1756 = vmatprep.subr.mxu0 %v1712
    %1757 = vmatpush1.msra.mxu0 %v1711
    %1758 = vmatprep.subr.mxu0 %v1714
    %1759 = vmatpush1.msra.mxu0 %v1713
    %1760 = vmatprep.subr.mxu0 %v1716
    %1761 = vmatpush1.msra.mxu0 %v1715
    %1762 = vmatprep.subr.mxu0 %v1718
    %1763 = vmatpush1.msra.mxu0 %v1717
    %1764 = vmatprep.subr.mxu0 %v1720
    %1765 = vmatpush1.msra.mxu0 %v1719
    %1766 = vmatprep.subr.mxu0 %v1722
    %1767 = vmatpush1.msra.mxu0 %v1721
    %1768 = vmatprep.subr.mxu0 %v1724
    %1769 = vmatpush1.msra.mxu0 %v1723
    %1770 = vmatprep.subr.mxu0 %v1726
    %1771 = vmatpush1.msra.mxu0 %v1725
    %1772 = vmatprep.subr.mxu0 %v1728
    %1773 = vmatpush1.msra.mxu0 %v1727
    %1774 = vmatprep.subr.mxu0 %v1730
    %1775 = vmatpush1.msra.mxu0 %v1729
    %1776 = vmatprep.subr.mxu0 %v1732
    %1777 = vmatpush1.msra.mxu0 %v1731
    %1778 = vmatprep.subr.mxu0 %v1734
    %1779 = vmatpush1.msra.mxu0 %v1733
    %1780 = vmatprep.subr.mxu0 %v1736
    %1781 = vmatpush1.msra.mxu0 %v1735
    %1782 = vmatprep.subr.mxu0 %v1738
    %1783 = vmatpush1.msra.mxu0 %v1737
    %1784 = vmatprep.subr.mxu0 %v1740
    %1785 = vmatpush1.msra.mxu0 %v1739
    %1786 = vmatprep.subr.mxu0 0.0
    %1787 = vmatpush1.msra.mxu0 0.0
    %1788 = vmatprep.subr.mxu0 0.0
    %1789 = vmatpush1.msra.mxu0 0.0
    %1790 = vmatprep.subr.mxu0 0.0
    %1791 = vmatpush1.msra.mxu0 0.0
    %1792 = vmatprep.subr.mxu0 0.0
    %1793 = vmatpush1.msra.mxu0 0.0
    %1794 = vmatprep.subr.mxu0 0.0
    %1795 = vmatpush1.msra.mxu0 0.0
    %1796 = vmatprep.subr.mxu0 0.0
    %1797 = vmatpush1.msra.mxu0 0.0
    %1798 = vmatprep.subr.mxu0 0.0
    %1799 = vmatpush1.msra.mxu0 0.0
    %1800 = vmatprep.subr.mxu0 0.0
    %1801 = vmatpush1.msra.mxu0 0.0
    %1802 = vmatprep.subr.mxu0 0.0
    %1803 = vmatpush1.msra.mxu0 0.0
    %1804 = vmatprep.subr.mxu0 0.0
    %1805 = vmatpush1.msra.mxu0 0.0
    %1806 = vmatprep.subr.mxu0 0.0
    %1807 = vmatpush1.msra.mxu0 0.0
    %1808 = vmatprep.subr.mxu0 0.0
    %1809 = vmatpush1.msra.mxu0 0.0
    %1810 = vmatprep.subr.mxu0 0.0
    %1811 = vmatpush1.msra.mxu0 0.0
    %1812 = vmatprep.subr.mxu0 0.0
    %1813 = vmatpush1.msra.mxu0 0.0
    %1814 = vmatprep.subr.mxu0 0.0
    %1815 = vmatpush1.msra.mxu0 0.0
    %1816 = vmatprep.subr.mxu0 0.0
    %1817 = vmatpush1.msra.mxu0 0.0
    %1818 = vmatprep.mubr.f32.mxu0 0.0
    %1819 = vmatmul.mubr.f32.gmra.mrb[0].mxu0 %v1426
    %v1820 = vpop.f32.mrb[0].mxu0
    %v1821 = vadd.f32 %v1747, %v1820
    %v1822 = vpop.f32.mrb[0].mxu0
    %v1823 = vadd.f32 %v1751, %v1822
    %1824 = vmatprep.mubr.f32.mxu0 0.0
    %1825 = vmatmul.mubr.f32.gmra.mrb[0].mxu0 %v1427
    %v1826 = vpop.f32.mrb[0].mxu0
    %v1827 = vadd.f32 %v1747, %v1826
    %v1828 = vpop.f32.mrb[0].mxu0
    %v1829 = vadd.f32 %v1751, %v1828
    %1830 = vmatprep.mubr.f32.mxu0 0.0
    %1831 = vmatmul.mubr.f32.gmra.mrb[0].mxu0 %v1428
    %v1832 = vpop.f32.mrb[0].mxu0
    %v1833 = vadd.f32 %v1747, %v1832
    %v1834 = vpop.f32.mrb[0].mxu0
    %v1835 = vadd.f32 %v1751, %v1834
    %1836 = vmatprep.mubr.f32.mxu0 0.0
    %1837 = vmatmul.mubr.f32.gmra.mrb[0].mxu0 %v1429
    %v1838 = vpop.f32.mrb[0].mxu0
    %v1839 = vadd.f32 %v1747, %v1838
    %v1840 = vpop.f32.mrb[0].mxu0
    %v1841 = vadd.f32 %v1751, %v1840
    %1842 = vmatprep.mubr.f32.mxu0 0.0
    %1843 = vmatmul.mubr.f32.gmra.mrb[0].mxu0 %v1430
    %v1844 = vpop.f32.mrb[0].mxu0
    %v1845 = vadd.f32 %v1747, %v1844
    %v1846 = vpop.f32.mrb[0].mxu0
    %v1847 = vadd.f32 %v1751, %v1846
    %1848 = vmatprep.mubr.f32.mxu0 0.0
    %1849 = vmatmul.mubr.f32.gmra.mrb[0].mxu0 %v1431
    %v1850 = vpop.f32.mrb[0].mxu0
    %v1851 = vadd.f32 %v1747, %v1850
    %v1852 = vpop.f32.mrb[0].mxu0
    %v1853 = vadd.f32 %v1751, %v1852
    %1854 = vmatprep.mubr.f32.mxu0 0.0
    %1855 = vmatmul.mubr.f32.gmra.mrb[0].mxu0 %v1432
    %v1856 = vpop.f32.mrb[0].mxu0
    %v1857 = vadd.f32 %v1747, %v1856
    %v1858 = vpop.f32.mrb[0].mxu0
    %v1859 = vadd.f32 %v1751, %v1858
    %1860 = vmatprep.mubr.f32.mxu0 0.0
    %1861 = vmatmul.mubr.f32.gmra.mrb[0].mxu0 %v1433
    %v1862 = vpop.f32.mrb[0].mxu0
    %v1863 = vadd.f32 %v1747, %v1862
    %v1864 = vpop.f32.mrb[0].mxu0
    %v1865 = vadd.f32 %v1751, %v1864
    %1866 = vmatprep.mubr.f32.mxu0 0.0
    %1867 = vmatmul.mubr.f32.gmra.mrb[0].mxu0 %v1434
    %v1868 = vpop.f32.mrb[0].mxu0
    %v1869 = vadd.f32 %v1747, %v1868
    %v1870 = vpop.f32.mrb[0].mxu0
    %v1871 = vadd.f32 %v1751, %v1870
    %1872 = vmatprep.mubr.f32.mxu0 0.0
    %1873 = vmatmul.mubr.f32.gmra.mrb[0].mxu0 %v1435
    %v1874 = vpop.f32.mrb[0].mxu0
    %v1875 = vadd.f32 %v1747, %v1874
    %v1876 = vpop.f32.mrb[0].mxu0
    %v1877 = vadd.f32 %v1751, %v1876
    %1878 = vmatprep.mubr.f32.mxu0 0.0
    %1879 = vmatmul.mubr.f32.gmra.mrb[0].mxu0 %v1436
    %v1880 = vpop.f32.mrb[0].mxu0
    %v1881 = vadd.f32 %v1747, %v1880
    %v1882 = vpop.f32.mrb[0].mxu0
    %v1883 = vadd.f32 %v1751, %v1882
    %1884 = vmatprep.mubr.f32.mxu0 0.0
    %1885 = vmatmul.mubr.f32.gmra.mrb[0].mxu0 %v1437
    %v1886 = vpop.f32.mrb[0].mxu0
    %v1887 = vadd.f32 %v1747, %v1886
    %v1888 = vpop.f32.mrb[0].mxu0
    %v1889 = vadd.f32 %v1751, %v1888
    %1890 = vmatprep.mubr.f32.mxu0 0.0
    %1891 = vmatmul.mubr.f32.gmra.mrb[0].mxu0 %v1438
    %v1892 = vpop.f32.mrb[0].mxu0
    %v1893 = vadd.f32 %v1747, %v1892
    %v1894 = vpop.f32.mrb[0].mxu0
    %v1895 = vadd.f32 %v1751, %v1894
    %1896 = vmatprep.mubr.f32.mxu0 0.0
    %1897 = vmatmul.mubr.f32.gmra.mrb[0].mxu0 %v1439
    %v1898 = vpop.f32.mrb[0].mxu0
    %v1899 = vadd.f32 %v1747, %v1898
    %v1900 = vpop.f32.mrb[0].mxu0
    %v1901 = vadd.f32 %v1751, %v1900
    %1902 = vmatprep.mubr.f32.mxu0 0.0
    %1903 = vmatmul.mubr.f32.gmra.mrb[0].mxu0 %v1440
    %v1904 = vpop.f32.mrb[0].mxu0
    %v1905 = vadd.f32 %v1747, %v1904
    %v1906 = vpop.f32.mrb[0].mxu0
    %v1907 = vadd.f32 %v1751, %v1906
    %1908 = vmatprep.mubr.f32.mxu0 0.0
    %1909 = vmatmul.mubr.f32.gmra.mrb[0].mxu0 %v1441
    %v1910 = vpop.f32.mrb[0].mxu0
    %v1911 = vadd.f32 %v1747, %v1910
    %v1912 = vpop.f32.mrb[0].mxu0
    %v1913 = vadd.f32 %v1751, %v1912
    %1914 = vmatprep.mubr.f32.mxu0 0.0
    %1915 = vmatmul.mubr.f32.gmra.mrb[0].mxu0 %v1442
    %v1916 = vpop.f32.mrb[0].mxu0
    %v1917 = vadd.f32 %v1747, %v1916
    %v1918 = vpop.f32.mrb[0].mxu0
    %v1919 = vadd.f32 %v1751, %v1918
    %1920 = vmatprep.mubr.f32.mxu0 0.0
    %1921 = vmatmul.mubr.f32.gmra.mrb[0].mxu0 %v1443
    %v1922 = vpop.f32.mrb[0].mxu0
    %v1923 = vadd.f32 %v1747, %v1922
    %v1924 = vpop.f32.mrb[0].mxu0
    %v1925 = vadd.f32 %v1751, %v1924
    %1926 = vmatprep.mubr.f32.mxu0 0.0
    %1927 = vmatmul.mubr.f32.gmra.mrb[0].mxu0 %v1444
    %v1928 = vpop.f32.mrb[0].mxu0
    %v1929 = vadd.f32 %v1747, %v1928
    %v1930 = vpop.f32.mrb[0].mxu0
    %v1931 = vadd.f32 %v1751, %v1930
    %1932 = vmatprep.mubr.f32.mxu0 0.0
    %1933 = vmatmul.mubr.f32.gmra.mrb[0].mxu0 %v1445
    %v1934 = vpop.f32.mrb[0].mxu0
    %v1935 = vadd.f32 %v1747, %v1934
    %v1936 = vpop.f32.mrb[0].mxu0
    %v1937 = vadd.f32 %v1751, %v1936
    %1938 = vmatprep.mubr.f32.mxu0 0.0
    %1939 = vmatmul.mubr.f32.gmra.mrb[0].mxu0 %v1446
    %v1940 = vpop.f32.mrb[0].mxu0
    %v1941 = vadd.f32 %v1747, %v1940
    %v1942 = vpop.f32.mrb[0].mxu0
    %v1943 = vadd.f32 %v1751, %v1942
    %1944 = vmatprep.mubr.f32.mxu0 0.0
    %1945 = vmatmul.mubr.f32.gmra.mrb[0].mxu0 %v1447
    %v1946 = vpop.f32.mrb[0].mxu0
    %v1947 = vadd.f32 %v1747, %v1946
    %v1948 = vpop.f32.mrb[0].mxu0
    %v1949 = vadd.f32 %v1751, %v1948
    %1950 = vmatprep.mubr.f32.mxu0 0.0
    %1951 = vmatmul.mubr.f32.gmra.mrb[0].mxu0 %v1448
    %v1952 = vpop.f32.mrb[0].mxu0
    %v1953 = vadd.f32 %v1747, %v1952
    %v1954 = vpop.f32.mrb[0].mxu0
    %v1955 = vadd.f32 %v1751, %v1954
    %1956 = vmatprep.mubr.f32.mxu0 0.0
    %1957 = vmatmul.mubr.f32.gmra.mrb[0].mxu0 %v1449
    %v1958 = vpop.f32.mrb[0].mxu0
    %v1959 = vadd.f32 %v1747, %v1958
    %v1960 = vpop.f32.mrb[0].mxu0
    %v1961 = vadd.f32 %v1751, %v1960
    %1962 = vmatprep.mubr.f32.mxu0 0.0
    %1963 = vmatmul.mubr.f32.gmra.mrb[0].mxu0 %v1450
    %v1964 = vpop.f32.mrb[0].mxu0
    %v1965 = vadd.f32 %v1747, %v1964
    %v1966 = vpop.f32.mrb[0].mxu0
    %v1967 = vadd.f32 %v1751, %v1966
    %1968 = vmatprep.mubr.f32.mxu0 0.0
    %1969 = vmatmul.mubr.f32.gmra.mrb[0].mxu0 %v1451
    %v1970 = vpop.f32.mrb[0].mxu0
    %v1971 = vadd.f32 %v1747, %v1970
    %v1972 = vpop.f32.mrb[0].mxu0
    %v1973 = vadd.f32 %v1751, %v1972
    %1974 = vmatprep.mubr.f32.mxu0 0.0
    %1975 = vmatmul.mubr.f32.gmra.mrb[0].mxu0 %v1452
    %v1976 = vpop.f32.mrb[0].mxu0
    %v1977 = vadd.f32 %v1747, %v1976
    %v1978 = vpop.f32.mrb[0].mxu0
    %v1979 = vadd.f32 %v1751, %v1978
    %1980 = vmatprep.mubr.f32.mxu0 0.0
    %1981 = vmatmul.mubr.f32.gmra.mrb[0].mxu0 %v1453
    %v1982 = vpop.f32.mrb[0].mxu0
    %v1983 = vadd.f32 %v1747, %v1982
    %v1984 = vpop.f32.mrb[0].mxu0
    %v1985 = vadd.f32 %v1751, %v1984
    %1986 = vmatprep.mubr.f32.mxu0 0.0
    %1987 = vmatmul.mubr.f32.gmra.mrb[0].mxu0 %v1454
    %v1988 = vpop.f32.mrb[0].mxu0
    %v1989 = vadd.f32 %v1747, %v1988
    %v1990 = vpop.f32.mrb[0].mxu0
    %v1991 = vadd.f32 %v1751, %v1990
    %1992 = vmatprep.mubr.f32.mxu0 0.0
    %1993 = vmatmul.mubr.f32.gmra.mrb[0].mxu0 %v1455
    %v1994 = vpop.f32.mrb[0].mxu0
    %v1995 = vadd.f32 %v1747, %v1994
    %v1996 = vpop.f32.mrb[0].mxu0
    %v1997 = vadd.f32 %v1751, %v1996
    %1998 = vmatprep.mubr.f32.mxu0 0.0
    %1999 = vmatmul.mubr.f32.gmra.mrb[0].mxu0 %v1456
    %v2000 = vpop.f32.mrb[0].mxu0
    %v2001 = vadd.f32 %v1747, %v2000
    %v2002 = vpop.f32.mrb[0].mxu0
    %v2003 = vadd.f32 %v1751, %v2002
    %2004 = vmatprep.mubr.f32.mxu0 0.0
    %2005 = vmatmul.mubr.f32.gmra.mrb[0].mxu0 %v1457
    %v2006 = vpop.f32.mrb[0].mxu0
    %v2007 = vadd.f32 %v1747, %v2006
    %v2008 = vpop.f32.mrb[0].mxu0
    %v2009 = vadd.f32 %v1751, %v2008
    %2010 = vdwg.mxu0
    %2011 = vmatprep.subr.mxu0 0.0
    %2012 = vmatpush1.msra.mxu0 %v1550
    %2013 = vmatprep.subr.mxu0 0.0
    %2014 = vmatpush1.msra.mxu0 %v1555
    %2015 = vmatprep.subr.mxu0 0.0
    %2016 = vmatpush1.msra.mxu0 %v1560
    %2017 = vmatprep.subr.mxu0 0.0
    %2018 = vmatpush1.msra.mxu0 %v1565
    %2019 = vmatprep.subr.mxu0 0.0
    %2020 = vmatpush1.msra.mxu0 %v1570
    %2021 = vmatprep.subr.mxu0 0.0
    %2022 = vmatpush1.msra.mxu0 %v1575
    %2023 = vmatprep.subr.mxu0 0.0
    %2024 = vmatpush1.msra.mxu0 %v1580
    %2025 = vmatprep.subr.mxu0 0.0
    %2026 = vmatpush1.msra.mxu0 %v1585
    %2027 = vmatprep.subr.mxu0 0.0
    %2028 = vmatpush1.msra.mxu0 %v1590
    %2029 = vmatprep.subr.mxu0 0.0
    %2030 = vmatpush1.msra.mxu0 %v1595
    %2031 = vmatprep.subr.mxu0 0.0
    %2032 = vmatpush1.msra.mxu0 %v1600
    %2033 = vmatprep.subr.mxu0 0.0
    %2034 = vmatpush1.msra.mxu0 %v1605
    %2035 = vmatprep.subr.mxu0 0.0
    %2036 = vmatpush1.msra.mxu0 %v1610
    %2037 = vmatprep.subr.mxu0 0.0
    %2038 = vmatpush1.msra.mxu0 %v1615
    %2039 = vmatprep.subr.mxu0 0.0
    %2040 = vmatpush1.msra.mxu0 %v1620
    %2041 = vmatprep.subr.mxu0 0.0
    %2042 = vmatpush1.msra.mxu0 %v1625
    %2043 = vmatprep.subr.mxu0 0.0
    %2044 = vmatpush1.msra.mxu0 %v1630
    %2045 = vmatprep.subr.mxu0 0.0
    %2046 = vmatpush1.msra.mxu0 %v1635
    %2047 = vmatprep.subr.mxu0 0.0
    %2048 = vmatpush1.msra.mxu0 %v1640
    %2049 = vmatprep.subr.mxu0 0.0
    %2050 = vmatpush1.msra.mxu0 %v1645
    %2051 = vmatprep.subr.mxu0 0.0
    %2052 = vmatpush1.msra.mxu0 %v1650
    %2053 = vmatprep.subr.mxu0 0.0
    %2054 = vmatpush1.msra.mxu0 %v1655
    %2055 = vmatprep.subr.mxu0 0.0
    %2056 = vmatpush1.msra.mxu0 %v1660
    %2057 = vmatprep.subr.mxu0 0.0
    %2058 = vmatpush1.msra.mxu0 %v1665
    %2059 = vmatprep.subr.mxu0 0.0
    %2060 = vmatpush1.msra.mxu0 %v1670
    %2061 = vmatprep.subr.mxu0 0.0
    %2062 = vmatpush1.msra.mxu0 %v1675
    %2063 = vmatprep.subr.mxu0 0.0
    %2064 = vmatpush1.msra.mxu0 %v1680
    %2065 = vmatprep.subr.mxu0 0.0
    %2066 = vmatpush1.msra.mxu0 %v1685
    %2067 = vmatprep.subr.mxu0 0.0
    %2068 = vmatpush1.msra.mxu0 %v1690
    %2069 = vmatprep.subr.mxu0 0.0
    %2070 = vmatpush1.msra.mxu0 %v1695
    %2071 = vmatprep.subr.mxu0 0.0
    %2072 = vmatpush1.msra.mxu0 %v1700
    %2073 = vmatprep.subr.mxu0 0.0
    %2074 = vmatpush1.msra.mxu0 %v1705
    %2075 = vmatprep.mubr.f32.mxu0 %v117
    %2076 = vmatmul.mubr.f32.gmra.mrb[0].mxu0 %v116
    %v2077 = vpop.f32.mrb[0].mxu0
    %v2078 = vadd.f32 0.0, %v2077
    %v2079 = vpop.f32.mrb[0].mxu0
    %2080 = vmatprep.mubr.f32.mxu0 %v119
    %2081 = vmatmul.mubr.f32.gmra.mrb[0].mxu0 %v118
    %v2082 = vpop.f32.mrb[0].mxu0
    %v2083 = vadd.f32 0.0, %v2082
    %v2084 = vpop.f32.mrb[0].mxu0
    %2085 = vmatprep.mubr.f32.mxu0 %v121
    %2086 = vmatmul.mubr.f32.gmra.mrb[0].mxu0 %v120
    %v2087 = vpop.f32.mrb[0].mxu0
    %v2088 = vadd.f32 0.0, %v2087
    %v2089 = vpop.f32.mrb[0].mxu0
    %2090 = vmatprep.mubr.f32.mxu0 %v123
    %2091 = vmatmul.mubr.f32.gmra.mrb[0].mxu0 %v122
    %v2092 = vpop.f32.mrb[0].mxu0
    %v2093 = vadd.f32 0.0, %v2092
    %v2094 = vpop.f32.mrb[0].mxu0
    %2095 = vmatprep.mubr.f32.mxu0 %v125
    %2096 = vmatmul.mubr.f32.gmra.mrb[0].mxu0 %v124
    %v2097 = vpop.f32.mrb[0].mxu0
    %v2098 = vadd.f32 0.0, %v2097
    %v2099 = vpop.f32.mrb[0].mxu0
    %2100 = vmatprep.mubr.f32.mxu0 %v127
    %2101 = vmatmul.mubr.f32.gmra.mrb[0].mxu0 %v126
    %v2102 = vpop.f32.mrb[0].mxu0
    %v2103 = vadd.f32 0.0, %v2102
    %v2104 = vpop.f32.mrb[0].mxu0
    %2105 = vmatprep.mubr.f32.mxu0 %v129
    %2106 = vmatmul.mubr.f32.gmra.mrb[0].mxu0 %v128
    %v2107 = vpop.f32.mrb[0].mxu0
    %v2108 = vadd.f32 0.0, %v2107
    %v2109 = vpop.f32.mrb[0].mxu0
    %2110 = vmatprep.mubr.f32.mxu0 %v131
    %2111 = vmatmul.mubr.f32.gmra.mrb[0].mxu0 %v130
    %v2112 = vpop.f32.mrb[0].mxu0
    %v2113 = vadd.f32 0.0, %v2112
    %v2114 = vpop.f32.mrb[0].mxu0
    %2115 = vmatprep.mubr.f32.mxu0 %v133
    %2116 = vmatmul.mubr.f32.gmra.mrb[0].mxu0 %v132
    %v2117 = vpop.f32.mrb[0].mxu0
    %v2118 = vadd.f32 0.0, %v2117
    %v2119 = vpop.f32.mrb[0].mxu0
    %2120 = vmatprep.mubr.f32.mxu0 %v135
    %2121 = vmatmul.mubr.f32.gmra.mrb[0].mxu0 %v134
    %v2122 = vpop.f32.mrb[0].mxu0
    %v2123 = vadd.f32 0.0, %v2122
    %v2124 = vpop.f32.mrb[0].mxu0
    %2125 = vmatprep.mubr.f32.mxu0 %v137
    %2126 = vmatmul.mubr.f32.gmra.mrb[0].mxu0 %v136
    %v2127 = vpop.f32.mrb[0].mxu0
    %v2128 = vadd.f32 0.0, %v2127
    %v2129 = vpop.f32.mrb[0].mxu0
    %2130 = vmatprep.mubr.f32.mxu0 %v139
    %2131 = vmatmul.mubr.f32.gmra.mrb[0].mxu0 %v138
    %v2132 = vpop.f32.mrb[0].mxu0
    %v2133 = vadd.f32 0.0, %v2132
    %v2134 = vpop.f32.mrb[0].mxu0
    %2135 = vmatprep.mubr.f32.mxu0 %v141
    %2136 = vmatmul.mubr.f32.gmra.mrb[0].mxu0 %v140
    %v2137 = vpop.f32.mrb[0].mxu0
    %v2138 = vadd.f32 0.0, %v2137
    %v2139 = vpop.f32.mrb[0].mxu0
    %2140 = vmatprep.mubr.f32.mxu0 %v143
    %2141 = vmatmul.mubr.f32.gmra.mrb[0].mxu0 %v142
    %v2142 = vpop.f32.mrb[0].mxu0
    %v2143 = vadd.f32 0.0, %v2142
    %v2144 = vpop.f32.mrb[0].mxu0
    %2145 = vmatprep.mubr.f32.mxu0 %v145
    %2146 = vmatmul.mubr.f32.gmra.mrb[0].mxu0 %v144
    %v2147 = vpop.f32.mrb[0].mxu0
    %v2148 = vadd.f32 0.0, %v2147
    %v2149 = vpop.f32.mrb[0].mxu0
    %2150 = vmatprep.mubr.f32.mxu0 %v147
    %2151 = vmatmul.mubr.f32.gmra.mrb[0].mxu0 %v146
    %v2152 = vpop.f32.mrb[0].mxu0
    %v2153 = vadd.f32 0.0, %v2152
    %v2154 = vpop.f32.mrb[0].mxu0
    %2155 = vmatprep.mubr.f32.mxu0 %v149
    %2156 = vmatmul.mubr.f32.gmra.mrb[0].mxu0 %v148
    %v2157 = vpop.f32.mrb[0].mxu0
    %v2158 = vadd.f32 0.0, %v2157
    %v2159 = vpop.f32.mrb[0].mxu0
    %2160 = vmatprep.mubr.f32.mxu0 %v151
    %2161 = vmatmul.mubr.f32.gmra.mrb[0].mxu0 %v150
    %v2162 = vpop.f32.mrb[0].mxu0
    %v2163 = vadd.f32 0.0, %v2162
    %v2164 = vpop.f32.mrb[0].mxu0
    %2165 = vmatprep.mubr.f32.mxu0 %v153
    %2166 = vmatmul.mubr.f32.gmra.mrb[0].mxu0 %v152
    %v2167 = vpop.f32.mrb[0].mxu0
    %v2168 = vadd.f32 0.0, %v2167
    %v2169 = vpop.f32.mrb[0].mxu0
    %2170 = vmatprep.mubr.f32.mxu0 %v155
    %2171 = vmatmul.mubr.f32.gmra.mrb[0].mxu0 %v154
    %v2172 = vpop.f32.mrb[0].mxu0
    %v2173 = vadd.f32 0.0, %v2172
    %v2174 = vpop.f32.mrb[0].mxu0
    %2175 = vmatprep.mubr.f32.mxu0 %v157
    %2176 = vmatmul.mubr.f32.gmra.mrb[0].mxu0 %v156
    %v2177 = vpop.f32.mrb[0].mxu0
    %v2178 = vadd.f32 0.0, %v2177
    %v2179 = vpop.f32.mrb[0].mxu0
    %2180 = vmatprep.mubr.f32.mxu0 %v159
    %2181 = vmatmul.mubr.f32.gmra.mrb[0].mxu0 %v158
    %v2182 = vpop.f32.mrb[0].mxu0
    %v2183 = vadd.f32 0.0, %v2182
    %v2184 = vpop.f32.mrb[0].mxu0
    %2185 = vmatprep.mubr.f32.mxu0 %v161
    %2186 = vmatmul.mubr.f32.gmra.mrb[0].mxu0 %v160
    %v2187 = vpop.f32.mrb[0].mxu0
    %v2188 = vadd.f32 0.0, %v2187
    %v2189 = vpop.f32.mrb[0].mxu0
    %2190 = vmatprep.mubr.f32.mxu0 %v163
    %2191 = vmatmul.mubr.f32.gmra.mrb[0].mxu0 %v162
    %v2192 = vpop.f32.mrb[0].mxu0
    %v2193 = vadd.f32 0.0, %v2192
    %v2194 = vpop.f32.mrb[0].mxu0
    %2195 = vmatprep.mubr.f32.mxu0 %v165
    %2196 = vmatmul.mubr.f32.gmra.mrb[0].mxu0 %v164
    %v2197 = vpop.f32.mrb[0].mxu0
    %v2198 = vadd.f32 0.0, %v2197
    %v2199 = vpop.f32.mrb[0].mxu0
    %2200 = vmatprep.mubr.f32.mxu0 %v167
    %2201 = vmatmul.mubr.f32.gmra.mrb[0].mxu0 %v166
    %v2202 = vpop.f32.mrb[0].mxu0
    %v2203 = vadd.f32 0.0, %v2202
    %v2204 = vpop.f32.mrb[0].mxu0
    %2205 = vmatprep.mubr.f32.mxu0 %v169
    %2206 = vmatmul.mubr.f32.gmra.mrb[0].mxu0 %v168
    %v2207 = vpop.f32.mrb[0].mxu0
    %v2208 = vadd.f32 0.0, %v2207
    %v2209 = vpop.f32.mrb[0].mxu0
    %2210 = vmatprep.mubr.f32.mxu0 %v171
    %2211 = vmatmul.mubr.f32.gmra.mrb[0].mxu0 %v170
    %v2212 = vpop.f32.mrb[0].mxu0
    %v2213 = vadd.f32 0.0, %v2212
    %v2214 = vpop.f32.mrb[0].mxu0
    %2215 = vmatprep.mubr.f32.mxu0 %v173
    %2216 = vmatmul.mubr.f32.gmra.mrb[0].mxu0 %v172
    %v2217 = vpop.f32.mrb[0].mxu0
    %v2218 = vadd.f32 0.0, %v2217
    %v2219 = vpop.f32.mrb[0].mxu0
    %2220 = vmatprep.mubr.f32.mxu0 %v175
    %2221 = vmatmul.mubr.f32.gmra.mrb[0].mxu0 %v174
    %v2222 = vpop.f32.mrb[0].mxu0
    %v2223 = vadd.f32 0.0, %v2222
    %v2224 = vpop.f32.mrb[0].mxu0
    %2225 = vmatprep.mubr.f32.mxu0 %v177
    %2226 = vmatmul.mubr.f32.gmra.mrb[0].mxu0 %v176
    %v2227 = vpop.f32.mrb[0].mxu0
    %v2228 = vadd.f32 0.0, %v2227
    %v2229 = vpop.f32.mrb[0].mxu0
    %2230 = vmatprep.mubr.f32.mxu0 %v179
    %2231 = vmatmul.mubr.f32.gmra.mrb[0].mxu0 %v178
    %v2232 = vpop.f32.mrb[0].mxu0
    %v2233 = vadd.f32 0.0, %v2232
    %v2234 = vpop.f32.mrb[0].mxu0
    %2235 = vdwg.mxu0
    %v2236 = vmul.f32 %v182, %v1821
    %v2237 = vmul.f32 %v185, %v1827
    %v2238 = vmul.f32 %v188, %v1833
    %v2239 = vmul.f32 %v191, %v1839
    %v2240 = vmul.f32 %v194, %v1845
    %v2241 = vmul.f32 %v197, %v1851
    %v2242 = vmul.f32 %v200, %v1857
    %v2243 = vmul.f32 %v203, %v1863
    %v2244 = vmul.f32 %v206, %v1869
    %v2245 = vmul.f32 %v209, %v1875
    %v2246 = vmul.f32 %v212, %v1881
    %v2247 = vmul.f32 %v215, %v1887
    %v2248 = vmul.f32 %v218, %v1893
    %v2249 = vmul.f32 %v221, %v1899
    %v2250 = vmul.f32 %v224, %v1905
    %v2251 = vmul.f32 %v227, %v1911
    %v2252 = vmul.f32 %v230, %v1917
    %v2253 = vmul.f32 %v233, %v1923
    %v2254 = vmul.f32 %v236, %v1929
    %v2255 = vmul.f32 %v239, %v1935
    %v2256 = vmul.f32 %v242, %v1941
    %v2257 = vmul.f32 %v245, %v1947
    %v2258 = vmul.f32 %v248, %v1953
    %v2259 = vmul.f32 %v251, %v1959
    %v2260 = vmul.f32 %v254, %v1965
    %v2261 = vmul.f32 %v257, %v1971
    %v2262 = vmul.f32 %v260, %v1977
    %v2263 = vmul.f32 %v263, %v1983
    %v2264 = vmul.f32 %v266, %v1989
    %v2265 = vmul.f32 %v269, %v1995
    %v2266 = vmul.f32 %v272, %v2001
    %v2267 = vmul.f32 %v275, %v2007
    %v2268 = vsub.f32 %v2078, %v2236
    %v2269 = vsub.f32 %v2083, %v2237
    %v2270 = vsub.f32 %v2088, %v2238
    %v2271 = vsub.f32 %v2093, %v2239
    %v2272 = vsub.f32 %v2098, %v2240
    %v2273 = vsub.f32 %v2103, %v2241
    %v2274 = vsub.f32 %v2108, %v2242
    %v2275 = vsub.f32 %v2113, %v2243
    %v2276 = vsub.f32 %v2118, %v2244
    %v2277 = vsub.f32 %v2123, %v2245
    %v2278 = vsub.f32 %v2128, %v2246
    %v2279 = vsub.f32 %v2133, %v2247
    %v2280 = vsub.f32 %v2138, %v2248
    %v2281 = vsub.f32 %v2143, %v2249
    %v2282 = vsub.f32 %v2148, %v2250
    %v2283 = vsub.f32 %v2153, %v2251
    %v2284 = vsub.f32 %v2158, %v2252
    %v2285 = vsub.f32 %v2163, %v2253
    %v2286 = vsub.f32 %v2168, %v2254
    %v2287 = vsub.f32 %v2173, %v2255
    %v2288 = vsub.f32 %v2178, %v2256
    %v2289 = vsub.f32 %v2183, %v2257
    %v2290 = vsub.f32 %v2188, %v2258
    %v2291 = vsub.f32 %v2193, %v2259
    %v2292 = vsub.f32 %v2198, %v2260
    %v2293 = vsub.f32 %v2203, %v2261
    %v2294 = vsub.f32 %v2208, %v2262
    %v2295 = vsub.f32 %v2213, %v2263
    %v2296 = vsub.f32 %v2218, %v2264
    %v2297 = vsub.f32 %v2223, %v2265
    %v2298 = vsub.f32 %v2228, %v2266
    %v2299 = vsub.f32 %v2233, %v2267
    %v2300 = vadd.f32 %v2268, %v1823
    %v2301 = vadd.f32 %v2269, %v1829
    %v2302 = vadd.f32 %v2270, %v1835
    %v2303 = vadd.f32 %v2271, %v1841
    %v2304 = vadd.f32 %v2272, %v1847
    %v2305 = vadd.f32 %v2273, %v1853
    %v2306 = vadd.f32 %v2274, %v1859
    %v2307 = vadd.f32 %v2275, %v1865
    %v2308 = vadd.f32 %v2276, %v1871
    %v2309 = vadd.f32 %v2277, %v1877
    %v2310 = vadd.f32 %v2278, %v1883
    %v2311 = vadd.f32 %v2279, %v1889
    %v2312 = vadd.f32 %v2280, %v1895
    %v2313 = vadd.f32 %v2281, %v1901
    %v2314 = vadd.f32 %v2282, %v1907
    %v2315 = vadd.f32 %v2283, %v1913
    %v2316 = vadd.f32 %v2284, %v1919
    %v2317 = vadd.f32 %v2285, %v1925
    %v2318 = vadd.f32 %v2286, %v1931
    %v2319 = vadd.f32 %v2287, %v1937
    %v2320 = vadd.f32 %v2288, %v1943
    %v2321 = vadd.f32 %v2289, %v1949
    %v2322 = vadd.f32 %v2290, %v1955
    %v2323 = vadd.f32 %v2291, %v1961
    %v2324 = vadd.f32 %v2292, %v1967
    %v2325 = vadd.f32 %v2293, %v1973
    %v2326 = vadd.f32 %v2294, %v1979
    %v2327 = vadd.f32 %v2295, %v1985
    %v2328 = vadd.f32 %v2296, %v1991
    %v2329 = vadd.f32 %v2297, %v1997
    %v2330 = vadd.f32 %v2298, %v2003
    %v2331 = vadd.f32 %v2299, %v2009
    %v2332 = vmax.f32 %v2300, 0.0
    %v2333 = vmax.f32 %v2301, 0.0
    %v2334 = vmax.f32 %v2302, 0.0
    %v2335 = vmax.f32 %v2303, 0.0
    %v2336 = vmax.f32 %v2304, 0.0
    %v2337 = vmax.f32 %v2305, 0.0
    %v2338 = vmax.f32 %v2306, 0.0
    %v2339 = vmax.f32 %v2307, 0.0
    %v2340 = vmax.f32 %v2308, 0.0
    %v2341 = vmax.f32 %v2309, 0.0
    %v2342 = vmax.f32 %v2310, 0.0
    %v2343 = vmax.f32 %v2311, 0.0
    %v2344 = vmax.f32 %v2312, 0.0
    %v2345 = vmax.f32 %v2313, 0.0
    %v2346 = vmax.f32 %v2314, 0.0
    %v2347 = vmax.f32 %v2315, 0.0
    %v2348 = vmax.f32 %v2316, 0.0
    %v2349 = vmax.f32 %v2317, 0.0
    %v2350 = vmax.f32 %v2318, 0.0
    %v2351 = vmax.f32 %v2319, 0.0
    %v2352 = vmax.f32 %v2320, 0.0
    %v2353 = vmax.f32 %v2321, 0.0
    %v2354 = vmax.f32 %v2322, 0.0
    %v2355 = vmax.f32 %v2323, 0.0
    %v2356 = vmax.f32 %v2324, 0.0
    %v2357 = vmax.f32 %v2325, 0.0
    %v2358 = vmax.f32 %v2326, 0.0
    %v2359 = vmax.f32 %v2327, 0.0
    %v2360 = vmax.f32 %v2328, 0.0
    %v2361 = vmax.f32 %v2329, 0.0
    %v2362 = vmax.f32 %v2330, 0.0
    %v2363 = vmax.f32 %v2331, 0.0
    %s2364 = scalar_lea.vmem [#allocation10], 256
    %v2365 = vld [vmem:[%s2364] sm:$0xff]
    %v2366 = vld [vmem:[%s2364 + $0x8] sm:$0xff]
    %v2367 = vld [vmem:[%s2364 + $0x10] sm:$0xff]
    %v2368 = vld [vmem:[%s2364 + $0x18] sm:$0xff]
    %v2369 = vld [vmem:[%s2364 + $0x20] sm:$0xff]
    %v2370 = vld [vmem:[%s2364 + $0x28] sm:$0xff]
    %v2371 = vld [vmem:[%s2364 + $0x30] sm:$0xff]
    %v2372 = vld [vmem:[%s2364 + $0x38] sm:$0xff]
    %v2373 = vld [vmem:[%s2364 + $0x40] sm:$0xff]
    %v2374 = vld [vmem:[%s2364 + $0x48] sm:$0xff]
    %v2375 = vld [vmem:[%s2364 + $0x50] sm:$0xff]
    %v2376 = vld [vmem:[%s2364 + $0x58] sm:$0xff]
    %v2377 = vld [vmem:[%s2364 + $0x60] sm:$0xff]
    %v2378 = vld [vmem:[%s2364 + $0x68] sm:$0xff]
    %v2379 = vld [vmem:[%s2364 + $0x70] sm:$0xff]
    %v2380 = vld [vmem:[%s2364 + $0x78] sm:$0xff]
    %s2381 = scalar_lea.vmem %s6, 2
    %v2382 = vld [vmem:[%s2381] sm:$0x1]
    %v2384 = vlaneseq
    %v2385 = vshrl.u32 %v2384, 7
    %v2386 = vsub.s32 0, %v2385
    %v2387 = vrot.slane %v2382, %v2386
    %2389 = vmatprep.subr.mxu0 0.0
    %2390 = vmatpush1.msra.mxu0 %v2365
    %2391 = vmatprep.subr.mxu0 0.0
    %2392 = vmatpush1.msra.mxu0 %v2366
    %2393 = vmatprep.subr.mxu0 0.0
    %2394 = vmatpush1.msra.mxu0 %v2367
    %2395 = vmatprep.subr.mxu0 0.0
    %2396 = vmatpush1.msra.mxu0 %v2368
    %2397 = vmatprep.subr.mxu0 0.0
    %2398 = vmatpush1.msra.mxu0 %v2369
    %2399 = vmatprep.subr.mxu0 0.0
    %2400 = vmatpush1.msra.mxu0 %v2370
    %2401 = vmatprep.subr.mxu0 0.0
    %2402 = vmatpush1.msra.mxu0 %v2371
    %2403 = vmatprep.subr.mxu0 0.0
    %2404 = vmatpush1.msra.mxu0 %v2372
    %2405 = vmatprep.subr.mxu0 0.0
    %2406 = vmatpush1.msra.mxu0 %v2373
    %2407 = vmatprep.subr.mxu0 0.0
    %2408 = vmatpush1.msra.mxu0 %v2374
    %2409 = vmatprep.subr.mxu0 0.0
    %2410 = vmatpush1.msra.mxu0 %v2375
    %2411 = vmatprep.subr.mxu0 0.0
    %2412 = vmatpush1.msra.mxu0 %v2376
    %2413 = vmatprep.subr.mxu0 0.0
    %2414 = vmatpush1.msra.mxu0 %v2377
    %2415 = vmatprep.subr.mxu0 0.0
    %2416 = vmatpush1.msra.mxu0 %v2378
    %2417 = vmatprep.subr.mxu0 0.0
    %2418 = vmatpush1.msra.mxu0 %v2379
    %2419 = vmatprep.subr.mxu0 0.0
    %2420 = vmatpush1.msra.mxu0 %v2380
    %2421 = vmatprep.subr.mxu0 0.0
    %2422 = vmatpush1.msra.mxu0 0.0
    %2423 = vmatprep.subr.mxu0 0.0
    %2424 = vmatpush1.msra.mxu0 0.0
    %2425 = vmatprep.subr.mxu0 0.0
    %2426 = vmatpush1.msra.mxu0 0.0
    %2427 = vmatprep.subr.mxu0 0.0
    %2428 = vmatpush1.msra.mxu0 0.0
    %2429 = vmatprep.subr.mxu0 0.0
    %2430 = vmatpush1.msra.mxu0 0.0
    %2431 = vmatprep.subr.mxu0 0.0
    %2432 = vmatpush1.msra.mxu0 0.0
    %2433 = vmatprep.subr.mxu0 0.0
    %2434 = vmatpush1.msra.mxu0 0.0
    %2435 = vmatprep.subr.mxu0 0.0
    %2436 = vmatpush1.msra.mxu0 0.0
    %2437 = vmatprep.subr.mxu0 0.0
    %2438 = vmatpush1.msra.mxu0 0.0
    %2439 = vmatprep.subr.mxu0 0.0
    %2440 = vmatpush1.msra.mxu0 0.0
    %2441 = vmatprep.subr.mxu0 0.0
    %2442 = vmatpush1.msra.mxu0 0.0
    %2443 = vmatprep.subr.mxu0 0.0
    %2444 = vmatpush1.msra.mxu0 0.0
    %2445 = vmatprep.subr.mxu0 0.0
    %2446 = vmatpush1.msra.mxu0 0.0
    %2447 = vmatprep.subr.mxu0 0.0
    %2448 = vmatpush1.msra.mxu0 0.0
    %2449 = vmatprep.subr.mxu0 0.0
    %2450 = vmatpush1.msra.mxu0 0.0
    %2451 = vmatprep.subr.mxu0 0.0
    %2452 = vmatpush1.msra.mxu0 0.0
    %2453 = vmatprep.mubr.f32.mxu0 0.0
    %2454 = vmatmul.mubr.f32.gmra.mrb[0].mxu0 %v2332
    %v2455 = vpop.f32.mrb[0].mxu0
    %v2456 = vadd.f32 %v2387, %v2455
    %v2457 = vpop.f32.mrb[0].mxu0
    %2458 = vmatprep.mubr.f32.mxu0 0.0
    %2459 = vmatmul.mubr.f32.gmra.mrb[0].mxu0 %v2333
    %v2460 = vpop.f32.mrb[0].mxu0
    %v2461 = vadd.f32 %v2387, %v2460
    %v2462 = vpop.f32.mrb[0].mxu0
    %2463 = vmatprep.mubr.f32.mxu0 0.0
    %2464 = vmatmul.mubr.f32.gmra.mrb[0].mxu0 %v2334
    %v2465 = vpop.f32.mrb[0].mxu0
    %v2466 = vadd.f32 %v2387, %v2465
    %v2467 = vpop.f32.mrb[0].mxu0
    %2468 = vmatprep.mubr.f32.mxu0 0.0
    %2469 = vmatmul.mubr.f32.gmra.mrb[0].mxu0 %v2335
    %v2470 = vpop.f32.mrb[0].mxu0
    %v2471 = vadd.f32 %v2387, %v2470
    %v2472 = vpop.f32.mrb[0].mxu0
    %2473 = vmatprep.mubr.f32.mxu0 0.0
    %2474 = vmatmul.mubr.f32.gmra.mrb[0].mxu0 %v2336
    %v2475 = vpop.f32.mrb[0].mxu0
    %v2476 = vadd.f32 %v2387, %v2475
    %v2477 = vpop.f32.mrb[0].mxu0
    %2478 = vmatprep.mubr.f32.mxu0 0.0
    %2479 = vmatmul.mubr.f32.gmra.mrb[0].mxu0 %v2337
    %v2480 = vpop.f32.mrb[0].mxu0
    %v2481 = vadd.f32 %v2387, %v2480
    %v2482 = vpop.f32.mrb[0].mxu0
    %2483 = vmatprep.mubr.f32.mxu0 0.0
    %2484 = vmatmul.mubr.f32.gmra.mrb[0].mxu0 %v2338
    %v2485 = vpop.f32.mrb[0].mxu0
    %v2486 = vadd.f32 %v2387, %v2485
    %v2487 = vpop.f32.mrb[0].mxu0
    %2488 = vmatprep.mubr.f32.mxu0 0.0
    %2489 = vmatmul.mubr.f32.gmra.mrb[0].mxu0 %v2339
    %v2490 = vpop.f32.mrb[0].mxu0
    %v2491 = vadd.f32 %v2387, %v2490
    %v2492 = vpop.f32.mrb[0].mxu0
    %2493 = vmatprep.mubr.f32.mxu0 0.0
    %2494 = vmatmul.mubr.f32.gmra.mrb[0].mxu0 %v2340
    %v2495 = vpop.f32.mrb[0].mxu0
    %v2496 = vadd.f32 %v2387, %v2495
    %v2497 = vpop.f32.mrb[0].mxu0
    %2498 = vmatprep.mubr.f32.mxu0 0.0
    %2499 = vmatmul.mubr.f32.gmra.mrb[0].mxu0 %v2341
    %v2500 = vpop.f32.mrb[0].mxu0
    %v2501 = vadd.f32 %v2387, %v2500
    %v2502 = vpop.f32.mrb[0].mxu0
    %2503 = vmatprep.mubr.f32.mxu0 0.0
    %2504 = vmatmul.mubr.f32.gmra.mrb[0].mxu0 %v2342
    %v2505 = vpop.f32.mrb[0].mxu0
    %v2506 = vadd.f32 %v2387, %v2505
    %v2507 = vpop.f32.mrb[0].mxu0
    %2508 = vmatprep.mubr.f32.mxu0 0.0
    %2509 = vmatmul.mubr.f32.gmra.mrb[0].mxu0 %v2343
    %v2510 = vpop.f32.mrb[0].mxu0
    %v2511 = vadd.f32 %v2387, %v2510
    %v2512 = vpop.f32.mrb[0].mxu0
    %2513 = vmatprep.mubr.f32.mxu0 0.0
    %2514 = vmatmul.mubr.f32.gmra.mrb[0].mxu0 %v2344
    %v2515 = vpop.f32.mrb[0].mxu0
    %v2516 = vadd.f32 %v2387, %v2515
    %v2517 = vpop.f32.mrb[0].mxu0
    %2518 = vmatprep.mubr.f32.mxu0 0.0
    %2519 = vmatmul.mubr.f32.gmra.mrb[0].mxu0 %v2345
    %v2520 = vpop.f32.mrb[0].mxu0
    %v2521 = vadd.f32 %v2387, %v2520
    %v2522 = vpop.f32.mrb[0].mxu0
    %2523 = vmatprep.mubr.f32.mxu0 0.0
    %2524 = vmatmul.mubr.f32.gmra.mrb[0].mxu0 %v2346
    %v2525 = vpop.f32.mrb[0].mxu0
    %v2526 = vadd.f32 %v2387, %v2525
    %v2527 = vpop.f32.mrb[0].mxu0
    %2528 = vmatprep.mubr.f32.mxu0 0.0
    %2529 = vmatmul.mubr.f32.gmra.mrb[0].mxu0 %v2347
    %v2530 = vpop.f32.mrb[0].mxu0
    %v2531 = vadd.f32 %v2387, %v2530
    %v2532 = vpop.f32.mrb[0].mxu0
    %2533 = vmatprep.mubr.f32.mxu0 0.0
    %2534 = vmatmul.mubr.f32.gmra.mrb[0].mxu0 %v2348
    %v2535 = vpop.f32.mrb[0].mxu0
    %v2536 = vadd.f32 %v2387, %v2535
    %v2537 = vpop.f32.mrb[0].mxu0
    %2538 = vmatprep.mubr.f32.mxu0 0.0
    %2539 = vmatmul.mubr.f32.gmra.mrb[0].mxu0 %v2349
    %v2540 = vpop.f32.mrb[0].mxu0
    %v2541 = vadd.f32 %v2387, %v2540
    %v2542 = vpop.f32.mrb[0].mxu0
    %2543 = vmatprep.mubr.f32.mxu0 0.0
    %2544 = vmatmul.mubr.f32.gmra.mrb[0].mxu0 %v2350
    %v2545 = vpop.f32.mrb[0].mxu0
    %v2546 = vadd.f32 %v2387, %v2545
    %v2547 = vpop.f32.mrb[0].mxu0
    %2548 = vmatprep.mubr.f32.mxu0 0.0
    %2549 = vmatmul.mubr.f32.gmra.mrb[0].mxu0 %v2351
    %v2550 = vpop.f32.mrb[0].mxu0
    %v2551 = vadd.f32 %v2387, %v2550
    %v2552 = vpop.f32.mrb[0].mxu0
    %2553 = vmatprep.mubr.f32.mxu0 0.0
    %2554 = vmatmul.mubr.f32.gmra.mrb[0].mxu0 %v2352
    %v2555 = vpop.f32.mrb[0].mxu0
    %v2556 = vadd.f32 %v2387, %v2555
    %v2557 = vpop.f32.mrb[0].mxu0
    %2558 = vmatprep.mubr.f32.mxu0 0.0
    %2559 = vmatmul.mubr.f32.gmra.mrb[0].mxu0 %v2353
    %v2560 = vpop.f32.mrb[0].mxu0
    %v2561 = vadd.f32 %v2387, %v2560
    %v2562 = vpop.f32.mrb[0].mxu0
    %2563 = vmatprep.mubr.f32.mxu0 0.0
    %2564 = vmatmul.mubr.f32.gmra.mrb[0].mxu0 %v2354
    %v2565 = vpop.f32.mrb[0].mxu0
    %v2566 = vadd.f32 %v2387, %v2565
    %v2567 = vpop.f32.mrb[0].mxu0
    %2568 = vmatprep.mubr.f32.mxu0 0.0
    %2569 = vmatmul.mubr.f32.gmra.mrb[0].mxu0 %v2355
    %v2570 = vpop.f32.mrb[0].mxu0
    %v2571 = vadd.f32 %v2387, %v2570
    %v2572 = vpop.f32.mrb[0].mxu0
    %2573 = vmatprep.mubr.f32.mxu0 0.0
    %2574 = vmatmul.mubr.f32.gmra.mrb[0].mxu0 %v2356
    %v2575 = vpop.f32.mrb[0].mxu0
    %v2576 = vadd.f32 %v2387, %v2575
    %v2577 = vpop.f32.mrb[0].mxu0
    %2578 = vmatprep.mubr.f32.mxu0 0.0
    %2579 = vmatmul.mubr.f32.gmra.mrb[0].mxu0 %v2357
    %v2580 = vpop.f32.mrb[0].mxu0
    %v2581 = vadd.f32 %v2387, %v2580
    %v2582 = vpop.f32.mrb[0].mxu0
    %2583 = vmatprep.mubr.f32.mxu0 0.0
    %2584 = vmatmul.mubr.f32.gmra.mrb[0].mxu0 %v2358
    %v2585 = vpop.f32.mrb[0].mxu0
    %v2586 = vadd.f32 %v2387, %v2585
    %v2587 = vpop.f32.mrb[0].mxu0
    %2588 = vmatprep.mubr.f32.mxu0 0.0
    %2589 = vmatmul.mubr.f32.gmra.mrb[0].mxu0 %v2359
    %v2590 = vpop.f32.mrb[0].mxu0
    %v2591 = vadd.f32 %v2387, %v2590
    %v2592 = vpop.f32.mrb[0].mxu0
    %2593 = vmatprep.mubr.f32.mxu0 0.0
    %2594 = vmatmul.mubr.f32.gmra.mrb[0].mxu0 %v2360
    %v2595 = vpop.f32.mrb[0].mxu0
    %v2596 = vadd.f32 %v2387, %v2595
    %v2597 = vpop.f32.mrb[0].mxu0
    %2598 = vmatprep.mubr.f32.mxu0 0.0
    %2599 = vmatmul.mubr.f32.gmra.mrb[0].mxu0 %v2361
    %v2600 = vpop.f32.mrb[0].mxu0
    %v2601 = vadd.f32 %v2387, %v2600
    %v2602 = vpop.f32.mrb[0].mxu0
    %2603 = vmatprep.mubr.f32.mxu0 0.0
    %2604 = vmatmul.mubr.f32.gmra.mrb[0].mxu0 %v2362
    %v2605 = vpop.f32.mrb[0].mxu0
    %v2606 = vadd.f32 %v2387, %v2605
    %v2607 = vpop.f32.mrb[0].mxu0
    %2608 = vmatprep.mubr.f32.mxu0 0.0
    %2609 = vmatmul.mubr.f32.gmra.mrb[0].mxu0 %v2363
    %v2610 = vpop.f32.mrb[0].mxu0
    %v2611 = vadd.f32 %v2387, %v2610
    %v2612 = vpop.f32.mrb[0].mxu0
    %2613 = vdwg.mxu0
    %s2614 = scalar_lea.vmem [#allocation11], 512
    %v2615 = vld [vmem:[%s2614] sm:$0xff]
    %v2616 = vld [vmem:[%s2614 + $0x8] sm:$0xff]
    %v2617 = vld [vmem:[%s2614 + $0x10] sm:$0xff]
    %v2618 = vld [vmem:[%s2614 + $0x18] sm:$0xff]
    %v2619 = vld [vmem:[%s2614 + $0x20] sm:$0xff]
    %v2620 = vld [vmem:[%s2614 + $0x28] sm:$0xff]
    %v2621 = vld [vmem:[%s2614 + $0x30] sm:$0xff]
    %v2622 = vld [vmem:[%s2614 + $0x38] sm:$0xff]
    %v2623 = vld [vmem:[%s2614 + $0x40] sm:$0xff]
    %v2624 = vld [vmem:[%s2614 + $0x48] sm:$0xff]
    %v2625 = vld [vmem:[%s2614 + $0x50] sm:$0xff]
    %v2626 = vld [vmem:[%s2614 + $0x58] sm:$0xff]
    %v2627 = vld [vmem:[%s2614 + $0x60] sm:$0xff]
    %v2628 = vld [vmem:[%s2614 + $0x68] sm:$0xff]
    %v2629 = vld [vmem:[%s2614 + $0x70] sm:$0xff]
    %v2630 = vld [vmem:[%s2614 + $0x78] sm:$0xff]
    %v2631 = vld [vmem:[%s2614 + $0x80] sm:$0xff]
    %v2632 = vld [vmem:[%s2614 + $0x88] sm:$0xff]
    %v2633 = vld [vmem:[%s2614 + $0x90] sm:$0xff]
    %v2634 = vld [vmem:[%s2614 + $0x98] sm:$0xff]
    %v2635 = vld [vmem:[%s2614 + $0xa0] sm:$0xff]
    %v2636 = vld [vmem:[%s2614 + $0xa8] sm:$0xff]
    %v2637 = vld [vmem:[%s2614 + $0xb0] sm:$0xff]
    %v2638 = vld [vmem:[%s2614 + $0xb8] sm:$0xff]
    %v2639 = vld [vmem:[%s2614 + $0xc0] sm:$0xff]
    %v2640 = vld [vmem:[%s2614 + $0xc8] sm:$0xff]
    %v2641 = vld [vmem:[%s2614 + $0xd0] sm:$0xff]
    %v2642 = vld [vmem:[%s2614 + $0xd8] sm:$0xff]
    %v2643 = vld [vmem:[%s2614 + $0xe0] sm:$0xff]
    %v2644 = vld [vmem:[%s2614 + $0xe8] sm:$0xff]
    %v2645 = vld [vmem:[%s2614 + $0xf0] sm:$0xff]
    %v2646 = vld [vmem:[%s2614 + $0xf8] sm:$0xff]
    %s2647 = scalar_lea.vmem %s8, 4
    %v2648 = vld [vmem:[%s2647] sm:$0x3]
    %v2650 = vlaneseq
    %v2651 = vshrl.u32 %v2650, 7
    %v2652 = vsub.s32 0, %v2651
    %v2653 = vrot.slane %v2648, %v2652
    %v2654 = vlaneseq
    %v2655 = vshrl.u32 %v2654, 7
    %v2656 = vsub.s32 1, %v2655
    %v2657 = vrot.slane %v2648, %v2656
    %2660 = vmatprep.subr.mxu0 %v2616
    %2661 = vmatpush1.msra.mxu0 %v2615
    %2662 = vmatprep.subr.mxu0 %v2618
    %2663 = vmatpush1.msra.mxu0 %v2617
    %2664 = vmatprep.subr.mxu0 %v2620
    %2665 = vmatpush1.msra.mxu0 %v2619
    %2666 = vmatprep.subr.mxu0 %v2622
    %2667 = vmatpush1.msra.mxu0 %v2621
    %2668 = vmatprep.subr.mxu0 %v2624
    %2669 = vmatpush1.msra.mxu0 %v2623
    %2670 = vmatprep.subr.mxu0 %v2626
    %2671 = vmatpush1.msra.mxu0 %v2625
    %2672 = vmatprep.subr.mxu0 %v2628
    %2673 = vmatpush1.msra.mxu0 %v2627
    %2674 = vmatprep.subr.mxu0 %v2630
    %2675 = vmatpush1.msra.mxu0 %v2629
    %2676 = vmatprep.subr.mxu0 %v2632
    %2677 = vmatpush1.msra.mxu0 %v2631
    %2678 = vmatprep.subr.mxu0 %v2634
    %2679 = vmatpush1.msra.mxu0 %v2633
    %2680 = vmatprep.subr.mxu0 %v2636
    %2681 = vmatpush1.msra.mxu0 %v2635
    %2682 = vmatprep.subr.mxu0 %v2638
    %2683 = vmatpush1.msra.mxu0 %v2637
    %2684 = vmatprep.subr.mxu0 %v2640
    %2685 = vmatpush1.msra.mxu0 %v2639
    %2686 = vmatprep.subr.mxu0 %v2642
    %2687 = vmatpush1.msra.mxu0 %v2641
    %2688 = vmatprep.subr.mxu0 %v2644
    %2689 = vmatpush1.msra.mxu0 %v2643
    %2690 = vmatprep.subr.mxu0 %v2646
    %2691 = vmatpush1.msra.mxu0 %v2645
    %2692 = vmatprep.subr.mxu0 0.0
    %2693 = vmatpush1.msra.mxu0 0.0
    %2694 = vmatprep.subr.mxu0 0.0
    %2695 = vmatpush1.msra.mxu0 0.0
    %2696 = vmatprep.subr.mxu0 0.0
    %2697 = vmatpush1.msra.mxu0 0.0
    %2698 = vmatprep.subr.mxu0 0.0
    %2699 = vmatpush1.msra.mxu0 0.0
    %2700 = vmatprep.subr.mxu0 0.0
    %2701 = vmatpush1.msra.mxu0 0.0
    %2702 = vmatprep.subr.mxu0 0.0
    %2703 = vmatpush1.msra.mxu0 0.0
    %2704 = vmatprep.subr.mxu0 0.0
    %2705 = vmatpush1.msra.mxu0 0.0
    %2706 = vmatprep.subr.mxu0 0.0
    %2707 = vmatpush1.msra.mxu0 0.0
    %2708 = vmatprep.subr.mxu0 0.0
    %2709 = vmatpush1.msra.mxu0 0.0
    %2710 = vmatprep.subr.mxu0 0.0
    %2711 = vmatpush1.msra.mxu0 0.0
    %2712 = vmatprep.subr.mxu0 0.0
    %2713 = vmatpush1.msra.mxu0 0.0
    %2714 = vmatprep.subr.mxu0 0.0
    %2715 = vmatpush1.msra.mxu0 0.0
    %2716 = vmatprep.subr.mxu0 0.0
    %2717 = vmatpush1.msra.mxu0 0.0
    %2718 = vmatprep.subr.mxu0 0.0
    %2719 = vmatpush1.msra.mxu0 0.0
    %2720 = vmatprep.subr.mxu0 0.0
    %2721 = vmatpush1.msra.mxu0 0.0
    %2722 = vmatprep.subr.mxu0 0.0
    %2723 = vmatpush1.msra.mxu0 0.0
    %2724 = vmatprep.mubr.f32.mxu0 0.0
    %2725 = vmatmul.mubr.f32.gmra.mrb[0].mxu0 %v2332
    %v2726 = vpop.f32.mrb[0].mxu0
    %v2727 = vadd.f32 %v2653, %v2726
    %v2728 = vpop.f32.mrb[0].mxu0
    %v2729 = vadd.f32 %v2657, %v2728
    %2730 = vmatprep.mubr.f32.mxu0 0.0
    %2731 = vmatmul.mubr.f32.gmra.mrb[0].mxu0 %v2333
    %v2732 = vpop.f32.mrb[0].mxu0
    %v2733 = vadd.f32 %v2653, %v2732
    %v2734 = vpop.f32.mrb[0].mxu0
    %v2735 = vadd.f32 %v2657, %v2734
    %2736 = vmatprep.mubr.f32.mxu0 0.0
    %2737 = vmatmul.mubr.f32.gmra.mrb[0].mxu0 %v2334
    %v2738 = vpop.f32.mrb[0].mxu0
    %v2739 = vadd.f32 %v2653, %v2738
    %v2740 = vpop.f32.mrb[0].mxu0
    %v2741 = vadd.f32 %v2657, %v2740
    %2742 = vmatprep.mubr.f32.mxu0 0.0
    %2743 = vmatmul.mubr.f32.gmra.mrb[0].mxu0 %v2335
    %v2744 = vpop.f32.mrb[0].mxu0
    %v2745 = vadd.f32 %v2653, %v2744
    %v2746 = vpop.f32.mrb[0].mxu0
    %v2747 = vadd.f32 %v2657, %v2746
    %2748 = vmatprep.mubr.f32.mxu0 0.0
    %2749 = vmatmul.mubr.f32.gmra.mrb[0].mxu0 %v2336
    %v2750 = vpop.f32.mrb[0].mxu0
    %v2751 = vadd.f32 %v2653, %v2750
    %v2752 = vpop.f32.mrb[0].mxu0
    %v2753 = vadd.f32 %v2657, %v2752
    %2754 = vmatprep.mubr.f32.mxu0 0.0
    %2755 = vmatmul.mubr.f32.gmra.mrb[0].mxu0 %v2337
    %v2756 = vpop.f32.mrb[0].mxu0
    %v2757 = vadd.f32 %v2653, %v2756
    %v2758 = vpop.f32.mrb[0].mxu0
    %v2759 = vadd.f32 %v2657, %v2758
    %2760 = vmatprep.mubr.f32.mxu0 0.0
    %2761 = vmatmul.mubr.f32.gmra.mrb[0].mxu0 %v2338
    %v2762 = vpop.f32.mrb[0].mxu0
    %v2763 = vadd.f32 %v2653, %v2762
    %v2764 = vpop.f32.mrb[0].mxu0
    %v2765 = vadd.f32 %v2657, %v2764
    %2766 = vmatprep.mubr.f32.mxu0 0.0
    %2767 = vmatmul.mubr.f32.gmra.mrb[0].mxu0 %v2339
    %v2768 = vpop.f32.mrb[0].mxu0
    %v2769 = vadd.f32 %v2653, %v2768
    %v2770 = vpop.f32.mrb[0].mxu0
    %v2771 = vadd.f32 %v2657, %v2770
    %2772 = vmatprep.mubr.f32.mxu0 0.0
    %2773 = vmatmul.mubr.f32.gmra.mrb[0].mxu0 %v2340
    %v2774 = vpop.f32.mrb[0].mxu0
    %v2775 = vadd.f32 %v2653, %v2774
    %v2776 = vpop.f32.mrb[0].mxu0
    %v2777 = vadd.f32 %v2657, %v2776
    %2778 = vmatprep.mubr.f32.mxu0 0.0
    %2779 = vmatmul.mubr.f32.gmra.mrb[0].mxu0 %v2341
    %v2780 = vpop.f32.mrb[0].mxu0
    %v2781 = vadd.f32 %v2653, %v2780
    %v2782 = vpop.f32.mrb[0].mxu0
    %v2783 = vadd.f32 %v2657, %v2782
    %2784 = vmatprep.mubr.f32.mxu0 0.0
    %2785 = vmatmul.mubr.f32.gmra.mrb[0].mxu0 %v2342
    %v2786 = vpop.f32.mrb[0].mxu0
    %v2787 = vadd.f32 %v2653, %v2786
    %v2788 = vpop.f32.mrb[0].mxu0
    %v2789 = vadd.f32 %v2657, %v2788
    %2790 = vmatprep.mubr.f32.mxu0 0.0
    %2791 = vmatmul.mubr.f32.gmra.mrb[0].mxu0 %v2343
    %v2792 = vpop.f32.mrb[0].mxu0
    %v2793 = vadd.f32 %v2653, %v2792
    %v2794 = vpop.f32.mrb[0].mxu0
    %v2795 = vadd.f32 %v2657, %v2794
    %2796 = vmatprep.mubr.f32.mxu0 0.0
    %2797 = vmatmul.mubr.f32.gmra.mrb[0].mxu0 %v2344
    %v2798 = vpop.f32.mrb[0].mxu0
    %v2799 = vadd.f32 %v2653, %v2798
    %v2800 = vpop.f32.mrb[0].mxu0
    %v2801 = vadd.f32 %v2657, %v2800
    %2802 = vmatprep.mubr.f32.mxu0 0.0
    %2803 = vmatmul.mubr.f32.gmra.mrb[0].mxu0 %v2345
    %v2804 = vpop.f32.mrb[0].mxu0
    %v2805 = vadd.f32 %v2653, %v2804
    %v2806 = vpop.f32.mrb[0].mxu0
    %v2807 = vadd.f32 %v2657, %v2806
    %2808 = vmatprep.mubr.f32.mxu0 0.0
    %2809 = vmatmul.mubr.f32.gmra.mrb[0].mxu0 %v2346
    %v2810 = vpop.f32.mrb[0].mxu0
    %v2811 = vadd.f32 %v2653, %v2810
    %v2812 = vpop.f32.mrb[0].mxu0
    %v2813 = vadd.f32 %v2657, %v2812
    %2814 = vmatprep.mubr.f32.mxu0 0.0
    %2815 = vmatmul.mubr.f32.gmra.mrb[0].mxu0 %v2347
    %v2816 = vpop.f32.mrb[0].mxu0
    %v2817 = vadd.f32 %v2653, %v2816
    %v2818 = vpop.f32.mrb[0].mxu0
    %v2819 = vadd.f32 %v2657, %v2818
    %2820 = vmatprep.mubr.f32.mxu0 0.0
    %2821 = vmatmul.mubr.f32.gmra.mrb[0].mxu0 %v2348
    %v2822 = vpop.f32.mrb[0].mxu0
    %v2823 = vadd.f32 %v2653, %v2822
    %v2824 = vpop.f32.mrb[0].mxu0
    %v2825 = vadd.f32 %v2657, %v2824
    %2826 = vmatprep.mubr.f32.mxu0 0.0
    %2827 = vmatmul.mubr.f32.gmra.mrb[0].mxu0 %v2349
    %v2828 = vpop.f32.mrb[0].mxu0
    %v2829 = vadd.f32 %v2653, %v2828
    %v2830 = vpop.f32.mrb[0].mxu0
    %v2831 = vadd.f32 %v2657, %v2830
    %2832 = vmatprep.mubr.f32.mxu0 0.0
    %2833 = vmatmul.mubr.f32.gmra.mrb[0].mxu0 %v2350
    %v2834 = vpop.f32.mrb[0].mxu0
    %v2835 = vadd.f32 %v2653, %v2834
    %v2836 = vpop.f32.mrb[0].mxu0
    %v2837 = vadd.f32 %v2657, %v2836
    %2838 = vmatprep.mubr.f32.mxu0 0.0
    %2839 = vmatmul.mubr.f32.gmra.mrb[0].mxu0 %v2351
    %v2840 = vpop.f32.mrb[0].mxu0
    %v2841 = vadd.f32 %v2653, %v2840
    %v2842 = vpop.f32.mrb[0].mxu0
    %v2843 = vadd.f32 %v2657, %v2842
    %2844 = vmatprep.mubr.f32.mxu0 0.0
    %2845 = vmatmul.mubr.f32.gmra.mrb[0].mxu0 %v2352
    %v2846 = vpop.f32.mrb[0].mxu0
    %v2847 = vadd.f32 %v2653, %v2846
    %v2848 = vpop.f32.mrb[0].mxu0
    %v2849 = vadd.f32 %v2657, %v2848
    %2850 = vmatprep.mubr.f32.mxu0 0.0
    %2851 = vmatmul.mubr.f32.gmra.mrb[0].mxu0 %v2353
    %v2852 = vpop.f32.mrb[0].mxu0
    %v2853 = vadd.f32 %v2653, %v2852
    %v2854 = vpop.f32.mrb[0].mxu0
    %v2855 = vadd.f32 %v2657, %v2854
    %2856 = vmatprep.mubr.f32.mxu0 0.0
    %2857 = vmatmul.mubr.f32.gmra.mrb[0].mxu0 %v2354
    %v2858 = vpop.f32.mrb[0].mxu0
    %v2859 = vadd.f32 %v2653, %v2858
    %v2860 = vpop.f32.mrb[0].mxu0
    %v2861 = vadd.f32 %v2657, %v2860
    %2862 = vmatprep.mubr.f32.mxu0 0.0
    %2863 = vmatmul.mubr.f32.gmra.mrb[0].mxu0 %v2355
    %v2864 = vpop.f32.mrb[0].mxu0
    %v2865 = vadd.f32 %v2653, %v2864
    %v2866 = vpop.f32.mrb[0].mxu0
    %v2867 = vadd.f32 %v2657, %v2866
    %2868 = vmatprep.mubr.f32.mxu0 0.0
    %2869 = vmatmul.mubr.f32.gmra.mrb[0].mxu0 %v2356
    %v2870 = vpop.f32.mrb[0].mxu0
    %v2871 = vadd.f32 %v2653, %v2870
    %v2872 = vpop.f32.mrb[0].mxu0
    %v2873 = vadd.f32 %v2657, %v2872
    %2874 = vmatprep.mubr.f32.mxu0 0.0
    %2875 = vmatmul.mubr.f32.gmra.mrb[0].mxu0 %v2357
    %v2876 = vpop.f32.mrb[0].mxu0
    %v2877 = vadd.f32 %v2653, %v2876
    %v2878 = vpop.f32.mrb[0].mxu0
    %v2879 = vadd.f32 %v2657, %v2878
    %2880 = vmatprep.mubr.f32.mxu0 0.0
    %2881 = vmatmul.mubr.f32.gmra.mrb[0].mxu0 %v2358
    %v2882 = vpop.f32.mrb[0].mxu0
    %v2883 = vadd.f32 %v2653, %v2882
    %v2884 = vpop.f32.mrb[0].mxu0
    %v2885 = vadd.f32 %v2657, %v2884
    %2886 = vmatprep.mubr.f32.mxu0 0.0
    %2887 = vmatmul.mubr.f32.gmra.mrb[0].mxu0 %v2359
    %v2888 = vpop.f32.mrb[0].mxu0
    %v2889 = vadd.f32 %v2653, %v2888
    %v2890 = vpop.f32.mrb[0].mxu0
    %v2891 = vadd.f32 %v2657, %v2890
    %2892 = vmatprep.mubr.f32.mxu0 0.0
    %2893 = vmatmul.mubr.f32.gmra.mrb[0].mxu0 %v2360
    %v2894 = vpop.f32.mrb[0].mxu0
    %v2895 = vadd.f32 %v2653, %v2894
    %v2896 = vpop.f32.mrb[0].mxu0
    %v2897 = vadd.f32 %v2657, %v2896
    %2898 = vmatprep.mubr.f32.mxu0 0.0
    %2899 = vmatmul.mubr.f32.gmra.mrb[0].mxu0 %v2361
    %v2900 = vpop.f32.mrb[0].mxu0
    %v2901 = vadd.f32 %v2653, %v2900
    %v2902 = vpop.f32.mrb[0].mxu0
    %v2903 = vadd.f32 %v2657, %v2902
    %2904 = vmatprep.mubr.f32.mxu0 0.0
    %2905 = vmatmul.mubr.f32.gmra.mrb[0].mxu0 %v2362
    %v2906 = vpop.f32.mrb[0].mxu0
    %v2907 = vadd.f32 %v2653, %v2906
    %v2908 = vpop.f32.mrb[0].mxu0
    %v2909 = vadd.f32 %v2657, %v2908
    %2910 = vmatprep.mubr.f32.mxu0 0.0
    %2911 = vmatmul.mubr.f32.gmra.mrb[0].mxu0 %v2363
    %v2912 = vpop.f32.mrb[0].mxu0
    %v2913 = vadd.f32 %v2653, %v2912
    %v2914 = vpop.f32.mrb[0].mxu0
    %v2915 = vadd.f32 %v2657, %v2914
    %2916 = vdwg.mxu0
    %2917 = vmatprep.subr.mxu0 0.0
    %2918 = vmatpush1.msra.mxu0 %v2456
    %2919 = vmatprep.subr.mxu0 0.0
    %2920 = vmatpush1.msra.mxu0 %v2461
    %2921 = vmatprep.subr.mxu0 0.0
    %2922 = vmatpush1.msra.mxu0 %v2466
    %2923 = vmatprep.subr.mxu0 0.0
    %2924 = vmatpush1.msra.mxu0 %v2471
    %2925 = vmatprep.subr.mxu0 0.0
    %2926 = vmatpush1.msra.mxu0 %v2476
    %2927 = vmatprep.subr.mxu0 0.0
    %2928 = vmatpush1.msra.mxu0 %v2481
    %2929 = vmatprep.subr.mxu0 0.0
    %2930 = vmatpush1.msra.mxu0 %v2486
    %2931 = vmatprep.subr.mxu0 0.0
    %2932 = vmatpush1.msra.mxu0 %v2491
    %2933 = vmatprep.subr.mxu0 0.0
    %2934 = vmatpush1.msra.mxu0 %v2496
    %2935 = vmatprep.subr.mxu0 0.0
    %2936 = vmatpush1.msra.mxu0 %v2501
    %2937 = vmatprep.subr.mxu0 0.0
    %2938 = vmatpush1.msra.mxu0 %v2506
    %2939 = vmatprep.subr.mxu0 0.0
    %2940 = vmatpush1.msra.mxu0 %v2511
    %2941 = vmatprep.subr.mxu0 0.0
    %2942 = vmatpush1.msra.mxu0 %v2516
    %2943 = vmatprep.subr.mxu0 0.0
    %2944 = vmatpush1.msra.mxu0 %v2521
    %2945 = vmatprep.subr.mxu0 0.0
    %2946 = vmatpush1.msra.mxu0 %v2526
    %2947 = vmatprep.subr.mxu0 0.0
    %2948 = vmatpush1.msra.mxu0 %v2531
    %2949 = vmatprep.subr.mxu0 0.0
    %2950 = vmatpush1.msra.mxu0 %v2536
    %2951 = vmatprep.subr.mxu0 0.0
    %2952 = vmatpush1.msra.mxu0 %v2541
    %2953 = vmatprep.subr.mxu0 0.0
    %2954 = vmatpush1.msra.mxu0 %v2546
    %2955 = vmatprep.subr.mxu0 0.0
    %2956 = vmatpush1.msra.mxu0 %v2551
    %2957 = vmatprep.subr.mxu0 0.0
    %2958 = vmatpush1.msra.mxu0 %v2556
    %2959 = vmatprep.subr.mxu0 0.0
    %2960 = vmatpush1.msra.mxu0 %v2561
    %2961 = vmatprep.subr.mxu0 0.0
    %2962 = vmatpush1.msra.mxu0 %v2566
    %2963 = vmatprep.subr.mxu0 0.0
    %2964 = vmatpush1.msra.mxu0 %v2571
    %2965 = vmatprep.subr.mxu0 0.0
    %2966 = vmatpush1.msra.mxu0 %v2576
    %2967 = vmatprep.subr.mxu0 0.0
    %2968 = vmatpush1.msra.mxu0 %v2581
    %2969 = vmatprep.subr.mxu0 0.0
    %2970 = vmatpush1.msra.mxu0 %v2586
    %2971 = vmatprep.subr.mxu0 0.0
    %2972 = vmatpush1.msra.mxu0 %v2591
    %2973 = vmatprep.subr.mxu0 0.0
    %2974 = vmatpush1.msra.mxu0 %v2596
    %2975 = vmatprep.subr.mxu0 0.0
    %2976 = vmatpush1.msra.mxu0 %v2601
    %2977 = vmatprep.subr.mxu0 0.0
    %2978 = vmatpush1.msra.mxu0 %v2606
    %2979 = vmatprep.subr.mxu0 0.0
    %2980 = vmatpush1.msra.mxu0 %v2611
    %2981 = vmatprep.mubr.f32.mxu0 %v117
    %2982 = vmatmul.mubr.f32.gmra.mrb[0].mxu0 %v116
    %v2983 = vpop.f32.mrb[0].mxu0
    %v2984 = vadd.f32 0.0, %v2983
    %v2985 = vpop.f32.mrb[0].mxu0
    %2986 = vmatprep.mubr.f32.mxu0 %v119
    %2987 = vmatmul.mubr.f32.gmra.mrb[0].mxu0 %v118
    %v2988 = vpop.f32.mrb[0].mxu0
    %v2989 = vadd.f32 0.0, %v2988
    %v2990 = vpop.f32.mrb[0].mxu0
    %2991 = vmatprep.mubr.f32.mxu0 %v121
    %2992 = vmatmul.mubr.f32.gmra.mrb[0].mxu0 %v120
    %v2993 = vpop.f32.mrb[0].mxu0
    %v2994 = vadd.f32 0.0, %v2993
    %v2995 = vpop.f32.mrb[0].mxu0
    %2996 = vmatprep.mubr.f32.mxu0 %v123
    %2997 = vmatmul.mubr.f32.gmra.mrb[0].mxu0 %v122
    %v2998 = vpop.f32.mrb[0].mxu0
    %v2999 = vadd.f32 0.0, %v2998
    %v3000 = vpop.f32.mrb[0].mxu0
    %3001 = vmatprep.mubr.f32.mxu0 %v125
    %3002 = vmatmul.mubr.f32.gmra.mrb[0].mxu0 %v124
    %v3003 = vpop.f32.mrb[0].mxu0
    %v3004 = vadd.f32 0.0, %v3003
    %v3005 = vpop.f32.mrb[0].mxu0
    %3006 = vmatprep.mubr.f32.mxu0 %v127
    %3007 = vmatmul.mubr.f32.gmra.mrb[0].mxu0 %v126
    %v3008 = vpop.f32.mrb[0].mxu0
    %v3009 = vadd.f32 0.0, %v3008
    %v3010 = vpop.f32.mrb[0].mxu0
    %3011 = vmatprep.mubr.f32.mxu0 %v129
    %3012 = vmatmul.mubr.f32.gmra.mrb[0].mxu0 %v128
    %v3013 = vpop.f32.mrb[0].mxu0
    %v3014 = vadd.f32 0.0, %v3013
    %v3015 = vpop.f32.mrb[0].mxu0
    %3016 = vmatprep.mubr.f32.mxu0 %v131
    %3017 = vmatmul.mubr.f32.gmra.mrb[0].mxu0 %v130
    %v3018 = vpop.f32.mrb[0].mxu0
    %v3019 = vadd.f32 0.0, %v3018
    %v3020 = vpop.f32.mrb[0].mxu0
    %3021 = vmatprep.mubr.f32.mxu0 %v133
    %3022 = vmatmul.mubr.f32.gmra.mrb[0].mxu0 %v132
    %v3023 = vpop.f32.mrb[0].mxu0
    %v3024 = vadd.f32 0.0, %v3023
    %v3025 = vpop.f32.mrb[0].mxu0
    %3026 = vmatprep.mubr.f32.mxu0 %v135
    %3027 = vmatmul.mubr.f32.gmra.mrb[0].mxu0 %v134
    %v3028 = vpop.f32.mrb[0].mxu0
    %v3029 = vadd.f32 0.0, %v3028
    %v3030 = vpop.f32.mrb[0].mxu0
    %3031 = vmatprep.mubr.f32.mxu0 %v137
    %3032 = vmatmul.mubr.f32.gmra.mrb[0].mxu0 %v136
    %v3033 = vpop.f32.mrb[0].mxu0
    %v3034 = vadd.f32 0.0, %v3033
    %v3035 = vpop.f32.mrb[0].mxu0
    %3036 = vmatprep.mubr.f32.mxu0 %v139
    %3037 = vmatmul.mubr.f32.gmra.mrb[0].mxu0 %v138
    %v3038 = vpop.f32.mrb[0].mxu0
    %v3039 = vadd.f32 0.0, %v3038
    %v3040 = vpop.f32.mrb[0].mxu0
    %3041 = vmatprep.mubr.f32.mxu0 %v141
    %3042 = vmatmul.mubr.f32.gmra.mrb[0].mxu0 %v140
    %v3043 = vpop.f32.mrb[0].mxu0
    %v3044 = vadd.f32 0.0, %v3043
    %v3045 = vpop.f32.mrb[0].mxu0
    %3046 = vmatprep.mubr.f32.mxu0 %v143
    %3047 = vmatmul.mubr.f32.gmra.mrb[0].mxu0 %v142
    %v3048 = vpop.f32.mrb[0].mxu0
    %v3049 = vadd.f32 0.0, %v3048
    %v3050 = vpop.f32.mrb[0].mxu0
    %3051 = vmatprep.mubr.f32.mxu0 %v145
    %3052 = vmatmul.mubr.f32.gmra.mrb[0].mxu0 %v144
    %v3053 = vpop.f32.mrb[0].mxu0
    %v3054 = vadd.f32 0.0, %v3053
    %v3055 = vpop.f32.mrb[0].mxu0
    %3056 = vmatprep.mubr.f32.mxu0 %v147
    %3057 = vmatmul.mubr.f32.gmra.mrb[0].mxu0 %v146
    %v3058 = vpop.f32.mrb[0].mxu0
    %v3059 = vadd.f32 0.0, %v3058
    %v3060 = vpop.f32.mrb[0].mxu0
    %3061 = vmatprep.mubr.f32.mxu0 %v149
    %3062 = vmatmul.mubr.f32.gmra.mrb[0].mxu0 %v148
    %v3063 = vpop.f32.mrb[0].mxu0
    %v3064 = vadd.f32 0.0, %v3063
    %v3065 = vpop.f32.mrb[0].mxu0
    %3066 = vmatprep.mubr.f32.mxu0 %v151
    %3067 = vmatmul.mubr.f32.gmra.mrb[0].mxu0 %v150
    %v3068 = vpop.f32.mrb[0].mxu0
    %v3069 = vadd.f32 0.0, %v3068
    %v3070 = vpop.f32.mrb[0].mxu0
    %3071 = vmatprep.mubr.f32.mxu0 %v153
    %3072 = vmatmul.mubr.f32.gmra.mrb[0].mxu0 %v152
    %v3073 = vpop.f32.mrb[0].mxu0
    %v3074 = vadd.f32 0.0, %v3073
    %v3075 = vpop.f32.mrb[0].mxu0
    %3076 = vmatprep.mubr.f32.mxu0 %v155
    %3077 = vmatmul.mubr.f32.gmra.mrb[0].mxu0 %v154
    %v3078 = vpop.f32.mrb[0].mxu0
    %v3079 = vadd.f32 0.0, %v3078
    %v3080 = vpop.f32.mrb[0].mxu0
    %3081 = vmatprep.mubr.f32.mxu0 %v157
    %3082 = vmatmul.mubr.f32.gmra.mrb[0].mxu0 %v156
    %v3083 = vpop.f32.mrb[0].mxu0
    %v3084 = vadd.f32 0.0, %v3083
    %v3085 = vpop.f32.mrb[0].mxu0
    %3086 = vmatprep.mubr.f32.mxu0 %v159
    %3087 = vmatmul.mubr.f32.gmra.mrb[0].mxu0 %v158
    %v3088 = vpop.f32.mrb[0].mxu0
    %v3089 = vadd.f32 0.0, %v3088
    %v3090 = vpop.f32.mrb[0].mxu0
    %3091 = vmatprep.mubr.f32.mxu0 %v161
    %3092 = vmatmul.mubr.f32.gmra.mrb[0].mxu0 %v160
    %v3093 = vpop.f32.mrb[0].mxu0
    %v3094 = vadd.f32 0.0, %v3093
    %v3095 = vpop.f32.mrb[0].mxu0
    %3096 = vmatprep.mubr.f32.mxu0 %v163
    %3097 = vmatmul.mubr.f32.gmra.mrb[0].mxu0 %v162
    %v3098 = vpop.f32.mrb[0].mxu0
    %v3099 = vadd.f32 0.0, %v3098
    %v3100 = vpop.f32.mrb[0].mxu0
    %3101 = vmatprep.mubr.f32.mxu0 %v165
    %3102 = vmatmul.mubr.f32.gmra.mrb[0].mxu0 %v164
    %v3103 = vpop.f32.mrb[0].mxu0
    %v3104 = vadd.f32 0.0, %v3103
    %v3105 = vpop.f32.mrb[0].mxu0
    %3106 = vmatprep.mubr.f32.mxu0 %v167
    %3107 = vmatmul.mubr.f32.gmra.mrb[0].mxu0 %v166
    %v3108 = vpop.f32.mrb[0].mxu0
    %v3109 = vadd.f32 0.0, %v3108
    %v3110 = vpop.f32.mrb[0].mxu0
    %3111 = vmatprep.mubr.f32.mxu0 %v169
    %3112 = vmatmul.mubr.f32.gmra.mrb[0].mxu0 %v168
    %v3113 = vpop.f32.mrb[0].mxu0
    %v3114 = vadd.f32 0.0, %v3113
    %v3115 = vpop.f32.mrb[0].mxu0
    %3116 = vmatprep.mubr.f32.mxu0 %v171
    %3117 = vmatmul.mubr.f32.gmra.mrb[0].mxu0 %v170
    %v3118 = vpop.f32.mrb[0].mxu0
    %v3119 = vadd.f32 0.0, %v3118
    %v3120 = vpop.f32.mrb[0].mxu0
    %3121 = vmatprep.mubr.f32.mxu0 %v173
    %3122 = vmatmul.mubr.f32.gmra.mrb[0].mxu0 %v172
    %v3123 = vpop.f32.mrb[0].mxu0
    %v3124 = vadd.f32 0.0, %v3123
    %v3125 = vpop.f32.mrb[0].mxu0
    %3126 = vmatprep.mubr.f32.mxu0 %v175
    %3127 = vmatmul.mubr.f32.gmra.mrb[0].mxu0 %v174
    %v3128 = vpop.f32.mrb[0].mxu0
    %v3129 = vadd.f32 0.0, %v3128
    %v3130 = vpop.f32.mrb[0].mxu0
    %3131 = vmatprep.mubr.f32.mxu0 %v177
    %3132 = vmatmul.mubr.f32.gmra.mrb[0].mxu0 %v176
    %v3133 = vpop.f32.mrb[0].mxu0
    %v3134 = vadd.f32 0.0, %v3133
    %v3135 = vpop.f32.mrb[0].mxu0
    %3136 = vmatprep.mubr.f32.mxu0 %v179
    %3137 = vmatmul.mubr.f32.gmra.mrb[0].mxu0 %v178
    %v3138 = vpop.f32.mrb[0].mxu0
    %v3139 = vadd.f32 0.0, %v3138
    %v3140 = vpop.f32.mrb[0].mxu0
    %3141 = vdwg.mxu0
    %v3142 = vmul.f32 %v182, %v2727
    %v3143 = vmul.f32 %v185, %v2733
    %v3144 = vmul.f32 %v188, %v2739
    %v3145 = vmul.f32 %v191, %v2745
    %v3146 = vmul.f32 %v194, %v2751
    %v3147 = vmul.f32 %v197, %v2757
    %v3148 = vmul.f32 %v200, %v2763
    %v3149 = vmul.f32 %v203, %v2769
    %v3150 = vmul.f32 %v206, %v2775
    %v3151 = vmul.f32 %v209, %v2781
    %v3152 = vmul.f32 %v212, %v2787
    %v3153 = vmul.f32 %v215, %v2793
    %v3154 = vmul.f32 %v218, %v2799
    %v3155 = vmul.f32 %v221, %v2805
    %v3156 = vmul.f32 %v224, %v2811
    %v3157 = vmul.f32 %v227, %v2817
    %v3158 = vmul.f32 %v230, %v2823
    %v3159 = vmul.f32 %v233, %v2829
    %v3160 = vmul.f32 %v236, %v2835
    %v3161 = vmul.f32 %v239, %v2841
    %v3162 = vmul.f32 %v242, %v2847
    %v3163 = vmul.f32 %v245, %v2853
    %v3164 = vmul.f32 %v248, %v2859
    %v3165 = vmul.f32 %v251, %v2865
    %v3166 = vmul.f32 %v254, %v2871
    %v3167 = vmul.f32 %v257, %v2877
    %v3168 = vmul.f32 %v260, %v2883
    %v3169 = vmul.f32 %v263, %v2889
    %v3170 = vmul.f32 %v266, %v2895
    %v3171 = vmul.f32 %v269, %v2901
    %v3172 = vmul.f32 %v272, %v2907
    %v3173 = vmul.f32 %v275, %v2913
    %v3174 = vsub.f32 %v2984, %v3142
    %v3175 = vsub.f32 %v2989, %v3143
    %v3176 = vsub.f32 %v2994, %v3144
    %v3177 = vsub.f32 %v2999, %v3145
    %v3178 = vsub.f32 %v3004, %v3146
    %v3179 = vsub.f32 %v3009, %v3147
    %v3180 = vsub.f32 %v3014, %v3148
    %v3181 = vsub.f32 %v3019, %v3149
    %v3182 = vsub.f32 %v3024, %v3150
    %v3183 = vsub.f32 %v3029, %v3151
    %v3184 = vsub.f32 %v3034, %v3152
    %v3185 = vsub.f32 %v3039, %v3153
    %v3186 = vsub.f32 %v3044, %v3154
    %v3187 = vsub.f32 %v3049, %v3155
    %v3188 = vsub.f32 %v3054, %v3156
    %v3189 = vsub.f32 %v3059, %v3157
    %v3190 = vsub.f32 %v3064, %v3158
    %v3191 = vsub.f32 %v3069, %v3159
    %v3192 = vsub.f32 %v3074, %v3160
    %v3193 = vsub.f32 %v3079, %v3161
    %v3194 = vsub.f32 %v3084, %v3162
    %v3195 = vsub.f32 %v3089, %v3163
    %v3196 = vsub.f32 %v3094, %v3164
    %v3197 = vsub.f32 %v3099, %v3165
    %v3198 = vsub.f32 %v3104, %v3166
    %v3199 = vsub.f32 %v3109, %v3167
    %v3200 = vsub.f32 %v3114, %v3168
    %v3201 = vsub.f32 %v3119, %v3169
    %v3202 = vsub.f32 %v3124, %v3170
    %v3203 = vsub.f32 %v3129, %v3171
    %v3204 = vsub.f32 %v3134, %v3172
    %v3205 = vsub.f32 %v3139, %v3173
    %v3206 = vadd.f32 %v3174, %v2729
    %v3207 = vadd.f32 %v3175, %v2735
    %v3208 = vadd.f32 %v3176, %v2741
    %v3209 = vadd.f32 %v3177, %v2747
    %v3210 = vadd.f32 %v3178, %v2753
    %v3211 = vadd.f32 %v3179, %v2759
    %v3212 = vadd.f32 %v3180, %v2765
    %v3213 = vadd.f32 %v3181, %v2771
    %v3214 = vadd.f32 %v3182, %v2777
    %v3215 = vadd.f32 %v3183, %v2783
    %v3216 = vadd.f32 %v3184, %v2789
    %v3217 = vadd.f32 %v3185, %v2795
    %v3218 = vadd.f32 %v3186, %v2801
    %v3219 = vadd.f32 %v3187, %v2807
    %v3220 = vadd.f32 %v3188, %v2813
    %v3221 = vadd.f32 %v3189, %v2819
    %v3222 = vadd.f32 %v3190, %v2825
    %v3223 = vadd.f32 %v3191, %v2831
    %v3224 = vadd.f32 %v3192, %v2837
    %v3225 = vadd.f32 %v3193, %v2843
    %v3226 = vadd.f32 %v3194, %v2849
    %v3227 = vadd.f32 %v3195, %v2855
    %v3228 = vadd.f32 %v3196, %v2861
    %v3229 = vadd.f32 %v3197, %v2867
    %v3230 = vadd.f32 %v3198, %v2873
    %v3231 = vadd.f32 %v3199, %v2879
    %v3232 = vadd.f32 %v3200, %v2885
    %v3233 = vadd.f32 %v3201, %v2891
    %v3234 = vadd.f32 %v3202, %v2897
    %v3235 = vadd.f32 %v3203, %v2903
    %v3236 = vadd.f32 %v3204, %v2909
    %v3237 = vadd.f32 %v3205, %v2915
    %v3238 = vmax.f32 %v3206, 0.0
    %v3239 = vmax.f32 %v3207, 0.0
    %v3240 = vmax.f32 %v3208, 0.0
    %v3241 = vmax.f32 %v3209, 0.0
    %v3242 = vmax.f32 %v3210, 0.0
    %v3243 = vmax.f32 %v3211, 0.0
    %v3244 = vmax.f32 %v3212, 0.0
    %v3245 = vmax.f32 %v3213, 0.0
    %v3246 = vmax.f32 %v3214, 0.0
    %v3247 = vmax.f32 %v3215, 0.0
    %v3248 = vmax.f32 %v3216, 0.0
    %v3249 = vmax.f32 %v3217, 0.0
    %v3250 = vmax.f32 %v3218, 0.0
    %v3251 = vmax.f32 %v3219, 0.0
    %v3252 = vmax.f32 %v3220, 0.0
    %v3253 = vmax.f32 %v3221, 0.0
    %v3254 = vmax.f32 %v3222, 0.0
    %v3255 = vmax.f32 %v3223, 0.0
    %v3256 = vmax.f32 %v3224, 0.0
    %v3257 = vmax.f32 %v3225, 0.0
    %v3258 = vmax.f32 %v3226, 0.0
    %v3259 = vmax.f32 %v3227, 0.0
    %v3260 = vmax.f32 %v3228, 0.0
    %v3261 = vmax.f32 %v3229, 0.0
    %v3262 = vmax.f32 %v3230, 0.0
    %v3263 = vmax.f32 %v3231, 0.0
    %v3264 = vmax.f32 %v3232, 0.0
    %v3265 = vmax.f32 %v3233, 0.0
    %v3266 = vmax.f32 %v3234, 0.0
    %v3267 = vmax.f32 %v3235, 0.0
    %v3268 = vmax.f32 %v3236, 0.0
    %v3269 = vmax.f32 %v3237, 0.0
    %3270 = vst [vmem:[#allocation13] sm:$0xff] %v3238
    %3271 = vst [vmem:[#allocation13 + $0x8] sm:$0xff] %v3239
    %3272 = vst [vmem:[#allocation13 + $0x10] sm:$0xff] %v3240
    %3273 = vst [vmem:[#allocation13 + $0x18] sm:$0xff] %v3241
    %3274 = vst [vmem:[#allocation13 + $0x20] sm:$0xff] %v3242
    %3275 = vst [vmem:[#allocation13 + $0x28] sm:$0xff] %v3243
    %3276 = vst [vmem:[#allocation13 + $0x30] sm:$0xff] %v3244
    %3277 = vst [vmem:[#allocation13 + $0x38] sm:$0xff] %v3245
    %3278 = vst [vmem:[#allocation13 + $0x40] sm:$0xff] %v3246
    %3279 = vst [vmem:[#allocation13 + $0x48] sm:$0xff] %v3247
    %3280 = vst [vmem:[#allocation13 + $0x50] sm:$0xff] %v3248
    %3281 = vst [vmem:[#allocation13 + $0x58] sm:$0xff] %v3249
    %3282 = vst [vmem:[#allocation13 + $0x60] sm:$0xff] %v3250
    %3283 = vst [vmem:[#allocation13 + $0x68] sm:$0xff] %v3251
    %3284 = vst [vmem:[#allocation13 + $0x70] sm:$0xff] %v3252
    %3285 = vst [vmem:[#allocation13 + $0x78] sm:$0xff] %v3253
    %3286 = vst [vmem:[#allocation13 + $0x80] sm:$0xff] %v3254
    %3287 = vst [vmem:[#allocation13 + $0x88] sm:$0xff] %v3255
    %3288 = vst [vmem:[#allocation13 + $0x90] sm:$0xff] %v3256
    %3289 = vst [vmem:[#allocation13 + $0x98] sm:$0xff] %v3257
    %3290 = vst [vmem:[#allocation13 + $0xa0] sm:$0xff] %v3258
    %3291 = vst [vmem:[#allocation13 + $0xa8] sm:$0xff] %v3259
    %3292 = vst [vmem:[#allocation13 + $0xb0] sm:$0xff] %v3260
    %3293 = vst [vmem:[#allocation13 + $0xb8] sm:$0xff] %v3261
    %3294 = vst [vmem:[#allocation13 + $0xc0] sm:$0xff] %v3262
    %3295 = vst [vmem:[#allocation13 + $0xc8] sm:$0xff] %v3263
    %3296 = vst [vmem:[#allocation13 + $0xd0] sm:$0xff] %v3264
    %3297 = vst [vmem:[#allocation13 + $0xd8] sm:$0xff] %v3265
    %3298 = vst [vmem:[#allocation13 + $0xe0] sm:$0xff] %v3266
    %3299 = vst [vmem:[#allocation13 + $0xe8] sm:$0xff] %v3267
    %3300 = vst [vmem:[#allocation13 + $0xf0] sm:$0xff] %v3268
    %3301 = vst [vmem:[#allocation13 + $0xf8] sm:$0xff] %v3269
    %v3302 = vld [vmem:[#allocation7] sm:$0xff]
    %v3303 = vld [vmem:[#allocation7 + $0x8] sm:$0xff]
    %3304 = vmatprep.subr.mxu0 0.0
    %3305 = vmatpush1.msra.mxu0 %v3238
    %3306 = vmatprep.subr.mxu0 0.0
    %3307 = vmatpush1.msra.mxu0 %v3239
    %3308 = vmatprep.subr.mxu0 0.0
    %3309 = vmatpush1.msra.mxu0 %v3240
    %3310 = vmatprep.subr.mxu0 0.0
    %3311 = vmatpush1.msra.mxu0 %v3241
    %3312 = vmatprep.subr.mxu0 0.0
    %3313 = vmatpush1.msra.mxu0 %v3242
    %3314 = vmatprep.subr.mxu0 0.0
    %3315 = vmatpush1.msra.mxu0 %v3243
    %3316 = vmatprep.subr.mxu0 0.0
    %3317 = vmatpush1.msra.mxu0 %v3244
    %3318 = vmatprep.subr.mxu0 0.0
    %3319 = vmatpush1.msra.mxu0 %v3245
    %3320 = vmatprep.subr.mxu0 0.0
    %3321 = vmatpush1.msra.mxu0 %v3246
    %3322 = vmatprep.subr.mxu0 0.0
    %3323 = vmatpush1.msra.mxu0 %v3247
    %3324 = vmatprep.subr.mxu0 0.0
    %3325 = vmatpush1.msra.mxu0 %v3248
    %3326 = vmatprep.subr.mxu0 0.0
    %3327 = vmatpush1.msra.mxu0 %v3249
    %3328 = vmatprep.subr.mxu0 0.0
    %3329 = vmatpush1.msra.mxu0 %v3250
    %3330 = vmatprep.subr.mxu0 0.0
    %3331 = vmatpush1.msra.mxu0 %v3251
    %3332 = vmatprep.subr.mxu0 0.0
    %3333 = vmatpush1.msra.mxu0 %v3252
    %3334 = vmatprep.subr.mxu0 0.0
    %3335 = vmatpush1.msra.mxu0 %v3253
    %3336 = vmatprep.subr.mxu0 0.0
    %3337 = vmatpush1.msra.mxu0 %v3254
    %3338 = vmatprep.subr.mxu0 0.0
    %3339 = vmatpush1.msra.mxu0 %v3255
    %3340 = vmatprep.subr.mxu0 0.0
    %3341 = vmatpush1.msra.mxu0 %v3256
    %3342 = vmatprep.subr.mxu0 0.0
    %3343 = vmatpush1.msra.mxu0 %v3257
    %3344 = vmatprep.subr.mxu0 0.0
    %3345 = vmatpush1.msra.mxu0 %v3258
    %3346 = vmatprep.subr.mxu0 0.0
    %3347 = vmatpush1.msra.mxu0 %v3259
    %3348 = vmatprep.subr.mxu0 0.0
    %3349 = vmatpush1.msra.mxu0 %v3260
    %3350 = vmatprep.subr.mxu0 0.0
    %3351 = vmatpush1.msra.mxu0 %v3261
    %3352 = vmatprep.subr.mxu0 0.0
    %3353 = vmatpush1.msra.mxu0 %v3262
    %3354 = vmatprep.subr.mxu0 0.0
    %3355 = vmatpush1.msra.mxu0 %v3263
    %3356 = vmatprep.subr.mxu0 0.0
    %3357 = vmatpush1.msra.mxu0 %v3264
    %3358 = vmatprep.subr.mxu0 0.0
    %3359 = vmatpush1.msra.mxu0 %v3265
    %3360 = vmatprep.subr.mxu0 0.0
    %3361 = vmatpush1.msra.mxu0 %v3266
    %3362 = vmatprep.subr.mxu0 0.0
    %3363 = vmatpush1.msra.mxu0 %v3267
    %3364 = vmatprep.subr.mxu0 0.0
    %3365 = vmatpush1.msra.mxu0 %v3268
    %3366 = vmatprep.subr.mxu0 0.0
    %3367 = vmatpush1.msra.mxu0 %v3269
    %3368 = vmatprep.mubr.f32.mxu0 %v3303
    %3369 = vmatmul.mubr.f32.gmra.mrb[0].mxu0 %v3302
    %v3370 = vpop.f32.mrb[0].mxu0
    %v3371 = vadd.f32 0.0, %v3370
    %v3372 = vpop.f32.mrb[0].mxu0
    %3373 = vdwg.mxu0
    %3374 = vst [vmem:[#allocation14] sm:$0xff] %v3371
    // Predicated region
    $region62: #{tpu_custom_call.1} parent=1 // pred_check
      _
    $region63: #{tpu_custom_call.1} parent=1 // pred_check_branch
      %3376 = sbr.rel (0) target = $region65
    $region64: #{tpu_custom_call.1} parent=1 // pred_region
      %s3378 = ssub.s32 4096, 4096
      %3379 = vsyncadd [#allocation4], %s3378
      %s3380 = sshll.u32 [#allocation13], 4
      %s3381 = int_to_ptr.vmem [resolvable:$true] %s3380
      %3386 = dma.vmem_to_hbm [thread:$0]  %s3381, 4096, %s9, [#allocation4], 128, 128, 8
    $region65: #{tpu_custom_call.1} parent=1 // pred_fallthru
      _
    // Predicated region
    $region66: #{tpu_custom_call.1} parent=1 // pred_check
      _
    $region67: #{tpu_custom_call.1} parent=1 // pred_check_branch
      %3388 = sbr.rel (0) target = $region69
    $region68: #{tpu_custom_call.1} parent=1 // pred_region
      %s3390 = ssub.s32 128, 128
      %3391 = vsyncadd [#allocation15], %s3390
      %s3393 = sshll.u32 [#allocation14], 4
      %s3394 = int_to_ptr.vmem [resolvable:$true] %s3393
      %3396 = dma.vmem_to_hbm [thread:$0]  %s3394, 128, %s10, [#allocation15]
    $region69: #{tpu_custom_call.1} parent=1 // pred_fallthru
      _
    // Predicated region
    $region70: #{tpu_custom_call.1} parent=1 // pred_check
      _
    $region71: #{tpu_custom_call.1} parent=1 // pred_check_branch
      %3398 = sbr.rel (0) target = $region73
    $region72: #{tpu_custom_call.1} parent=1 // pred_region
      %3399 = dma.done [#allocation4], 4096
    $region73: #{tpu_custom_call.1} parent=1 // pred_fallthru
      _
    // Predicated region
    $region74: #{tpu_custom_call.1} parent=1 // pred_check
      _
    $region75: #{tpu_custom_call.1} parent=1 // pred_check_branch
      %3401 = sbr.rel (0) target = $region77
    $region76: #{tpu_custom_call.1} parent=1 // pred_region
      %3402 = dma.done [#allocation15], 128
    $region77: #{tpu_custom_call.1} parent=1 // pred_fallthru
      _
    %3403 = vsyncpa [#allocation3], 1
    %3404 = vsyncpa [#allocation6], 1
    %3405 = vsyncpa [#allocation9], 1
    %3406 = vsyncpa [#allocation12], 1
    %3407 = vsyncpa [#allocation4], 1
    %3408 = vsyncpa [#allocation15], 1

</llo_original>
